<compile_context>
chip_gen: v6e
topology: v6e:2x2x1
jax: 0.10.0
libtpu: 0.0.40
codegen_flags: <defaults>
</compile_context>

<pallas_src>
import jax
import jax.numpy as jnp
from jax import lax
from jax.experimental import pallas as pl
from jax.experimental.pallas import tpu as pltpu


def _round_up(x, m):
    return ((x + m - 1) // m) * m


_NEG_INF = -1e30

_LAYER_KEYS = ("ln1_w", "ln1_b", "wq", "wk", "wv", "w_proj", "b_proj",
               "ln2_w", "ln2_b", "w1", "b1", "w2", "b2")


def _pick_batch_block(B, T, target_rows=128):
    """Choose how many batch rows to flatten into one grid step.

    Prefer keeping >=2 grid steps along the batch axis (v7x dual-TC), then the
    smallest Bt whose Bt*T reaches the MXU row target (128)."""
    divs = [d for d in range(1, B + 1) if B % d == 0]
    cands = [d for d in divs if B // d >= 2] or divs
    for d in cands:
        if d * T >= target_rows:
            return d
    return cands[-1]


# ------------------------------ fused kernel --------------------------------

def _make_block_kernel(Bt, T, E, Ep, H, hd_p, eps=1e-5):
    M = Bt * T
    inv_scale = 1.0 / (float(E) ** 2)     # reference: weight = (k @ q^T) / C**2
    inv_E = 1.0 / float(E)
    cdt = jnp.bfloat16                    # matmul-input dtype (f32 accumulate)

    def _layernorm(x, w, b, col_mask):
        # Centered-variance LayerNorm over the true E features.  Padded
        # columns (>= E) are excluded from the statistics and end up exactly
        # zero because w / b are zero-padded there.
        mean = jnp.sum(x, axis=-1, keepdims=True) * inv_E
        xc = x - mean
        if Ep != E:
            xc = jnp.where(col_mask, xc, 0.0)
        var = jnp.sum(xc * xc, axis=-1, keepdims=True) * inv_E
        return xc * lax.rsqrt(var + eps) * w + b

    def kernel(x0_ref, mask_ref,
               ln1w_ref, ln1b_ref, wq_ref, wk_ref, wv_ref, wproj_ref, bproj_ref,
               ln2w_ref, ln2b_ref, w1_ref, b1_ref, w2_ref, b2_ref,
               lnfw_ref, lnfb_ref,
               out_ref, x_res):
        layer = pl.program_id(1)
        col_mask = lax.broadcasted_iota(jnp.int32, (1, Ep), 1) < E

        # Load this batch block's embeddings into the resident activation.
        @pl.when(layer == 0)
        def _():
            x_res[...] = x0_ref[...].reshape(M, Ep)

        x = x_res[...]                                       # (M, Ep) f32

        # ---------------- x + MHA(LN1(x)) ----------------
        h = _layernorm(x, ln1w_ref[0], ln1b_ref[0], col_mask).astype(cdt)

        # Fused all-head projections; each head occupies a 128-lane-aligned
        # column block of width hd_p (real dims first, zero padding after).
        q_all = jnp.dot(h, wq_ref[0], preferred_element_type=jnp.float32).astype(cdt)
        k_all = jnp.dot(h, wk_ref[0], preferred_element_type=jnp.float32).astype(cdt)
        v_all = jnp.dot(h, wv_ref[0], preferred_element_type=jnp.float32).astype(cdt)

        neg_mask = mask_ref[...]                             # (M, M) f32 additive

        outs = []
        for hh in range(H):
            c0 = hh * hd_p
            k_h = k_all[:, c0:c0 + hd_p]                     # (M, hd_p) lane-aligned
            q_h = q_all[:, c0:c0 + hd_p]
            v_h = v_all[:, c0:c0 + hd_p]
            # reference: weight[i, j] = k_i . q_j / C**2 (contract last dims,
            # no materialized transpose); mask forbids j > i within a sequence
            # and any cross-sequence pair of the flattened batch block.
            s = lax.dot_general(k_h, q_h, (((1,), (1,)), ((), ())),
                                preferred_element_type=jnp.float32)
            s = s * inv_scale + neg_mask
            s = s - jnp.max(s, axis=-1, keepdims=True)
            e = jnp.exp(s)
            p = e * pl.reciprocal(jnp.sum(e, axis=-1, keepdims=True), approx=True)
            # TODO(synk): attention-weight dropout omitted (eval-mode identity).
            outs.append(jnp.dot(p.astype(cdt), v_h,
                                preferred_element_type=jnp.float32).astype(cdt))
        # Lane-aligned concat of 128-wide head blocks (no masked partial stores).
        attn = outs[0] if H == 1 else jnp.concatenate(outs, axis=-1)   # (M, H*hd_p)

        x = x + (jnp.dot(attn, wproj_ref[0],
                         preferred_element_type=jnp.float32) + bproj_ref[0])

        # ---------------- x + FFN(LN2(x)) ----------------
        h2 = _layernorm(x, ln2w_ref[0], ln2b_ref[0], col_mask).astype(cdt)
        f = jnp.dot(h2, w1_ref[0], preferred_element_type=jnp.float32) + b1_ref[0]
        f = jnp.maximum(f, 0.0).astype(cdt)
        f = jnp.dot(f, w2_ref[0], preferred_element_type=jnp.float32) + b2_ref[0]
        # TODO(synk): FFN dropout omitted (eval-mode identity).
        x = x + f
        x_res[...] = x

        # ----- final LayerNorm folded into the last layer step (LM head is a
        # separate vocab-tiled pallas_call) -----
        @pl.when(layer == pl.num_programs(1) - 1)
        def _():
            hf = _layernorm(x, lnfw_ref[...], lnfb_ref[...], col_mask)
            out_ref[...] = hf.reshape(Bt, T, Ep)

    return kernel


# ------------------------------ param packing -------------------------------

def _pack_params(params, Ep, Fp, Vp, hd_p):
    """Zero-pad to lane-dense shapes, fuse per-head K/Q/V weights into a
    (Ep, H*hd_p) matrix with a 128-lane stride per head, lay out w_proj rows
    to match, convert matmul weights to bf16, and stack per-layer weights on a
    leading layer axis."""
    H, E, hd = params["blocks"][0]["wq"].shape
    wdt = jnp.bfloat16

    def padw(a, r, c):
        return jnp.pad(a, ((0, r - a.shape[0]), (0, c - a.shape[1])))

    def fuse_qkv(w):                       # (H, E, hd) -> (Ep, H*hd_p) bf16
        wp = jnp.pad(w, ((0, 0), (0, Ep - E), (0, hd_p - hd)))
        return jnp.transpose(wp, (1, 0, 2)).reshape(Ep, H * hd_p).astype(wdt)

    def pad_proj(w):                       # (E, E) -> (H*hd_p, Ep) bf16
        w3 = w.reshape(H, hd, E)
        w3 = jnp.pad(w3, ((0, 0), (0, hd_p - hd), (0, Ep - E)))
        return w3.reshape(H * hd_p, Ep).astype(wdt)

    pad_layer = {
        "ln1_w": lambda a: padw(a, 1, Ep), "ln1_b": lambda a: padw(a, 1, Ep),
        "wq": fuse_qkv, "wk": fuse_qkv, "wv": fuse_qkv,
        "w_proj": pad_proj,
        "b_proj": lambda a: padw(a, 1, Ep),
        "ln2_w": lambda a: padw(a, 1, Ep), "ln2_b": lambda a: padw(a, 1, Ep),
        "w1": lambda a: padw(a, Ep, Fp).astype(wdt),
        "b1": lambda a: padw(a, 1, Fp),
        "w2": lambda a: padw(a, Fp, Ep).astype(wdt),
        "b2": lambda a: padw(a, 1, Ep),
    }
    stacked = {k: jnp.stack([pad_layer[k](blk[k]) for blk in params["blocks"]])
               for k in _LAYER_KEYS}
    final = {
        "ln_w": padw(params["ln_w"], 1, Ep),
        "ln_b": padw(params["ln_b"], 1, Ep),
        "w_head": padw(params["w_head"], Ep, Vp).astype(wdt),
        "b_head": padw(params["b_head"], 1, Vp),
    }
    return stacked, final


# ------------------------------- parameters ---------------------------------

def init_params(key, vocab, E, block_size, num_blocks, num_heads):
    hd = E // num_heads
    keys = jax.random.split(key, 3 + num_blocks)

    def nrm(k, shape, scale=0.02):
        return (scale * jax.random.normal(k, shape)).astype(jnp.float32)

    params = {
        "tok_emb": nrm(keys[0], (vocab, E)),
        "pos_emb": nrm(keys[1], (block_size, E)),
        "ln_w": jnp.ones((1, E), jnp.float32),
        "ln_b": jnp.zeros((1, E), jnp.float32),
        "w_head": nrm(keys[2], (E, vocab)),
        "b_head": jnp.zeros((1, vocab), jnp.float32),
        "blocks": [],
    }
    for i in range(num_blocks):
        ks = jax.random.split(keys[3 + i], 6)
        params["blocks"].append({
            "ln1_w": jnp.ones((1, E), jnp.float32),
            "ln1_b": jnp.zeros((1, E), jnp.float32),
            "wk": nrm(ks[0], (num_heads, E, hd)),
            "wq": nrm(ks[1], (num_heads, E, hd)),
            "wv": nrm(ks[2], (num_heads, E, hd)),
            "w_proj": nrm(ks[3], (E, E)),
            "b_proj": jnp.zeros((1, E), jnp.float32),
            "ln2_w": jnp.ones((1, E), jnp.float32),
            "ln2_b": jnp.zeros((1, E), jnp.float32),
            "w1": nrm(ks[4], (E, 4 * E)),
            "b1": jnp.zeros((1, 4 * E), jnp.float32),
            "w2": nrm(ks[5], (4 * E, E)),
            "b2": jnp.zeros((1, E), jnp.float32),
        })
    return params


# ------------------------------ GPT forward ----------------------------------

def gpt_forward(params, idx, *, batch_block=None):
    # idx: (B, T) int32 token ids -> (B, T, vocab) float32 logits
    B, T = idx.shape
    E = params["tok_emb"].shape[1]
    V = params["w_head"].shape[1]
    H = params["blocks"][0]["wq"].shape[0]
    L = len(params["blocks"])
    hd = E // H

    Ep = _round_up(E, 128)            # lane-dense feature axis
    Fp = _round_up(4 * E, 128)        # lane-dense FFN hidden axis
    Vp = _round_up(V, 128)            # lane-dense vocab axis
    hd_p = _round_up(hd, 128)         # 128-lane stride per head
    Eh = H * hd_p

    Bt = batch_block if batch_block is not None else _pick_batch_block(B, T)
    assert B % Bt == 0
    M = Bt * T

    # Token-embedding gather + positional add (tiny glue outside the kernel).
    tok = jnp.take(params["tok_emb"], idx, axis=0)            # (B, T, E)
    pos = params["pos_emb"][:T]                               # (T, E)
    x0 = tok + pos[None, :, :]
    x0 = jnp.pad(x0, ((0, 0), (0, 0), (0, Ep - E))).astype(jnp.float32)

    # Combined causal + same-sequence additive mask over the flattened batch
    # block (hoisted out of the kernel; fetched once per grid step at most).
    r = jnp.arange(M)
    same_seq = (r[:, None] // T) == (r[None, :] // T)
    causal = (r[None, :] % T) <= (r[:, None] % T)
    neg_mask = jnp.where(same_seq & causal, 0.0, _NEG_INF).astype(jnp.float32)

    stacked, final = _pack_params(params, Ep, Fp, Vp, hd_p)

    def layer_spec(a):
        return pl.BlockSpec((1,) + a.shape[1:], lambda b, l: (l, 0, 0))

    in_specs = [
        pl.BlockSpec((Bt, T, Ep), lambda b, l: (b, 0, 0)),    # embeddings
        pl.BlockSpec((M, M), lambda b, l: (0, 0)),            # additive mask
    ]
    in_specs += [layer_spec(stacked[k]) for k in _LAYER_KEYS]
    in_specs += [pl.BlockSpec((1, Ep), lambda b, l: (0, 0)),  # final LN weight
                 pl.BlockSpec((1, Ep), lambda b, l: (0, 0))]  # final LN bias

    block_kernel = _make_block_kernel(Bt, T, E, Ep, H, hd_p)

    # Fused transformer stack + final LayerNorm -> normalized hidden states.
    hidden = pl.pallas_call(
        block_kernel,
        out_shape=jax.ShapeDtypeStruct((B, T, Ep), jnp.float32),
        grid=(B // Bt, L),
        in_specs=in_specs,
        out_specs=pl.BlockSpec((Bt, T, Ep), lambda b, l: (b, 0, 0)),
        scratch_shapes=[pltpu.VMEM((M, Ep), jnp.float32)],    # resident activation
        compiler_params=pltpu.CompilerParams(
            dimension_semantics=("parallel", "arbitrary"),
            vmem_limit_bytes=64 * 1024 * 1024),               # sweep when scaling
    )(x0, neg_mask, *[stacked[k] for k in _LAYER_KEYS],
      final["ln_w"], final["ln_b"])

    # LM head as a separate pallas_call tiled over the vocab axis, so the head
    # weight / logits are never resident in the fused kernel's VMEM.
    Vt = min(Vp, 512)
    while Vp % Vt:
        Vt -= 128

    def head_kernel(h_ref, w_ref, b_ref, o_ref):
        hm = h_ref[...].reshape(M, Ep).astype(jnp.bfloat16)
        o = jnp.dot(hm, w_ref[...], preferred_element_type=jnp.float32) + b_ref[...]
        o_ref[...] = o.reshape(Bt, T, Vt)

    logits_p = pl.pallas_call(
        head_kernel,
        out_shape=jax.ShapeDtypeStruct((B, T, Vp), jnp.float32),
        grid=(B // Bt, Vp // Vt),
        in_specs=[pl.BlockSpec((Bt, T, Ep), lambda b, v: (b, 0, 0)),
                  pl.BlockSpec((Ep, Vt), lambda b, v: (0, v)),
                  pl.BlockSpec((1, Vt), lambda b, v: (0, v))],
        out_specs=pl.BlockSpec((Bt, T, Vt), lambda b, v: (b, 0, v)),
        compiler_params=pltpu.CompilerParams(
            dimension_semantics=("parallel", "parallel"),
            vmem_limit_bytes=64 * 1024 * 1024),
    )(hidden, final["w_head"], final["b_head"])

    return logits_p[:, :, :V]


# ---------------------------------- main -------------------------------------

if __name__ == "__main__":
    vocab_size = 64
    embedding_dim = 32
    block_size = 8
    num_blocks = 2
    num_heads = 4
    batch = 4

    key = jax.random.PRNGKey(0)
    pkey, ikey = jax.random.split(key)
    params = init_params(pkey, vocab_size, embedding_dim, block_size,
                         num_blocks, num_heads)

    idx = jax.random.randint(ikey, (batch, block_size), 0, vocab_size,
                             dtype=jnp.int32)

    logits = jax.jit(gpt_forward)(params, idx)
    jax.block_until_ready(logits)
    assert logits.shape == (batch, block_size, vocab_size)
    assert bool(jnp.all(jnp.isfinite(logits)))
    print("KERNEL_OK")
</pallas_src>

<mosaic_0001>
module attributes {stable_mosaic.version = 11 : i64} {
  func.func @head_kernel(%arg0: i32, %arg1: i32, %arg2: memref<2x8x128xf32, #tpu.memory_space<vmem>>, %arg3: memref<128x128xbf16, #tpu.memory_space<vmem>>, %arg4: memref<1x128xf32, #tpu.memory_space<vmem>>, %arg5: memref<2x8x128xf32, #tpu.memory_space<vmem>>) attributes {dimension_semantics = [#tpu.dimension_semantics<parallel>, #tpu.dimension_semantics<parallel>], iteration_bounds = array<i64: 2, 1>, scalar_prefetch = 0 : i64, scratch_operands = 0 : i64, tpu.core_type = #tpu.core_type<tc>, window_params = [{transform_indices = @transform_0, window_bounds = array<i64: 2, 8, 128>}, {transform_indices = @transform_1, window_bounds = array<i64: 128, 128>}, {transform_indices = @transform_2, window_bounds = array<i64: 1, 128>}, {transform_indices = @transform_3, window_bounds = array<i64: 2, 8, 128>}]} {
    %c0 = arith.constant 0 : index
    %c0_0 = arith.constant 0 : index
    %c0_1 = arith.constant 0 : index
    %0 = vector.load %arg2[%c0, %c0_0, %c0_1] : memref<2x8x128xf32, #tpu.memory_space<vmem>>, vector<2x8x128xf32>
    %1 = vector.shape_cast %0 : vector<2x8x128xf32> to vector<16x128xf32>
    %2 = arith.truncf %1 : vector<16x128xf32> to vector<16x128xbf16>
    %c0_2 = arith.constant 0 : index
    %c0_3 = arith.constant 0 : index
    %3 = vector.load %arg3[%c0_2, %c0_3] : memref<128x128xbf16, #tpu.memory_space<vmem>>, vector<128x128xbf16>
    %cst = arith.constant dense<0.000000e+00> : vector<16x128xf32>
    %4 = tpu.matmul %2, %3, %cst {dimension_numbers = #tpu.dot_dimension_numbers<[1], [0], [0], [1], [0, 0, 1, 1], [], []>} : vector<16x128xbf16>, vector<128x128xbf16>, vector<16x128xf32> -> vector<16x128xf32>
    %c0_4 = arith.constant 0 : index
    %c0_5 = arith.constant 0 : index
    %5 = vector.load %arg4[%c0_4, %c0_5] : memref<1x128xf32, #tpu.memory_space<vmem>>, vector<1x128xf32>
    %6 = vector.broadcast %5 : vector<1x128xf32> to vector<16x128xf32>
    %7 = arith.addf %4, %6 : vector<16x128xf32>
    %8 = vector.shape_cast %7 : vector<16x128xf32> to vector<2x8x128xf32>
    %c0_6 = arith.constant 0 : index
    %c0_7 = arith.constant 0 : index
    %c0_8 = arith.constant 0 : index
    %9 = vector.load %arg5[%c0_6, %c0_7, %c0_8] : memref<2x8x128xf32, #tpu.memory_space<vmem>>, vector<2x8x128xf32>
    tpu.vector_store %arg5[%c0_6, %c0_7, %c0_8], %8 {strides = array<i32>} : memref<2x8x128xf32, #tpu.memory_space<vmem>>, vector<2x8x128xf32>,
    return
  }
  func.func @transform_0(%arg0: i32, %arg1: i32) -> (i32, i32, i32) {
    %c0_i32 = arith.constant 0 : i32
    %c0_i32_0 = arith.constant 0 : i32
    %c0_i32_1 = arith.constant 0 : i32
    return %arg0, %c0_i32, %c0_i32_0 : i32, i32, i32
  }
  func.func @transform_1(%arg0: i32, %arg1: i32) -> (i32, i32) {
    %c0_i32 = arith.constant 0 : i32
    %c0_i32_0 = arith.constant 0 : i32
    return %c0_i32, %arg1 : i32, i32
  }
  func.func @transform_2(%arg0: i32, %arg1: i32) -> (i32, i32) {
    %c0_i32 = arith.constant 0 : i32
    %c0_i32_0 = arith.constant 0 : i32
    return %c0_i32, %arg1 : i32, i32
  }
  func.func @transform_3(%arg0: i32, %arg1: i32) -> (i32, i32, i32) {
    %c0_i32 = arith.constant 0 : i32
    %c0_i32_0 = arith.constant 0 : i32
    return %arg0, %c0_i32, %arg1 : i32, i32, i32
  }
}

module attributes {stable_mosaic.version = 11 : i64} {
  func.func @kernel(%arg0: i32, %arg1: i32, %arg2: memref<2x8x128xf32, #tpu.memory_space<vmem>>, %arg3: memref<16x16xf32, #tpu.memory_space<vmem>>, %arg4: memref<1x1x128xf32, #tpu.memory_space<vmem>>, %arg5: memref<1x1x128xf32, #tpu.memory_space<vmem>>, %arg6: memref<1x128x512xbf16, #tpu.memory_space<vmem>>, %arg7: memref<1x128x512xbf16, #tpu.memory_space<vmem>>, %arg8: memref<1x128x512xbf16, #tpu.memory_space<vmem>>, %arg9: memref<1x512x128xbf16, #tpu.memory_space<vmem>>, %arg10: memref<1x1x128xf32, #tpu.memory_space<vmem>>, %arg11: memref<1x1x128xf32, #tpu.memory_space<vmem>>, %arg12: memref<1x1x128xf32, #tpu.memory_space<vmem>>, %arg13: memref<1x128x128xbf16, #tpu.memory_space<vmem>>, %arg14: memref<1x1x128xf32, #tpu.memory_space<vmem>>, %arg15: memref<1x128x128xbf16, #tpu.memory_space<vmem>>, %arg16: memref<1x1x128xf32, #tpu.memory_space<vmem>>, %arg17: memref<1x128xf32, #tpu.memory_space<vmem>>, %arg18: memref<1x128xf32, #tpu.memory_space<vmem>>, %arg19: memref<2x8x128xf32, #tpu.memory_space<vmem>>, %arg20: memref<16x128xf32, #tpu.memory_space<vmem>>) attributes {dimension_semantics = [#tpu.dimension_semantics<parallel>, #tpu.dimension_semantics<arbitrary>], iteration_bounds = array<i64: 2, 2>, scalar_prefetch = 0 : i64, scratch_operands = 1 : i64, tpu.core_type = #tpu.core_type<tc>, window_params = [{transform_indices = @transform_0, window_bounds = array<i64: 2, 8, 128>}, {pipeline_mode = #tpu.pipeline_mode<synchronous>, transform_indices = @transform_1, window_bounds = array<i64: 16, 16>}, {transform_indices = @transform_2, window_bounds = array<i64: 1, 1, 128>}, {transform_indices = @transform_3, window_bounds = array<i64: 1, 1, 128>}, {transform_indices = @transform_4, window_bounds = array<i64: 1, 128, 512>}, {transform_indices = @transform_5, window_bounds = array<i64: 1, 128, 512>}, {transform_indices = @transform_6, window_bounds = array<i64: 1, 128, 512>}, {transform_indices = @transform_7, window_bounds = array<i64: 1, 512, 128>}, {transform_indices = @transform_8, window_bounds = array<i64: 1, 1, 128>}, {transform_indices = @transform_9, window_bounds = array<i64: 1, 1, 128>}, {transform_indices = @transform_10, window_bounds = array<i64: 1, 1, 128>}, {transform_indices = @transform_11, window_bounds = array<i64: 1, 128, 128>}, {transform_indices = @transform_12, window_bounds = array<i64: 1, 1, 128>}, {transform_indices = @transform_13, window_bounds = array<i64: 1, 128, 128>}, {transform_indices = @transform_14, window_bounds = array<i64: 1, 1, 128>}, {pipeline_mode = #tpu.pipeline_mode<synchronous>, transform_indices = @transform_15, window_bounds = array<i64: 1, 128>}, {pipeline_mode = #tpu.pipeline_mode<synchronous>, transform_indices = @transform_16, window_bounds = array<i64: 1, 128>}, {transform_indices = @transform_17, window_bounds = array<i64: 2, 8, 128>}]} {
    %0 = tpu.iota {dimensions = array<i32: 1>} : vector<1x128xi32>
    %c32_i32 = arith.constant 32 : i32
    %1 = vector.broadcast %c32_i32 : i32 to vector<1x128xi32>
    %2 = arith.cmpi slt, %0, %1 : vector<1x128xi32>
    %c0_i32 = arith.constant 0 : i32
    %3 = arith.cmpi eq, %arg1, %c0_i32 : i32
    %4 = arith.extui %3 : i1 to i32
    %c0_i32_0 = arith.constant 0 : i32
    %5 = arith.cmpi ne, %4, %c0_i32_0 : i32
    scf.if %5 {
      %c0_84 = arith.constant 0 : index
      %c0_85 = arith.constant 0 : index
      %c0_86 = arith.constant 0 : index
      %189 = vector.load %arg2[%c0_84, %c0_85, %c0_86] : memref<2x8x128xf32, #tpu.memory_space<vmem>>, vector<2x8x128xf32>
      %190 = vector.shape_cast %189 : vector<2x8x128xf32> to vector<16x128xf32>
      %c0_87 = arith.constant 0 : index
      %c0_88 = arith.constant 0 : index
      %191 = vector.load %arg20[%c0_87, %c0_88] : memref<16x128xf32, #tpu.memory_space<vmem>>, vector<16x128xf32>
      tpu.vector_store %arg20[%c0_87, %c0_88], %190 {strides = array<i32>} : memref<16x128xf32, #tpu.memory_space<vmem>>, vector<16x128xf32>,
    } else {
    }
    %c0 = arith.constant 0 : index
    %c0_1 = arith.constant 0 : index
    %6 = vector.load %arg20[%c0, %c0_1] : memref<16x128xf32, #tpu.memory_space<vmem>>, vector<16x128xf32>
    %c0_2 = arith.constant 0 : index
    %c0_3 = arith.constant 0 : index
    %c0_4 = arith.constant 0 : index
    %7 = vector.load %arg4[%c0_2, %c0_3, %c0_4] : memref<1x1x128xf32, #tpu.memory_space<vmem>>, vector<1x1x128xf32>
    %8 = vector.shape_cast %7 : vector<1x1x128xf32> to vector<1x128xf32>
    %c0_5 = arith.constant 0 : index
    %c0_6 = arith.constant 0 : index
    %c0_7 = arith.constant 0 : index
    %9 = vector.load %arg5[%c0_5, %c0_6, %c0_7] : memref<1x1x128xf32, #tpu.memory_space<vmem>>, vector<1x1x128xf32>
    %10 = vector.shape_cast %9 : vector<1x1x128xf32> to vector<1x128xf32>
    %cst = arith.constant dense<0.000000e+00> : vector<16xf32>
    %11 = vector.multi_reduction <add>, %6, %cst [1] : vector<16x128xf32> to vector<16xf32>
    %12 = vector.shape_cast %11 : vector<16xf32> to vector<16x1xf32>
    %cst_8 = arith.constant 3.125000e-02 : f32
    %13 = vector.broadcast %cst_8 : f32 to vector<16x1xf32>
    %14 = arith.mulf %12, %13 : vector<16x1xf32>
    %15 = vector.broadcast %14 : vector<16x1xf32> to vector<16x128xf32>
    %16 = arith.subf %6, %15 : vector<16x128xf32>
    %cst_9 = arith.constant 0.000000e+00 : f32
    %17 = vector.shape_cast %2 : vector<1x128xi1> to vector<1x128xi1>
    %18 = vector.broadcast %17 : vector<1x128xi1> to vector<16x128xi1>
    %19 = vector.broadcast %cst_9 : f32 to vector<16x128xf32>
    %20 = arith.select %18, %16, %19 : vector<16x128xi1>, vector<16x128xf32>
    %21 = arith.mulf %20, %20 : vector<16x128xf32>
    %cst_10 = arith.constant dense<0.000000e+00> : vector<16xf32>
    %22 = vector.multi_reduction <add>, %21, %cst_10 [1] : vector<16x128xf32> to vector<16xf32>
    %23 = vector.shape_cast %22 : vector<16xf32> to vector<16x1xf32>
    %cst_11 = arith.constant 3.125000e-02 : f32
    %24 = vector.broadcast %cst_11 : f32 to vector<16x1xf32>
    %25 = arith.mulf %23, %24 : vector<16x1xf32>
    %cst_12 = arith.constant 9.99999974E-6 : f32
    %26 = vector.broadcast %cst_12 : f32 to vector<16x1xf32>
    %27 = arith.addf %25, %26 : vector<16x1xf32>
    %28 = math.rsqrt %27 : vector<16x1xf32>
    %29 = vector.broadcast %28 : vector<16x1xf32> to vector<16x128xf32>
    %30 = arith.mulf %20, %29 : vector<16x128xf32>
    %31 = vector.broadcast %8 : vector<1x128xf32> to vector<16x128xf32>
    %32 = arith.mulf %30, %31 : vector<16x128xf32>
    %33 = vector.broadcast %10 : vector<1x128xf32> to vector<16x128xf32>
    %34 = arith.addf %32, %33 : vector<16x128xf32>
    %35 = arith.truncf %34 : vector<16x128xf32> to vector<16x128xbf16>
    %c0_13 = arith.constant 0 : index
    %c0_14 = arith.constant 0 : index
    %c0_15 = arith.constant 0 : index
    %36 = vector.load %arg6[%c0_13, %c0_14, %c0_15] : memref<1x128x512xbf16, #tpu.memory_space<vmem>>, vector<1x128x512xbf16>
    %37 = vector.shape_cast %36 : vector<1x128x512xbf16> to vector<128x512xbf16>
    %cst_16 = arith.constant dense<0.000000e+00> : vector<16x512xf32>
    %38 = tpu.matmul %35, %37, %cst_16 {dimension_numbers = #tpu.dot_dimension_numbers<[1], [0], [0], [1], [0, 0, 1, 1], [], []>} : vector<16x128xbf16>, vector<128x512xbf16>, vector<16x512xf32> -> vector<16x512xf32>
    %39 = arith.truncf %38 : vector<16x512xf32> to vector<16x512xbf16>
    %c0_17 = arith.constant 0 : index
    %c0_18 = arith.constant 0 : index
    %c0_19 = arith.constant 0 : index
    %40 = vector.load %arg7[%c0_17, %c0_18, %c0_19] : memref<1x128x512xbf16, #tpu.memory_space<vmem>>, vector<1x128x512xbf16>
    %41 = vector.shape_cast %40 : vector<1x128x512xbf16> to vector<128x512xbf16>
    %cst_20 = arith.constant dense<0.000000e+00> : vector<16x512xf32>
    %42 = tpu.matmul %35, %41, %cst_20 {dimension_numbers = #tpu.dot_dimension_numbers<[1], [0], [0], [1], [0, 0, 1, 1], [], []>} : vector<16x128xbf16>, vector<128x512xbf16>, vector<16x512xf32> -> vector<16x512xf32>
    %43 = arith.truncf %42 : vector<16x512xf32> to vector<16x512xbf16>
    %c0_21 = arith.constant 0 : index
    %c0_22 = arith.constant 0 : index
    %c0_23 = arith.constant 0 : index
    %44 = vector.load %arg8[%c0_21, %c0_22, %c0_23] : memref<1x128x512xbf16, #tpu.memory_space<vmem>>, vector<1x128x512xbf16>
    %45 = vector.shape_cast %44 : vector<1x128x512xbf16> to vector<128x512xbf16>
    %cst_24 = arith.constant dense<0.000000e+00> : vector<16x512xf32>
    %46 = tpu.matmul %35, %45, %cst_24 {dimension_numbers = #tpu.dot_dimension_numbers<[1], [0], [0], [1], [0, 0, 1, 1], [], []>} : vector<16x128xbf16>, vector<128x512xbf16>, vector<16x512xf32> -> vector<16x512xf32>
    %47 = arith.truncf %46 : vector<16x512xf32> to vector<16x512xbf16>
    %c0_25 = arith.constant 0 : index
    %c0_26 = arith.constant 0 : index
    %48 = vector.load %arg3[%c0_25, %c0_26] : memref<16x16xf32, #tpu.memory_space<vmem>>, vector<16x16xf32>
    %49 = vector.extract_strided_slice %43 {offsets = [0, 0], sizes = [16, 128], strides = [1, 1]} : vector<16x512xbf16> to vector<16x128xbf16>
    %50 = vector.extract_strided_slice %39 {offsets = [0, 0], sizes = [16, 128], strides = [1, 1]} : vector<16x512xbf16> to vector<16x128xbf16>
    %51 = vector.extract_strided_slice %47 {offsets = [0, 0], sizes = [16, 128], strides = [1, 1]} : vector<16x512xbf16> to vector<16x128xbf16>
    %cst_27 = arith.constant dense<0.000000e+00> : vector<16x16xf32>
    %52 = tpu.matmul %49, %50, %cst_27 {dimension_numbers = #tpu.dot_dimension_numbers<[1], [1], [0], [0], [0, 0, 1, 0], [], []>} : vector<16x128xbf16>, vector<16x128xbf16>, vector<16x16xf32> -> vector<16x16xf32>
    %cst_28 = arith.constant 9.765625E-4 : f32
    %53 = vector.broadcast %cst_28 : f32 to vector<16x16xf32>
    %54 = arith.mulf %52, %53 : vector<16x16xf32>
    %55 = arith.addf %54, %48 : vector<16x16xf32>
    %cst_29 = arith.constant dense<0xFF800000> : vector<16xf32>
    %56 = vector.multi_reduction <maximumf>, %55, %cst_29 [1] : vector<16x16xf32> to vector<16xf32>
    %57 = vector.shape_cast %56 : vector<16xf32> to vector<16x1xf32>
    %58 = vector.broadcast %57 : vector<16x1xf32> to vector<16x16xf32>
    %59 = arith.subf %55, %58 : vector<16x16xf32>
    %60 = math.exp %59 : vector<16x16xf32>
    %cst_30 = arith.constant dense<0.000000e+00> : vector<16xf32>
    %61 = vector.multi_reduction <add>, %60, %cst_30 [1] : vector<16x16xf32> to vector<16xf32>
    %62 = vector.shape_cast %61 : vector<16xf32> to vector<16x1xf32>
    %63 = tpu.reciprocal %62 {approx = true} : vector<16x1xf32> -> vector<16x1xf32>
    %64 = vector.broadcast %63 : vector<16x1xf32> to vector<16x16xf32>
    %65 = arith.mulf %60, %64 : vector<16x16xf32>
    %66 = arith.truncf %65 : vector<16x16xf32> to vector<16x16xbf16>
    %cst_31 = arith.constant dense<0.000000e+00> : vector<16x128xf32>
    %67 = tpu.matmul %66, %51, %cst_31 {dimension_numbers = #tpu.dot_dimension_numbers<[1], [0], [0], [1], [0, 0, 1, 1], [], []>} : vector<16x16xbf16>, vector<16x128xbf16>, vector<16x128xf32> -> vector<16x128xf32>
    %68 = arith.truncf %67 : vector<16x128xf32> to vector<16x128xbf16>
    %69 = vector.extract_strided_slice %43 {offsets = [0, 128], sizes = [16, 128], strides = [1, 1]} : vector<16x512xbf16> to vector<16x128xbf16>
    %70 = vector.extract_strided_slice %39 {offsets = [0, 128], sizes = [16, 128], strides = [1, 1]} : vector<16x512xbf16> to vector<16x128xbf16>
    %71 = vector.extract_strided_slice %47 {offsets = [0, 128], sizes = [16, 128], strides = [1, 1]} : vector<16x512xbf16> to vector<16x128xbf16>
    %cst_32 = arith.constant dense<0.000000e+00> : vector<16x16xf32>
    %72 = tpu.matmul %69, %70, %cst_32 {dimension_numbers = #tpu.dot_dimension_numbers<[1], [1], [0], [0], [0, 0, 1, 0], [], []>} : vector<16x128xbf16>, vector<16x128xbf16>, vector<16x16xf32> -> vector<16x16xf32>
    %cst_33 = arith.constant 9.765625E-4 : f32
    %73 = vector.broadcast %cst_33 : f32 to vector<16x16xf32>
    %74 = arith.mulf %72, %73 : vector<16x16xf32>
    %75 = arith.addf %74, %48 : vector<16x16xf32>
    %cst_34 = arith.constant dense<0xFF800000> : vector<16xf32>
    %76 = vector.multi_reduction <maximumf>, %75, %cst_34 [1] : vector<16x16xf32> to vector<16xf32>
    %77 = vector.shape_cast %76 : vector<16xf32> to vector<16x1xf32>
    %78 = vector.broadcast %77 : vector<16x1xf32> to vector<16x16xf32>
    %79 = arith.subf %75, %78 : vector<16x16xf32>
    %80 = math.exp %79 : vector<16x16xf32>
    %cst_35 = arith.constant dense<0.000000e+00> : vector<16xf32>
    %81 = vector.multi_reduction <add>, %80, %cst_35 [1] : vector<16x16xf32> to vector<16xf32>
    %82 = vector.shape_cast %81 : vector<16xf32> to vector<16x1xf32>
    %83 = tpu.reciprocal %82 {approx = true} : vector<16x1xf32> -> vector<16x1xf32>
    %84 = vector.broadcast %83 : vector<16x1xf32> to vector<16x16xf32>
    %85 = arith.mulf %80, %84 : vector<16x16xf32>
    %86 = arith.truncf %85 : vector<16x16xf32> to vector<16x16xbf16>
    %cst_36 = arith.constant dense<0.000000e+00> : vector<16x128xf32>
    %87 = tpu.matmul %86, %71, %cst_36 {dimension_numbers = #tpu.dot_dimension_numbers<[1], [0], [0], [1], [0, 0, 1, 1], [], []>} : vector<16x16xbf16>, vector<16x128xbf16>, vector<16x128xf32> -> vector<16x128xf32>
    %88 = arith.truncf %87 : vector<16x128xf32> to vector<16x128xbf16>
    %89 = vector.extract_strided_slice %43 {offsets = [0, 256], sizes = [16, 128], strides = [1, 1]} : vector<16x512xbf16> to vector<16x128xbf16>
    %90 = vector.extract_strided_slice %39 {offsets = [0, 256], sizes = [16, 128], strides = [1, 1]} : vector<16x512xbf16> to vector<16x128xbf16>
    %91 = vector.extract_strided_slice %47 {offsets = [0, 256], sizes = [16, 128], strides = [1, 1]} : vector<16x512xbf16> to vector<16x128xbf16>
    %cst_37 = arith.constant dense<0.000000e+00> : vector<16x16xf32>
    %92 = tpu.matmul %89, %90, %cst_37 {dimension_numbers = #tpu.dot_dimension_numbers<[1], [1], [0], [0], [0, 0, 1, 0], [], []>} : vector<16x128xbf16>, vector<16x128xbf16>, vector<16x16xf32> -> vector<16x16xf32>
    %cst_38 = arith.constant 9.765625E-4 : f32
    %93 = vector.broadcast %cst_38 : f32 to vector<16x16xf32>
    %94 = arith.mulf %92, %93 : vector<16x16xf32>
    %95 = arith.addf %94, %48 : vector<16x16xf32>
    %cst_39 = arith.constant dense<0xFF800000> : vector<16xf32>
    %96 = vector.multi_reduction <maximumf>, %95, %cst_39 [1] : vector<16x16xf32> to vector<16xf32>
    %97 = vector.shape_cast %96 : vector<16xf32> to vector<16x1xf32>
    %98 = vector.broadcast %97 : vector<16x1xf32> to vector<16x16xf32>
    %99 = arith.subf %95, %98 : vector<16x16xf32>
    %100 = math.exp %99 : vector<16x16xf32>
    %cst_40 = arith.constant dense<0.000000e+00> : vector<16xf32>
    %101 = vector.multi_reduction <add>, %100, %cst_40 [1] : vector<16x16xf32> to vector<16xf32>
    %102 = vector.shape_cast %101 : vector<16xf32> to vector<16x1xf32>
    %103 = tpu.reciprocal %102 {approx = true} : vector<16x1xf32> -> vector<16x1xf32>
    %104 = vector.broadcast %103 : vector<16x1xf32> to vector<16x16xf32>
    %105 = arith.mulf %100, %104 : vector<16x16xf32>
    %106 = arith.truncf %105 : vector<16x16xf32> to vector<16x16xbf16>
    %cst_41 = arith.constant dense<0.000000e+00> : vector<16x128xf32>
    %107 = tpu.matmul %106, %91, %cst_41 {dimension_numbers = #tpu.dot_dimension_numbers<[1], [0], [0], [1], [0, 0, 1, 1], [], []>} : vector<16x16xbf16>, vector<16x128xbf16>, vector<16x128xf32> -> vector<16x128xf32>
    %108 = arith.truncf %107 : vector<16x128xf32> to vector<16x128xbf16>
    %109 = vector.extract_strided_slice %43 {offsets = [0, 384], sizes = [16, 128], strides = [1, 1]} : vector<16x512xbf16> to vector<16x128xbf16>
    %110 = vector.extract_strided_slice %39 {offsets = [0, 384], sizes = [16, 128], strides = [1, 1]} : vector<16x512xbf16> to vector<16x128xbf16>
    %111 = vector.extract_strided_slice %47 {offsets = [0, 384], sizes = [16, 128], strides = [1, 1]} : vector<16x512xbf16> to vector<16x128xbf16>
    %cst_42 = arith.constant dense<0.000000e+00> : vector<16x16xf32>
    %112 = tpu.matmul %109, %110, %cst_42 {dimension_numbers = #tpu.dot_dimension_numbers<[1], [1], [0], [0], [0, 0, 1, 0], [], []>} : vector<16x128xbf16>, vector<16x128xbf16>, vector<16x16xf32> -> vector<16x16xf32>
    %cst_43 = arith.constant 9.765625E-4 : f32
    %113 = vector.broadcast %cst_43 : f32 to vector<16x16xf32>
    %114 = arith.mulf %112, %113 : vector<16x16xf32>
    %115 = arith.addf %114, %48 : vector<16x16xf32>
    %cst_44 = arith.constant dense<0xFF800000> : vector<16xf32>
    %116 = vector.multi_reduction <maximumf>, %115, %cst_44 [1] : vector<16x16xf32> to vector<16xf32>
    %117 = vector.shape_cast %116 : vector<16xf32> to vector<16x1xf32>
    %118 = vector.broadcast %117 : vector<16x1xf32> to vector<16x16xf32>
    %119 = arith.subf %115, %118 : vector<16x16xf32>
    %120 = math.exp %119 : vector<16x16xf32>
    %cst_45 = arith.constant dense<0.000000e+00> : vector<16xf32>
    %121 = vector.multi_reduction <add>, %120, %cst_45 [1] : vector<16x16xf32> to vector<16xf32>
    %122 = vector.shape_cast %121 : vector<16xf32> to vector<16x1xf32>
    %123 = tpu.reciprocal %122 {approx = true} : vector<16x1xf32> -> vector<16x1xf32>
    %124 = vector.broadcast %123 : vector<16x1xf32> to vector<16x16xf32>
    %125 = arith.mulf %120, %124 : vector<16x16xf32>
    %126 = arith.truncf %125 : vector<16x16xf32> to vector<16x16xbf16>
    %cst_46 = arith.constant dense<0.000000e+00> : vector<16x128xf32>
    %127 = tpu.matmul %126, %111, %cst_46 {dimension_numbers = #tpu.dot_dimension_numbers<[1], [0], [0], [1], [0, 0, 1, 1], [], []>} : vector<16x16xbf16>, vector<16x128xbf16>, vector<16x128xf32> -> vector<16x128xf32>
    %128 = arith.truncf %127 : vector<16x128xf32> to vector<16x128xbf16>
    %129 = tpu.concatenate %68, %88, %108, %128 in 1 : vector<16x128xbf16>, vector<16x128xbf16>, vector<16x128xbf16>, vector<16x128xbf16> -> vector<16x512xbf16>
    %c0_47 = arith.constant 0 : index
    %c0_48 = arith.constant 0 : index
    %c0_49 = arith.constant 0 : index
    %130 = vector.load %arg9[%c0_47, %c0_48, %c0_49] : memref<1x512x128xbf16, #tpu.memory_space<vmem>>, vector<1x512x128xbf16>
    %131 = vector.shape_cast %130 : vector<1x512x128xbf16> to vector<512x128xbf16>
    %cst_50 = arith.constant dense<0.000000e+00> : vector<16x128xf32>
    %132 = tpu.matmul %129, %131, %cst_50 {dimension_numbers = #tpu.dot_dimension_numbers<[1], [0], [0], [1], [0, 0, 1, 1], [], []>} : vector<16x512xbf16>, vector<512x128xbf16>, vector<16x128xf32> -> vector<16x128xf32>
    %c0_51 = arith.constant 0 : index
    %c0_52 = arith.constant 0 : index
    %c0_53 = arith.constant 0 : index
    %133 = vector.load %arg10[%c0_51, %c0_52, %c0_53] : memref<1x1x128xf32, #tpu.memory_space<vmem>>, vector<1x1x128xf32>
    %134 = vector.shape_cast %133 : vector<1x1x128xf32> to vector<1x128xf32>
    %135 = vector.broadcast %134 : vector<1x128xf32> to vector<16x128xf32>
    %136 = arith.addf %132, %135 : vector<16x128xf32>
    %137 = arith.addf %6, %136 : vector<16x128xf32>
    %c0_54 = arith.constant 0 : index
    %c0_55 = arith.constant 0 : index
    %c0_56 = arith.constant 0 : index
    %138 = vector.load %arg11[%c0_54, %c0_55, %c0_56] : memref<1x1x128xf32, #tpu.memory_space<vmem>>, vector<1x1x128xf32>
    %139 = vector.shape_cast %138 : vector<1x1x128xf32> to vector<1x128xf32>
    %c0_57 = arith.constant 0 : index
    %c0_58 = arith.constant 0 : index
    %c0_59 = arith.constant 0 : index
    %140 = vector.load %arg12[%c0_57, %c0_58, %c0_59] : memref<1x1x128xf32, #tpu.memory_space<vmem>>, vector<1x1x128xf32>
    %141 = vector.shape_cast %140 : vector<1x1x128xf32> to vector<1x128xf32>
    %cst_60 = arith.constant dense<0.000000e+00> : vector<16xf32>
    %142 = vector.multi_reduction <add>, %137, %cst_60 [1] : vector<16x128xf32> to vector<16xf32>
    %143 = vector.shape_cast %142 : vector<16xf32> to vector<16x1xf32>
    %cst_61 = arith.constant 3.125000e-02 : f32
    %144 = vector.broadcast %cst_61 : f32 to vector<16x1xf32>
    %145 = arith.mulf %143, %144 : vector<16x1xf32>
    %146 = vector.broadcast %145 : vector<16x1xf32> to vector<16x128xf32>
    %147 = arith.subf %137, %146 : vector<16x128xf32>
    %cst_62 = arith.constant 0.000000e+00 : f32
    %148 = vector.shape_cast %2 : vector<1x128xi1> to vector<1x128xi1>
    %149 = vector.broadcast %148 : vector<1x128xi1> to vector<16x128xi1>
    %150 = vector.broadcast %cst_62 : f32 to vector<16x128xf32>
    %151 = arith.select %149, %147, %150 : vector<16x128xi1>, vector<16x128xf32>
    %152 = arith.mulf %151, %151 : vector<16x128xf32>
    %cst_63 = arith.constant dense<0.000000e+00> : vector<16xf32>
    %153 = vector.multi_reduction <add>, %152, %cst_63 [1] : vector<16x128xf32> to vector<16xf32>
    %154 = vector.shape_cast %153 : vector<16xf32> to vector<16x1xf32>
    %cst_64 = arith.constant 3.125000e-02 : f32
    %155 = vector.broadcast %cst_64 : f32 to vector<16x1xf32>
    %156 = arith.mulf %154, %155 : vector<16x1xf32>
    %cst_65 = arith.constant 9.99999974E-6 : f32
    %157 = vector.broadcast %cst_65 : f32 to vector<16x1xf32>
    %158 = arith.addf %156, %157 : vector<16x1xf32>
    %159 = math.rsqrt %158 : vector<16x1xf32>
    %160 = vector.broadcast %159 : vector<16x1xf32> to vector<16x128xf32>
    %161 = arith.mulf %151, %160 : vector<16x128xf32>
    %162 = vector.broadcast %139 : vector<1x128xf32> to vector<16x128xf32>
    %163 = arith.mulf %161, %162 : vector<16x128xf32>
    %164 = vector.broadcast %141 : vector<1x128xf32> to vector<16x128xf32>
    %165 = arith.addf %163, %164 : vector<16x128xf32>
    %166 = arith.truncf %165 : vector<16x128xf32> to vector<16x128xbf16>
    %c0_66 = arith.constant 0 : index
    %c0_67 = arith.constant 0 : index
    %c0_68 = arith.constant 0 : index
    %167 = vector.load %arg13[%c0_66, %c0_67, %c0_68] : memref<1x128x128xbf16, #tpu.memory_space<vmem>>, vector<1x128x128xbf16>
    %168 = vector.shape_cast %167 : vector<1x128x128xbf16> to vector<128x128xbf16>
    %cst_69 = arith.constant dense<0.000000e+00> : vector<16x128xf32>
    %169 = tpu.matmul %166, %168, %cst_69 {dimension_numbers = #tpu.dot_dimension_numbers<[1], [0], [0], [1], [0, 0, 1, 1], [], []>} : vector<16x128xbf16>, vector<128x128xbf16>, vector<16x128xf32> -> vector<16x128xf32>
    %c0_70 = arith.constant 0 : index
    %c0_71 = arith.constant 0 : index
    %c0_72 = arith.constant 0 : index
    %170 = vector.load %arg14[%c0_70, %c0_71, %c0_72] : memref<1x1x128xf32, #tpu.memory_space<vmem>>, vector<1x1x128xf32>
    %171 = vector.shape_cast %170 : vector<1x1x128xf32> to vector<1x128xf32>
    %172 = vector.broadcast %171 : vector<1x128xf32> to vector<16x128xf32>
    %173 = arith.addf %169, %172 : vector<16x128xf32>
    %cst_73 = arith.constant 0.000000e+00 : f32
    %174 = vector.broadcast %cst_73 : f32 to vector<16x128xf32>
    %175 = arith.maximumf %173, %174 : vector<16x128xf32>
    %176 = arith.truncf %175 : vector<16x128xf32> to vector<16x128xbf16>
    %c0_74 = arith.constant 0 : index
    %c0_75 = arith.constant 0 : index
    %c0_76 = arith.constant 0 : index
    %177 = vector.load %arg15[%c0_74, %c0_75, %c0_76] : memref<1x128x128xbf16, #tpu.memory_space<vmem>>, vector<1x128x128xbf16>
    %178 = vector.shape_cast %177 : vector<1x128x128xbf16> to vector<128x128xbf16>
    %cst_77 = arith.constant dense<0.000000e+00> : vector<16x128xf32>
    %179 = tpu.matmul %176, %178, %cst_77 {dimension_numbers = #tpu.dot_dimension_numbers<[1], [0], [0], [1], [0, 0, 1, 1], [], []>} : vector<16x128xbf16>, vector<128x128xbf16>, vector<16x128xf32> -> vector<16x128xf32>
    %c0_78 = arith.constant 0 : index
    %c0_79 = arith.constant 0 : index
    %c0_80 = arith.constant 0 : index
    %180 = vector.load %arg16[%c0_78, %c0_79, %c0_80] : memref<1x1x128xf32, #tpu.memory_space<vmem>>, vector<1x1x128xf32>
    %181 = vector.shape_cast %180 : vector<1x1x128xf32> to vector<1x128xf32>
    %182 = vector.broadcast %181 : vector<1x128xf32> to vector<16x128xf32>
    %183 = arith.addf %179, %182 : vector<16x128xf32>
    %184 = arith.addf %137, %183 : vector<16x128xf32>
    %c0_81 = arith.constant 0 : index
    %c0_82 = arith.constant 0 : index
    %185 = vector.load %arg20[%c0_81, %c0_82] : memref<16x128xf32, #tpu.memory_space<vmem>>, vector<16x128xf32>
    tpu.vector_store %arg20[%c0_81, %c0_82], %184 {strides = array<i32>} : memref<16x128xf32, #tpu.memory_space<vmem>>, vector<16x128xf32>,
    %c1_i32 = arith.constant 1 : i32
    %186 = arith.cmpi eq, %arg1, %c1_i32 : i32
    %187 = arith.extui %186 : i1 to i32
    %c0_i32_83 = arith.constant 0 : i32
    %188 = arith.cmpi ne, %187, %c0_i32_83 : i32
    scf.if %188 {
      %c0_84 = arith.constant 0 : index
      %c0_85 = arith.constant 0 : index
      %189 = vector.load %arg17[%c0_84, %c0_85] : memref<1x128xf32, #tpu.memory_space<vmem>>, vector<1x128xf32>
      %c0_86 = arith.constant 0 : index
      %c0_87 = arith.constant 0 : index
      %190 = vector.load %arg18[%c0_86, %c0_87] : memref<1x128xf32, #tpu.memory_space<vmem>>, vector<1x128xf32>
      %cst_88 = arith.constant dense<0.000000e+00> : vector<16xf32>
      %191 = vector.multi_reduction <add>, %184, %cst_88 [1] : vector<16x128xf32> to vector<16xf32>
      %192 = vector.shape_cast %191 : vector<16xf32> to vector<16x1xf32>
      %cst_89 = arith.constant 3.125000e-02 : f32
      %193 = vector.broadcast %cst_89 : f32 to vector<16x1xf32>
      %194 = arith.mulf %192, %193 : vector<16x1xf32>
      %195 = vector.broadcast %194 : vector<16x1xf32> to vector<16x128xf32>
      %196 = arith.subf %184, %195 : vector<16x128xf32>
      %cst_90 = arith.constant 0.000000e+00 : f32
      %197 = vector.shape_cast %2 : vector<1x128xi1> to vector<1x128xi1>
      %198 = vector.broadcast %197 : vector<1x128xi1> to vector<16x128xi1>
      %199 = vector.broadcast %cst_90 : f32 to vector<16x128xf32>
      %200 = arith.select %198, %196, %199 : vector<16x128xi1>, vector<16x128xf32>
      %201 = arith.mulf %200, %200 : vector<16x128xf32>
      %cst_91 = arith.constant dense<0.000000e+00> : vector<16xf32>
      %202 = vector.multi_reduction <add>, %201, %cst_91 [1] : vector<16x128xf32> to vector<16xf32>
      %203 = vector.shape_cast %202 : vector<16xf32> to vector<16x1xf32>
      %cst_92 = arith.constant 3.125000e-02 : f32
      %204 = vector.broadcast %cst_92 : f32 to vector<16x1xf32>
      %205 = arith.mulf %203, %204 : vector<16x1xf32>
      %cst_93 = arith.constant 9.99999974E-6 : f32
      %206 = vector.broadcast %cst_93 : f32 to vector<16x1xf32>
      %207 = arith.addf %205, %206 : vector<16x1xf32>
      %208 = math.rsqrt %207 : vector<16x1xf32>
      %209 = vector.broadcast %208 : vector<16x1xf32> to vector<16x128xf32>
      %210 = arith.mulf %200, %209 : vector<16x128xf32>
      %211 = vector.broadcast %189 : vector<1x128xf32> to vector<16x128xf32>
      %212 = arith.mulf %210, %211 : vector<16x128xf32>
      %213 = vector.broadcast %190 : vector<1x128xf32> to vector<16x128xf32>
      %214 = arith.addf %212, %213 : vector<16x128xf32>
      %215 = vector.shape_cast %214 : vector<16x128xf32> to vector<2x8x128xf32>
      %c0_94 = arith.constant 0 : index
      %c0_95 = arith.constant 0 : index
      %c0_96 = arith.constant 0 : index
      %216 = vector.load %arg19[%c0_94, %c0_95, %c0_96] : memref<2x8x128xf32, #tpu.memory_space<vmem>>, vector<2x8x128xf32>
      tpu.vector_store %arg19[%c0_94, %c0_95, %c0_96], %215 {strides = array<i32>} : memref<2x8x128xf32, #tpu.memory_space<vmem>>, vector<2x8x128xf32>,
    } else {
    }
    return
  }
  func.func @transform_0(%arg0: i32, %arg1: i32) -> (i32, i32, i32) {
    %c0_i32 = arith.constant 0 : i32
    %c0_i32_0 = arith.constant 0 : i32
    %c0_i32_1 = arith.constant 0 : i32
    return %arg0, %c0_i32, %c0_i32_0 : i32, i32, i32
  }
  func.func @transform_1(%arg0: i32, %arg1: i32) -> (i32, i32) {
    %c0_i32 = arith.constant 0 : i32
    %c0_i32_0 = arith.constant 0 : i32
    %c0_i32_1 = arith.constant 0 : i32
    return %c0_i32, %c0_i32_0 : i32, i32
  }
  func.func @transform_2(%arg0: i32, %arg1: i32) -> (i32, i32, i32) {
    %c0_i32 = arith.constant 0 : i32
    %c0_i32_0 = arith.constant 0 : i32
    %c0_i32_1 = arith.constant 0 : i32
    return %arg1, %c0_i32, %c0_i32_0 : i32, i32, i32
  }
  func.func @transform_3(%arg0: i32, %arg1: i32) -> (i32, i32, i32) {
    %c0_i32 = arith.constant 0 : i32
    %c0_i32_0 = arith.constant 0 : i32
    %c0_i32_1 = arith.constant 0 : i32
    return %arg1, %c0_i32, %c0_i32_0 : i32, i32, i32
  }
  func.func @transform_4(%arg0: i32, %arg1: i32) -> (i32, i32, i32) {
    %c0_i32 = arith.constant 0 : i32
    %c0_i32_0 = arith.constant 0 : i32
    %c0_i32_1 = arith.constant 0 : i32
    return %arg1, %c0_i32, %c0_i32_0 : i32, i32, i32
  }
  func.func @transform_5(%arg0: i32, %arg1: i32) -> (i32, i32, i32) {
    %c0_i32 = arith.constant 0 : i32
    %c0_i32_0 = arith.constant 0 : i32
    %c0_i32_1 = arith.constant 0 : i32
    return %arg1, %c0_i32, %c0_i32_0 : i32, i32, i32
  }
  func.func @transform_6(%arg0: i32, %arg1: i32) -> (i32, i32, i32) {
    %c0_i32 = arith.constant 0 : i32
    %c0_i32_0 = arith.constant 0 : i32
    %c0_i32_1 = arith.constant 0 : i32
    return %arg1, %c0_i32, %c0_i32_0 : i32, i32, i32
  }
  func.func @transform_7(%arg0: i32, %arg1: i32) -> (i32, i32, i32) {
    %c0_i32 = arith.constant 0 : i32
    %c0_i32_0 = arith.constant 0 : i32
    %c0_i32_1 = arith.constant 0 : i32
    return %arg1, %c0_i32, %c0_i32_0 : i32, i32, i32
  }
  func.func @transform_8(%arg0: i32, %arg1: i32) -> (i32, i32, i32) {
    %c0_i32 = arith.constant 0 : i32
    %c0_i32_0 = arith.constant 0 : i32
    %c0_i32_1 = arith.constant 0 : i32
    return %arg1, %c0_i32, %c0_i32_0 : i32, i32, i32
  }
  func.func @transform_9(%arg0: i32, %arg1: i32) -> (i32, i32, i32) {
    %c0_i32 = arith.constant 0 : i32
    %c0_i32_0 = arith.constant 0 : i32
    %c0_i32_1 = arith.constant 0 : i32
    return %arg1, %c0_i32, %c0_i32_0 : i32, i32, i32
  }
  func.func @transform_10(%arg0: i32, %arg1: i32) -> (i32, i32, i32) {
    %c0_i32 = arith.constant 0 : i32
    %c0_i32_0 = arith.constant 0 : i32
    %c0_i32_1 = arith.constant 0 : i32
    return %arg1, %c0_i32, %c0_i32_0 : i32, i32, i32
  }
  func.func @transform_11(%arg0: i32, %arg1: i32) -> (i32, i32, i32) {
    %c0_i32 = arith.constant 0 : i32
    %c0_i32_0 = arith.constant 0 : i32
    %c0_i32_1 = arith.constant 0 : i32
    return %arg1, %c0_i32, %c0_i32_0 : i32, i32, i32
  }
  func.func @transform_12(%arg0: i32, %arg1: i32) -> (i32, i32, i32) {
    %c0_i32 = arith.constant 0 : i32
    %c0_i32_0 = arith.constant 0 : i32
    %c0_i32_1 = arith.constant 0 : i32
    return %arg1, %c0_i32, %c0_i32_0 : i32, i32, i32
  }
  func.func @transform_13(%arg0: i32, %arg1: i32) -> (i32, i32, i32) {
    %c0_i32 = arith.constant 0 : i32
    %c0_i32_0 = arith.constant 0 : i32
    %c0_i32_1 = arith.constant 0 : i32
    return %arg1, %c0_i32, %c0_i32_0 : i32, i32, i32
  }
  func.func @transform_14(%arg0: i32, %arg1: i32) -> (i32, i32, i32) {
    %c0_i32 = arith.constant 0 : i32
    %c0_i32_0 = arith.constant 0 : i32
    %c0_i32_1 = arith.constant 0 : i32
    return %arg1, %c0_i32, %c0_i32_0 : i32, i32, i32
  }
  func.func @transform_15(%arg0: i32, %arg1: i32) -> (i32, i32) {
    %c0_i32 = arith.constant 0 : i32
    %c0_i32_0 = arith.constant 0 : i32
    %c0_i32_1 = arith.constant 0 : i32
    return %c0_i32, %c0_i32_0 : i32, i32
  }
  func.func @transform_16(%arg0: i32, %arg1: i32) -> (i32, i32) {
    %c0_i32 = arith.constant 0 : i32
    %c0_i32_0 = arith.constant 0 : i32
    %c0_i32_1 = arith.constant 0 : i32
    return %c0_i32, %c0_i32_0 : i32, i32
  }
  func.func @transform_17(%arg0: i32, %arg1: i32) -> (i32, i32, i32) {
    %c0_i32 = arith.constant 0 : i32
    %c0_i32_0 = arith.constant 0 : i32
    %c0_i32_1 = arith.constant 0 : i32
    return %arg0, %c0_i32, %c0_i32_0 : i32, i32, i32
  }
}

</mosaic_0001>

<llo_original>
// kernel: gpt_forward.3
$region0: #{gpt_forward.3}
  #allocation0 [shape = 'u32[]', space=smem, size = 0x4, offset = 0x4, fixed_abs, tag = 'smem constant byte address 0x4 - core index']
  #allocation1 [shape = 'u32[144,128]{1,0:T(1,128)}', space=vmem, size = 0x12000, scoped, tag = 'internal scratch']
  %s0 = inlined_call_operand.vmem [shape: f32[4,8,128], index: 0, kind: input, shape index: {}]
  %s1 = inlined_call_operand.vmem [shape: bf16[128,128], index: 1, kind: input, shape index: {}]
  %s2 = inlined_call_operand.vmem [shape: f32[1,128], index: 2, kind: input, shape index: {}]
  %s3 = inlined_call_operand.hbm [shape: f32[4,8,128], index: 3, kind: output, shape index: {}]
  %s4 = sld [smem:[#allocation0]]
  $region45: #{gpt_forward.3} parent=0
    _
  %s6 = ssub.s32 1, %s4
  %s7 = scalar_select 0, %s6, %s4
  $region1: #{gpt_forward.3} parent=0
    #allocation2 [shape = 'u8[16384]{0}', space=vmem, size = 0x4000, scoped, tag = 'output window, operand 0']
    #allocation3 [shape = 's32[2]{0}', space=sflag, size = 0x8, scoped, tag = 'scoped memory for gpt_forward.3']
    %8 = vsyncpa [#allocation3], 0
    %s9 = scalar_lea.sflag [#allocation3], 1
    %10 = vsyncpa %s9, 0
    loop: start=0, step=1, limit=4
    $region2: #{gpt_forward.3} parent=1 // loop_pre_header
      _
    $region3: #{gpt_forward.3} parent=1 // loop_header
      %s12 = sphi 0, %s16
      %p13 = scmp.ge.s32.totalorder %s12, 4
      %s19 = sphi 0, %s31
      %s20 = sphi 0, %s27
      %s21 = sphi 0, %s19
      %s22 = sphi 0, %s20
      %s23 = sphi 0, %s21
      %s24 = sphi 0, %s22
      %s34 = sphi 0, %s36
      %s37 = sphi 0, %s34
      %s38 = sphi 0, %s37
      %s54 = sphi 0, %s38
      %s60 = sphi 0, %s62
      %s63 = sphi 0, %s60
      %s64 = sphi 0, %s63
      %s80 = sphi 0, %s64
      %s86 = sphi 0, %s88
      %s89 = sphi 0, %s86
      %s90 = sphi 0, %s89
      %s106 = sphi 0, %s90
      %s114 = sphi 0, %s116
      %s117 = sphi 0, %s114
      %s118 = sphi 0, %s117
      %s134 = sphi 0, %s118
    $region4: #{gpt_forward.3} parent=1 // loop_header_branch
      %15 = sbr.rel (%p13) target = $region8
    $region5: #{gpt_forward.3} parent=1 // loop_body
      %s17 = ssub.s32 %s12, 1
      %s18 = ssub.s32 %s12, 2
      %s25 = sadd.s32 1, %s20
      %p26 = scmp.ge.s32.totalorder %s25, 1
      %s27 = scalar_select %p26, 0, %s25
      %s28 = sadd.s32 1, %s19
      %s29 = scalar_select %p26, %s28, %s19
      %p30 = scmp.ge.s32.totalorder %s29, 2
      %s31 = scalar_select %p30, 0, %s29
      %s32 = ssub.s32 %s19, %s31
      %p33 = scmp.eq.s32.totalorder %s32, 0
      %s35 = sadd.s32 %s34, 1
      %s36 = scalar_select %p33, %s34, %s35
      %p39 = pneg %p33
      %p40 = scmp.eq.s32.totalorder %s12, 1
      %p41 = por %p39, %p40
      %p42 = scmp.ne.s32.totalorder %s34, %s37
      %p43 = scmp.eq.s32.totalorder %s12, 0
      %p44 = por %p42, %p43
      %p45 = scmp.ne.s32.totalorder %s34, %s37
      %p46 = scmp.eq.s32.totalorder %s17, 1
      %p47 = por %p45, %p46
      %p48 = scmp.ne.s32.totalorder %s37, %s38
      %p49 = scmp.eq.s32.totalorder %s17, 0
      %p50 = por %p48, %p49
      %p51 = scmp.ne.s32.totalorder %s37, %s38
      %p52 = scmp.eq.s32.totalorder %s18, 1
      %p53 = por %p51, %p52
      %p55 = scmp.ne.s32.totalorder %s38, %s54
      %p56 = scmp.eq.s32.totalorder %s18, 0
      %p57 = por %p55, %p56
      %s58 = ssub.s32 %s20, %s27
      %p59 = scmp.eq.s32.totalorder %s58, 0
      %s61 = sadd.s32 %s60, 1
      %s62 = scalar_select %p59, %s60, %s61
      %p65 = pneg %p59
      %p66 = scmp.eq.s32.totalorder %s12, 1
      %p67 = por %p65, %p66
      %p68 = scmp.ne.s32.totalorder %s60, %s63
      %p69 = scmp.eq.s32.totalorder %s12, 0
      %p70 = por %p68, %p69
      %p71 = scmp.ne.s32.totalorder %s60, %s63
      %p72 = scmp.eq.s32.totalorder %s17, 1
      %p73 = por %p71, %p72
      %p74 = scmp.ne.s32.totalorder %s63, %s64
      %p75 = scmp.eq.s32.totalorder %s17, 0
      %p76 = por %p74, %p75
      %p77 = scmp.ne.s32.totalorder %s63, %s64
      %p78 = scmp.eq.s32.totalorder %s18, 1
      %p79 = por %p77, %p78
      %p81 = scmp.ne.s32.totalorder %s64, %s80
      %p82 = scmp.eq.s32.totalorder %s18, 0
      %p83 = por %p81, %p82
      %s84 = ssub.s32 %s20, %s27
      %p85 = scmp.eq.s32.totalorder %s84, 0
      %s87 = sadd.s32 %s86, 1
      %s88 = scalar_select %p85, %s86, %s87
      %p91 = pneg %p85
      %p92 = scmp.eq.s32.totalorder %s12, 1
      %p93 = por %p91, %p92
      %p94 = scmp.ne.s32.totalorder %s86, %s89
      %p95 = scmp.eq.s32.totalorder %s12, 0
      %p96 = por %p94, %p95
      %p97 = scmp.ne.s32.totalorder %s86, %s89
      %p98 = scmp.eq.s32.totalorder %s17, 1
      %p99 = por %p97, %p98
      %p100 = scmp.ne.s32.totalorder %s89, %s90
      %p101 = scmp.eq.s32.totalorder %s17, 0
      %p102 = por %p100, %p101
      %p103 = scmp.ne.s32.totalorder %s89, %s90
      %p104 = scmp.eq.s32.totalorder %s18, 1
      %p105 = por %p103, %p104
      %p107 = scmp.ne.s32.totalorder %s90, %s106
      %p108 = scmp.eq.s32.totalorder %s18, 0
      %p109 = por %p107, %p108
      %s110 = ssub.s32 %s19, %s31
      %s111 = ssub.s32 %s20, %s27
      %s112 = sor.u32 %s110, %s111
      %p113 = scmp.eq.s32.totalorder %s112, 0
      %s115 = sadd.s32 %s114, 1
      %s116 = scalar_select %p113, %s114, %s115
      %p119 = pneg %p113
      %p120 = scmp.eq.s32.totalorder %s12, 1
      %p121 = por %p119, %p120
      %p122 = scmp.ne.s32.totalorder %s114, %s117
      %p123 = scmp.eq.s32.totalorder %s12, 0
      %p124 = por %p122, %p123
      %p125 = scmp.ne.s32.totalorder %s114, %s117
      %p126 = scmp.eq.s32.totalorder %s17, 1
      %p127 = por %p125, %p126
      %p128 = scmp.ne.s32.totalorder %s117, %s118
      %p129 = scmp.eq.s32.totalorder %s17, 0
      %p130 = por %p128, %p129
      %p131 = scmp.ne.s32.totalorder %s117, %s118
      %p132 = scmp.eq.s32.totalorder %s18, 1
      %p133 = por %p131, %p132
      %p135 = scmp.ne.s32.totalorder %s118, %s134
      %p136 = scmp.eq.s32.totalorder %s18, 0
      %p137 = por %p135, %p136
      %p138 = scmp.le.s32.totalorder 1, %s12
      %p139 = scmp.lt.s32.totalorder %s12, 3
      %p140 = pnand %p138, %p139
      %p141 = pneg %p140
      // Predicated region
      $region9: #{gpt_forward.3} parent=5 // pred_check
        _
      $region10: #{gpt_forward.3} parent=5 // pred_check_branch
        %143 = sbr.rel (%p140) target = $region12
      $region11: #{gpt_forward.3} parent=5 // pred_region
        %s144 = ssub.s32 %s12, 1
        // Predicated region
        $region13: #{gpt_forward.3} parent=11 // pred_check
          %p145 = pneg %p76
        $region14: #{gpt_forward.3} parent=11 // pred_check_branch
          %147 = sbr.rel (%p145) target = $region16
        $region15: #{gpt_forward.3} parent=11 // pred_region
          %p148 = scmp.lt.s32.totalorder %s22, 0
          %s149 = scalar_select %p148, %s22, 0
          %s150 = smul.addr %s149, 4
          %s151 = scalar_lea.vmem %s1, %s150
        $region16: #{gpt_forward.3} parent=11 // pred_fallthru
          _
        // Predicated region
        $region17: #{gpt_forward.3} parent=11 // pred_check
          %p152 = pneg %p102
        $region18: #{gpt_forward.3} parent=11 // pred_check_branch
          %154 = sbr.rel (%p152) target = $region20
        $region19: #{gpt_forward.3} parent=11 // pred_region
          %p155 = scmp.lt.s32.totalorder %s22, 0
          %s156 = scalar_select %p155, %s22, 0
          %s157 = scalar_lea.vmem %s2, %s156
        $region20: #{gpt_forward.3} parent=11 // pred_fallthru
          _
      $region12: #{gpt_forward.3} parent=5 // pred_fallthru
        _
      %p158 = scmp.lt.s32.totalorder %s12, 2
      // Predicated region
      $region21: #{gpt_forward.3} parent=5 // pred_check
        %p159 = pneg %p158
      $region22: #{gpt_forward.3} parent=5 // pred_check_branch
        %161 = sbr.rel (%p159) target = $region24
      $region23: #{gpt_forward.3} parent=5 // pred_region
        // Predicated region
        $region25: #{gpt_forward.3} parent=23 // pred_check
          %p162 = pneg %p44
        $region26: #{gpt_forward.3} parent=23 // pred_check_branch
          %164 = sbr.rel (%p162) target = $region28
        $region27: #{gpt_forward.3} parent=23 // pred_region
          %s165 = smul.u32 2, %s19
          %p166 = scmp.lt.s32.totalorder %s165, 3
          %s167 = scalar_select %p166, %s165, 3
          %s168 = smul.addr %s167, 8
          %s169 = scalar_lea.vmem %s0, %s168
          %s170 = smul.u32 2, %s19
        $region28: #{gpt_forward.3} parent=23 // pred_fallthru
          _
      $region24: #{gpt_forward.3} parent=5 // pred_fallthru
        _
      %p171 = scmp.le.s32.totalorder 1, %s12
      %p172 = scmp.lt.s32.totalorder %s12, 3
      %p173 = pnand %p171, %p172
      %p174 = pneg %p173
      // Predicated region
      $region29: #{gpt_forward.3} parent=5 // pred_check
        _
      $region30: #{gpt_forward.3} parent=5 // pred_check_branch
        %176 = sbr.rel (%p173) target = $region32
      $region31: #{gpt_forward.3} parent=5 // pred_region
        %s177 = ssub.s32 %s12, 1
        %s178 = smul.u32 2, %s21
        %p179 = scmp.lt.s32.totalorder %s178, 3
        %s180 = scalar_select %p179, %s178, 3
        %s181 = smul.addr %s180, 8
        %s182 = scalar_lea.vmem %s0, %s181
        %p183 = pneg %p50
        %p184 = pneg %p47
        %p185 = scmp.lt.s32.totalorder %s22, 0
        %s186 = scalar_select %p185, %s22, 0
        %s187 = smul.addr %s186, 4
        %s188 = scalar_lea.vmem %s1, %s187
        %p189 = pneg %p76
        %p190 = pneg %p73
        %p191 = scmp.lt.s32.totalorder %s22, 0
        %s192 = scalar_select %p191, %s22, 0
        %s193 = scalar_lea.vmem %s2, %s192
        %p194 = pneg %p102
        %p195 = pneg %p99
        %p196 = pneg %p130
        %p197 = pneg %p127
        %s198 = sand.u32 %s117, 1
        %s199 = scalar_lea.sflag [#allocation3], %s198
        %s200 = sand.u32 %s117, 1
        %s201 = smul.addr %s200, 16
        %s202 = scalar_lea.vmem [#allocation2], %s201
        %s203 = smul.u32 2, %s21
        %p204 = scmp.lt.s32.totalorder %s203, 3
        %s205 = scalar_select %p204, %s203, 3
        %s206 = smul.addr %s205, 8
        %s207 = scalar_lea.vmem %s0, %s206
        %s208 = smul.u32 2, %s21
        %p209 = scmp.lt.s32.totalorder %s22, 0
        %s210 = scalar_select %p209, %s22, 0
        %s211 = smul.addr %s210, 4
        %s212 = scalar_lea.vmem %s1, %s211
        %p213 = scmp.lt.s32.totalorder %s22, 0
        %s214 = scalar_select %p213, %s22, 0
        %s215 = scalar_lea.vmem %s2, %s214
        %s216 = smul.u32 2, %s21
        %v218 = vld [vmem:[%s207] sm:$0xff]
        %v219 = vld [vmem:[%s207 + $0x8] sm:$0xff]
        %v220 = vpack.c.bf16 %v219, %v218
        %v221 = vld [vmem:[%s212] sm:$0xf]
        %v222 = vld [vmem:[%s212 + $0x4] sm:$0xf]
        %v223 = vld [vmem:[%s212 + $0x8] sm:$0xf]
        %v224 = vld [vmem:[%s212 + $0xc] sm:$0xf]
        %v225 = vld [vmem:[%s212 + $0x10] sm:$0xf]
        %v226 = vld [vmem:[%s212 + $0x14] sm:$0xf]
        %v227 = vld [vmem:[%s212 + $0x18] sm:$0xf]
        %v228 = vld [vmem:[%s212 + $0x1c] sm:$0xf]
        %v229 = vld [vmem:[%s212 + $0x20] sm:$0xf]
        %v230 = vld [vmem:[%s212 + $0x24] sm:$0xf]
        %v231 = vld [vmem:[%s212 + $0x28] sm:$0xf]
        %v232 = vld [vmem:[%s212 + $0x2c] sm:$0xf]
        %v233 = vld [vmem:[%s212 + $0x30] sm:$0xf]
        %v234 = vld [vmem:[%s212 + $0x34] sm:$0xf]
        %v235 = vld [vmem:[%s212 + $0x38] sm:$0xf]
        %v236 = vld [vmem:[%s212 + $0x3c] sm:$0xf]
        %v237 = vld [vmem:[%s215] sm:$0x1]
        %v239 = vlaneseq
        %v240 = vshrl.u32 %v239, 7
        %v241 = vsub.s32 0, %v240
        %v242 = vrot.slane %v237, %v241
        %v260 = vunpack.c.l.b16 %v221
        %v261 = vunpack.c.l.b16 %v222
        %v262 = vunpack.c.l.b16 %v223
        %v263 = vunpack.c.l.b16 %v224
        %v264 = vunpack.c.l.b16 %v225
        %v265 = vunpack.c.l.b16 %v226
        %v266 = vunpack.c.l.b16 %v227
        %v267 = vunpack.c.l.b16 %v228
        %v268 = vunpack.c.l.b16 %v229
        %v269 = vunpack.c.l.b16 %v230
        %v270 = vunpack.c.l.b16 %v231
        %v271 = vunpack.c.l.b16 %v232
        %v272 = vunpack.c.l.b16 %v233
        %v273 = vunpack.c.l.b16 %v234
        %v274 = vunpack.c.l.b16 %v235
        %v275 = vunpack.c.l.b16 %v236
        %v276 = vpack.c.b16 %v261, %v260
        %v277 = vpack.c.b16 %v263, %v262
        %v278 = vpack.c.b16 %v265, %v264
        %v279 = vpack.c.b16 %v267, %v266
        %v280 = vpack.c.b16 %v269, %v268
        %v281 = vpack.c.b16 %v271, %v270
        %v282 = vpack.c.b16 %v273, %v272
        %v283 = vpack.c.b16 %v275, %v274
        %292 = vmatprep.subr.bf16.mxu0 0
        %293 = vmatpush1.bf16.msra.mxu0 %v283
        %294 = vmatprep.subr.bf16.mxu0 0
        %295 = vmatpush1.bf16.msra.mxu0 %v282
        %296 = vmatprep.subr.bf16.mxu0 0
        %297 = vmatpush1.bf16.msra.mxu0 %v281
        %298 = vmatprep.subr.bf16.mxu0 0
        %299 = vmatpush1.bf16.msra.mxu0 %v280
        %300 = vmatprep.subr.bf16.mxu0 0
        %301 = vmatpush1.bf16.msra.mxu0 %v279
        %302 = vmatprep.subr.bf16.mxu0 0
        %303 = vmatpush1.bf16.msra.mxu0 %v278
        %304 = vmatprep.subr.bf16.mxu0 0
        %305 = vmatpush1.bf16.msra.mxu0 %v277
        %306 = vmatprep.subr.bf16.mxu0 0
        %307 = vmatpush1.bf16.msra.mxu0 %v276
        %308 = vmatprep.subr.bf16.mxu0 0
        %309 = vmatpush2.bf16.msra.mxu0 0
        %310 = vmatprep.subr.bf16.mxu0 0
        %311 = vmatpush2.bf16.msra.mxu0 0
        %312 = vmatprep.subr.bf16.mxu0 0
        %313 = vmatpush2.bf16.msra.mxu0 0
        %314 = vmatprep.subr.bf16.mxu0 0
        %315 = vmatpush2.bf16.msra.mxu0 0
        %316 = vmatprep.subr.bf16.mxu0 0
        %317 = vmatpush2.bf16.msra.mxu0 0
        %318 = vmatprep.subr.bf16.mxu0 0
        %319 = vmatpush2.bf16.msra.mxu0 0
        %320 = vmatprep.subr.bf16.mxu0 0
        %321 = vmatpush2.bf16.msra.mxu0 0
        %322 = vmatprep.subr.bf16.mxu0 0
        %323 = vmatpush2.bf16.msra.mxu0 0
        %324 = vmatprep.mubr.bf16.mxu0 0
        %325 = vmatmul.mubr.bf16.gmra.mxu0 %v220
        %v326 = vpop.f32.mrf.mxu0
        %v327 = vadd.f32 %v242, %v326
        %v328 = vpop.f32.mrf.mxu0
        %v329 = vpop.f32.mrf.mxu0
        %v330 = vadd.f32 %v242, %v329
        %v331 = vpop.f32.mrf.mxu0
        %332 = vdwg.mxu0
        %333 = vst [vmem:[%s202] sm:$0xff] %v327
        %334 = vst [vmem:[%s202 + $0x8] sm:$0xff] %v330
        %s335 = sand.u32 %s117, 1
        %s336 = scalar_lea.sflag [#allocation3], %s335
        %s337 = sand.u32 %s117, 1
        %s338 = smul.addr %s337, 16
        %s339 = scalar_lea.vmem [#allocation2], %s338
        // Predicated region
        $region33: #{gpt_forward.3} parent=31 // pred_check
          %p340 = pneg %p127
        $region34: #{gpt_forward.3} parent=31 // pred_check_branch
          %342 = sbr.rel (%p340) target = $region36
        $region35: #{gpt_forward.3} parent=31 // pred_region
          %s343 = smul.u32 2, %s21
          %s345 = ssub.s32 256, 256
          %346 = vsyncadd %s336, %s345
          %s347 = sadd.s32 %s22, %s343
          %s348 = smul.addr %s347, 128
          %s349 = scalar_lea.hbm %s3, %s348
          %s350 = sshll.u32 %s339, 4
          %s351 = int_to_ptr.vmem [resolvable:$true] %s350
          %356 = dma.vmem_to_hbm [thread:$0]  %s351, 256, %s349, %s336, 128, 128, 8
        $region36: #{gpt_forward.3} parent=31 // pred_fallthru
          _
      $region32: #{gpt_forward.3} parent=5 // pred_fallthru
        _
      %p357 = scmp.le.s32.totalorder 2, %s12
      // Predicated region
      $region37: #{gpt_forward.3} parent=5 // pred_check
        %p358 = pneg %p357
      $region38: #{gpt_forward.3} parent=5 // pred_check_branch
        %360 = sbr.rel (%p358) target = $region40
      $region39: #{gpt_forward.3} parent=5 // pred_region
        %s361 = ssub.s32 %s12, 2
        // Predicated region
        $region41: #{gpt_forward.3} parent=39 // pred_check
          %p362 = pneg %p133
        $region42: #{gpt_forward.3} parent=39 // pred_check_branch
          %364 = sbr.rel (%p362) target = $region44
        $region43: #{gpt_forward.3} parent=39 // pred_region
          %s365 = sand.u32 %s118, 1
          %s366 = scalar_lea.sflag [#allocation3], %s365
          %s367 = sand.u32 %s118, 1
          %s368 = smul.addr %s367, 16
          %s369 = scalar_lea.vmem [#allocation2], %s368
          %370 = dma.done %s366, 256
        $region44: #{gpt_forward.3} parent=39 // pred_fallthru
          _
      $region40: #{gpt_forward.3} parent=5 // pred_fallthru
        _
    $region6: #{gpt_forward.3} parent=1 // loop_footer
      %s16 = sadd.s32 1, %s12
    $region7: #{gpt_forward.3} parent=1 // loop_footer_branch
      %11 = sbr.rel target = $region3
    $region8: #{gpt_forward.3} parent=1 // loop_exit
      _
    %371 = vsyncpa [#allocation3], 1
    %s372 = scalar_lea.sflag [#allocation3], 1
    %373 = vsyncpa %s372, 1

// kernel: gpt_forward.2
$region0: #{gpt_forward.2}
  #allocation0 [shape = 'u32[]', space=smem, size = 0x4, offset = 0x4, fixed_abs, tag = 'smem constant byte address 0x4 - core index']
  #allocation1 [shape = 'u32[144,128]{1,0:T(1,128)}', space=vmem, size = 0x12000, scoped, tag = 'internal scratch']
  #allocation2 [shape = 'f32[16,128]{1,0:T(8,128)}', space=vmem, size = 0x2000, scoped, tag = 'scratch operand']
  %s0 = inlined_call_operand.vmem [shape: f32[4,8,128], index: 0, kind: input, shape index: {}]
  %s1 = inlined_call_operand.vmem [shape: f32[16,16], index: 1, kind: input, shape index: {}]
  %s2 = inlined_call_operand.vmem [shape: f32[2,1,128], index: 2, kind: input, shape index: {}]
  %s3 = inlined_call_operand.vmem [shape: f32[2,1,128], index: 3, kind: input, shape index: {}]
  %s4 = inlined_call_operand.vmem [shape: bf16[2,128,512], index: 4, kind: input, shape index: {}]
  %s5 = inlined_call_operand.vmem [shape: bf16[2,128,512], index: 5, kind: input, shape index: {}]
  %s6 = inlined_call_operand.vmem [shape: bf16[2,128,512], index: 6, kind: input, shape index: {}]
  %s7 = inlined_call_operand.vmem [shape: bf16[2,512,128], index: 7, kind: input, shape index: {}]
  %s8 = inlined_call_operand.vmem [shape: f32[2,1,128], index: 8, kind: input, shape index: {}]
  %s9 = inlined_call_operand.vmem [shape: f32[2,1,128], index: 9, kind: input, shape index: {}]
  %s10 = inlined_call_operand.vmem [shape: f32[2,1,128], index: 10, kind: input, shape index: {}]
  %s11 = inlined_call_operand.vmem [shape: bf16[2,128,128], index: 11, kind: input, shape index: {}]
  %s12 = inlined_call_operand.vmem [shape: f32[2,1,128], index: 12, kind: input, shape index: {}]
  %s13 = inlined_call_operand.vmem [shape: bf16[2,128,128], index: 13, kind: input, shape index: {}]
  %s14 = inlined_call_operand.vmem [shape: f32[2,1,128], index: 14, kind: input, shape index: {}]
  %s15 = inlined_call_operand.vmem [shape: f32[1,128], index: 15, kind: input, shape index: {}]
  %s16 = inlined_call_operand.vmem [shape: f32[1,128], index: 16, kind: input, shape index: {}]
  %s17 = inlined_call_operand.vmem [shape: f32[4,8,128], index: 17, kind: output, shape index: {}]
  %s18 = sld [smem:[#allocation0]]
  $region109: #{gpt_forward.2} parent=0
    _
  %s20 = ssub.s32 1, %s18
  %s21 = scalar_select 0, %s20, %s18
  loop: start=0, step=1, limit=6
  $region2: #{gpt_forward.2} parent=0 // loop_pre_header
    _
  $region3: #{gpt_forward.2} parent=0 // loop_header
    %s23 = sphi 0, %s27
    %p24 = scmp.ge.s32.totalorder %s23, 6
    %s30 = sphi 0, %s42
    %s31 = sphi 0, %s38
    %s32 = sphi 0, %s30
    %s33 = sphi 0, %s31
    %s34 = sphi 0, %s32
    %s35 = sphi 0, %s33
    %s45 = sphi 0, %s47
    %s48 = sphi 0, %s45
    %s49 = sphi 0, %s48
    %s65 = sphi 0, %s49
    %s69 = sphi 0, %s69
    %s71 = sphi 0, %s69
    %s72 = sphi 0, %s71
    %s86 = sphi 0, %s72
    %s92 = sphi 0, %s94
    %s95 = sphi 0, %s92
    %s96 = sphi 0, %s95
    %s112 = sphi 0, %s96
    %s118 = sphi 0, %s120
    %s121 = sphi 0, %s118
    %s122 = sphi 0, %s121
    %s138 = sphi 0, %s122
    %s144 = sphi 0, %s146
    %s147 = sphi 0, %s144
    %s148 = sphi 0, %s147
    %s164 = sphi 0, %s148
    %s170 = sphi 0, %s172
    %s173 = sphi 0, %s170
    %s174 = sphi 0, %s173
    %s190 = sphi 0, %s174
    %s196 = sphi 0, %s198
    %s199 = sphi 0, %s196
    %s200 = sphi 0, %s199
    %s216 = sphi 0, %s200
    %s222 = sphi 0, %s224
    %s225 = sphi 0, %s222
    %s226 = sphi 0, %s225
    %s242 = sphi 0, %s226
    %s248 = sphi 0, %s250
    %s251 = sphi 0, %s248
    %s252 = sphi 0, %s251
    %s268 = sphi 0, %s252
    %s274 = sphi 0, %s276
    %s277 = sphi 0, %s274
    %s278 = sphi 0, %s277
    %s294 = sphi 0, %s278
    %s300 = sphi 0, %s302
    %s303 = sphi 0, %s300
    %s304 = sphi 0, %s303
    %s320 = sphi 0, %s304
    %s326 = sphi 0, %s328
    %s329 = sphi 0, %s326
    %s330 = sphi 0, %s329
    %s346 = sphi 0, %s330
    %s352 = sphi 0, %s354
    %s355 = sphi 0, %s352
    %s356 = sphi 0, %s355
    %s372 = sphi 0, %s356
    %s378 = sphi 0, %s380
    %s381 = sphi 0, %s378
    %s382 = sphi 0, %s381
    %s398 = sphi 0, %s382
    %s404 = sphi 0, %s406
    %s407 = sphi 0, %s404
    %s408 = sphi 0, %s407
    %s424 = sphi 0, %s408
    %s428 = sphi 0, %s428
    %s430 = sphi 0, %s428
    %s431 = sphi 0, %s430
    %s445 = sphi 0, %s431
    %s449 = sphi 0, %s449
    %s451 = sphi 0, %s449
    %s452 = sphi 0, %s451
    %s466 = sphi 0, %s452
    %s472 = sphi 0, %s474
    %s475 = sphi 0, %s472
    %s476 = sphi 0, %s475
    %s492 = sphi 0, %s476
  $region4: #{gpt_forward.2} parent=0 // loop_header_branch
    %26 = sbr.rel (%p24) target = $region8
  $region5: #{gpt_forward.2} parent=0 // loop_body
    %s28 = ssub.s32 %s23, 1
    %s29 = ssub.s32 %s23, 2
    %s36 = sadd.s32 1, %s31
    %p37 = scmp.ge.s32.totalorder %s36, 2
    %s38 = scalar_select %p37, 0, %s36
    %s39 = sadd.s32 1, %s30
    %s40 = scalar_select %p37, %s39, %s30
    %p41 = scmp.ge.s32.totalorder %s40, 2
    %s42 = scalar_select %p41, 0, %s40
    %s43 = ssub.s32 %s30, %s42
    %p44 = scmp.eq.s32.totalorder %s43, 0
    %s46 = sadd.s32 %s45, 1
    %s47 = scalar_select %p44, %s45, %s46
    %p50 = pneg %p44
    %p51 = scmp.eq.s32.totalorder %s23, 3
    %p52 = por %p50, %p51
    %p53 = scmp.ne.s32.totalorder %s45, %s48
    %p54 = scmp.eq.s32.totalorder %s23, 0
    %p55 = por %p53, %p54
    %p56 = scmp.ne.s32.totalorder %s45, %s48
    %p57 = scmp.eq.s32.totalorder %s28, 3
    %p58 = por %p56, %p57
    %p59 = scmp.ne.s32.totalorder %s48, %s49
    %p60 = scmp.eq.s32.totalorder %s28, 0
    %p61 = por %p59, %p60
    %p62 = scmp.ne.s32.totalorder %s48, %s49
    %p63 = scmp.eq.s32.totalorder %s29, 3
    %p64 = por %p62, %p63
    %p66 = scmp.ne.s32.totalorder %s49, %s65
    %p67 = scmp.eq.s32.totalorder %s29, 0
    %p68 = por %p66, %p67
    %s70 = sadd.s32 %s69, 1
    %p73 = scmp.eq.s32.totalorder %s23, 3
    %p74 = scmp.ne.s32.totalorder %s69, %s71
    %p75 = scmp.eq.s32.totalorder %s23, 0
    %p76 = por %p74, %p75
    %p77 = scmp.ne.s32.totalorder %s69, %s71
    %p78 = scmp.eq.s32.totalorder %s28, 3
    %p79 = por %p77, %p78
    %p80 = scmp.ne.s32.totalorder %s71, %s72
    %p81 = scmp.eq.s32.totalorder %s28, 0
    %p82 = por %p80, %p81
    %p83 = scmp.ne.s32.totalorder %s71, %s72
    %p84 = scmp.eq.s32.totalorder %s29, 3
    %p85 = por %p83, %p84
    %p87 = scmp.ne.s32.totalorder %s72, %s86
    %p88 = scmp.eq.s32.totalorder %s29, 0
    %p89 = por %p87, %p88
    %s90 = ssub.s32 %s31, %s38
    %p91 = scmp.eq.s32.totalorder %s90, 0
    %s93 = sadd.s32 %s92, 1
    %s94 = scalar_select %p91, %s92, %s93
    %p97 = pneg %p91
    %p98 = scmp.eq.s32.totalorder %s23, 3
    %p99 = por %p97, %p98
    %p100 = scmp.ne.s32.totalorder %s92, %s95
    %p101 = scmp.eq.s32.totalorder %s23, 0
    %p102 = por %p100, %p101
    %p103 = scmp.ne.s32.totalorder %s92, %s95
    %p104 = scmp.eq.s32.totalorder %s28, 3
    %p105 = por %p103, %p104
    %p106 = scmp.ne.s32.totalorder %s95, %s96
    %p107 = scmp.eq.s32.totalorder %s28, 0
    %p108 = por %p106, %p107
    %p109 = scmp.ne.s32.totalorder %s95, %s96
    %p110 = scmp.eq.s32.totalorder %s29, 3
    %p111 = por %p109, %p110
    %p113 = scmp.ne.s32.totalorder %s96, %s112
    %p114 = scmp.eq.s32.totalorder %s29, 0
    %p115 = por %p113, %p114
    %s116 = ssub.s32 %s31, %s38
    %p117 = scmp.eq.s32.totalorder %s116, 0
    %s119 = sadd.s32 %s118, 1
    %s120 = scalar_select %p117, %s118, %s119
    %p123 = pneg %p117
    %p124 = scmp.eq.s32.totalorder %s23, 3
    %p125 = por %p123, %p124
    %p126 = scmp.ne.s32.totalorder %s118, %s121
    %p127 = scmp.eq.s32.totalorder %s23, 0
    %p128 = por %p126, %p127
    %p129 = scmp.ne.s32.totalorder %s118, %s121
    %p130 = scmp.eq.s32.totalorder %s28, 3
    %p131 = por %p129, %p130
    %p132 = scmp.ne.s32.totalorder %s121, %s122
    %p133 = scmp.eq.s32.totalorder %s28, 0
    %p134 = por %p132, %p133
    %p135 = scmp.ne.s32.totalorder %s121, %s122
    %p136 = scmp.eq.s32.totalorder %s29, 3
    %p137 = por %p135, %p136
    %p139 = scmp.ne.s32.totalorder %s122, %s138
    %p140 = scmp.eq.s32.totalorder %s29, 0
    %p141 = por %p139, %p140
    %s142 = ssub.s32 %s31, %s38
    %p143 = scmp.eq.s32.totalorder %s142, 0
    %s145 = sadd.s32 %s144, 1
    %s146 = scalar_select %p143, %s144, %s145
    %p149 = pneg %p143
    %p150 = scmp.eq.s32.totalorder %s23, 3
    %p151 = por %p149, %p150
    %p152 = scmp.ne.s32.totalorder %s144, %s147
    %p153 = scmp.eq.s32.totalorder %s23, 0
    %p154 = por %p152, %p153
    %p155 = scmp.ne.s32.totalorder %s144, %s147
    %p156 = scmp.eq.s32.totalorder %s28, 3
    %p157 = por %p155, %p156
    %p158 = scmp.ne.s32.totalorder %s147, %s148
    %p159 = scmp.eq.s32.totalorder %s28, 0
    %p160 = por %p158, %p159
    %p161 = scmp.ne.s32.totalorder %s147, %s148
    %p162 = scmp.eq.s32.totalorder %s29, 3
    %p163 = por %p161, %p162
    %p165 = scmp.ne.s32.totalorder %s148, %s164
    %p166 = scmp.eq.s32.totalorder %s29, 0
    %p167 = por %p165, %p166
    %s168 = ssub.s32 %s31, %s38
    %p169 = scmp.eq.s32.totalorder %s168, 0
    %s171 = sadd.s32 %s170, 1
    %s172 = scalar_select %p169, %s170, %s171
    %p175 = pneg %p169
    %p176 = scmp.eq.s32.totalorder %s23, 3
    %p177 = por %p175, %p176
    %p178 = scmp.ne.s32.totalorder %s170, %s173
    %p179 = scmp.eq.s32.totalorder %s23, 0
    %p180 = por %p178, %p179
    %p181 = scmp.ne.s32.totalorder %s170, %s173
    %p182 = scmp.eq.s32.totalorder %s28, 3
    %p183 = por %p181, %p182
    %p184 = scmp.ne.s32.totalorder %s173, %s174
    %p185 = scmp.eq.s32.totalorder %s28, 0
    %p186 = por %p184, %p185
    %p187 = scmp.ne.s32.totalorder %s173, %s174
    %p188 = scmp.eq.s32.totalorder %s29, 3
    %p189 = por %p187, %p188
    %p191 = scmp.ne.s32.totalorder %s174, %s190
    %p192 = scmp.eq.s32.totalorder %s29, 0
    %p193 = por %p191, %p192
    %s194 = ssub.s32 %s31, %s38
    %p195 = scmp.eq.s32.totalorder %s194, 0
    %s197 = sadd.s32 %s196, 1
    %s198 = scalar_select %p195, %s196, %s197
    %p201 = pneg %p195
    %p202 = scmp.eq.s32.totalorder %s23, 3
    %p203 = por %p201, %p202
    %p204 = scmp.ne.s32.totalorder %s196, %s199
    %p205 = scmp.eq.s32.totalorder %s23, 0
    %p206 = por %p204, %p205
    %p207 = scmp.ne.s32.totalorder %s196, %s199
    %p208 = scmp.eq.s32.totalorder %s28, 3
    %p209 = por %p207, %p208
    %p210 = scmp.ne.s32.totalorder %s199, %s200
    %p211 = scmp.eq.s32.totalorder %s28, 0
    %p212 = por %p210, %p211
    %p213 = scmp.ne.s32.totalorder %s199, %s200
    %p214 = scmp.eq.s32.totalorder %s29, 3
    %p215 = por %p213, %p214
    %p217 = scmp.ne.s32.totalorder %s200, %s216
    %p218 = scmp.eq.s32.totalorder %s29, 0
    %p219 = por %p217, %p218
    %s220 = ssub.s32 %s31, %s38
    %p221 = scmp.eq.s32.totalorder %s220, 0
    %s223 = sadd.s32 %s222, 1
    %s224 = scalar_select %p221, %s222, %s223
    %p227 = pneg %p221
    %p228 = scmp.eq.s32.totalorder %s23, 3
    %p229 = por %p227, %p228
    %p230 = scmp.ne.s32.totalorder %s222, %s225
    %p231 = scmp.eq.s32.totalorder %s23, 0
    %p232 = por %p230, %p231
    %p233 = scmp.ne.s32.totalorder %s222, %s225
    %p234 = scmp.eq.s32.totalorder %s28, 3
    %p235 = por %p233, %p234
    %p236 = scmp.ne.s32.totalorder %s225, %s226
    %p237 = scmp.eq.s32.totalorder %s28, 0
    %p238 = por %p236, %p237
    %p239 = scmp.ne.s32.totalorder %s225, %s226
    %p240 = scmp.eq.s32.totalorder %s29, 3
    %p241 = por %p239, %p240
    %p243 = scmp.ne.s32.totalorder %s226, %s242
    %p244 = scmp.eq.s32.totalorder %s29, 0
    %p245 = por %p243, %p244
    %s246 = ssub.s32 %s31, %s38
    %p247 = scmp.eq.s32.totalorder %s246, 0
    %s249 = sadd.s32 %s248, 1
    %s250 = scalar_select %p247, %s248, %s249
    %p253 = pneg %p247
    %p254 = scmp.eq.s32.totalorder %s23, 3
    %p255 = por %p253, %p254
    %p256 = scmp.ne.s32.totalorder %s248, %s251
    %p257 = scmp.eq.s32.totalorder %s23, 0
    %p258 = por %p256, %p257
    %p259 = scmp.ne.s32.totalorder %s248, %s251
    %p260 = scmp.eq.s32.totalorder %s28, 3
    %p261 = por %p259, %p260
    %p262 = scmp.ne.s32.totalorder %s251, %s252
    %p263 = scmp.eq.s32.totalorder %s28, 0
    %p264 = por %p262, %p263
    %p265 = scmp.ne.s32.totalorder %s251, %s252
    %p266 = scmp.eq.s32.totalorder %s29, 3
    %p267 = por %p265, %p266
    %p269 = scmp.ne.s32.totalorder %s252, %s268
    %p270 = scmp.eq.s32.totalorder %s29, 0
    %p271 = por %p269, %p270
    %s272 = ssub.s32 %s31, %s38
    %p273 = scmp.eq.s32.totalorder %s272, 0
    %s275 = sadd.s32 %s274, 1
    %s276 = scalar_select %p273, %s274, %s275
    %p279 = pneg %p273
    %p280 = scmp.eq.s32.totalorder %s23, 3
    %p281 = por %p279, %p280
    %p282 = scmp.ne.s32.totalorder %s274, %s277
    %p283 = scmp.eq.s32.totalorder %s23, 0
    %p284 = por %p282, %p283
    %p285 = scmp.ne.s32.totalorder %s274, %s277
    %p286 = scmp.eq.s32.totalorder %s28, 3
    %p287 = por %p285, %p286
    %p288 = scmp.ne.s32.totalorder %s277, %s278
    %p289 = scmp.eq.s32.totalorder %s28, 0
    %p290 = por %p288, %p289
    %p291 = scmp.ne.s32.totalorder %s277, %s278
    %p292 = scmp.eq.s32.totalorder %s29, 3
    %p293 = por %p291, %p292
    %p295 = scmp.ne.s32.totalorder %s278, %s294
    %p296 = scmp.eq.s32.totalorder %s29, 0
    %p297 = por %p295, %p296
    %s298 = ssub.s32 %s31, %s38
    %p299 = scmp.eq.s32.totalorder %s298, 0
    %s301 = sadd.s32 %s300, 1
    %s302 = scalar_select %p299, %s300, %s301
    %p305 = pneg %p299
    %p306 = scmp.eq.s32.totalorder %s23, 3
    %p307 = por %p305, %p306
    %p308 = scmp.ne.s32.totalorder %s300, %s303
    %p309 = scmp.eq.s32.totalorder %s23, 0
    %p310 = por %p308, %p309
    %p311 = scmp.ne.s32.totalorder %s300, %s303
    %p312 = scmp.eq.s32.totalorder %s28, 3
    %p313 = por %p311, %p312
    %p314 = scmp.ne.s32.totalorder %s303, %s304
    %p315 = scmp.eq.s32.totalorder %s28, 0
    %p316 = por %p314, %p315
    %p317 = scmp.ne.s32.totalorder %s303, %s304
    %p318 = scmp.eq.s32.totalorder %s29, 3
    %p319 = por %p317, %p318
    %p321 = scmp.ne.s32.totalorder %s304, %s320
    %p322 = scmp.eq.s32.totalorder %s29, 0
    %p323 = por %p321, %p322
    %s324 = ssub.s32 %s31, %s38
    %p325 = scmp.eq.s32.totalorder %s324, 0
    %s327 = sadd.s32 %s326, 1
    %s328 = scalar_select %p325, %s326, %s327
    %p331 = pneg %p325
    %p332 = scmp.eq.s32.totalorder %s23, 3
    %p333 = por %p331, %p332
    %p334 = scmp.ne.s32.totalorder %s326, %s329
    %p335 = scmp.eq.s32.totalorder %s23, 0
    %p336 = por %p334, %p335
    %p337 = scmp.ne.s32.totalorder %s326, %s329
    %p338 = scmp.eq.s32.totalorder %s28, 3
    %p339 = por %p337, %p338
    %p340 = scmp.ne.s32.totalorder %s329, %s330
    %p341 = scmp.eq.s32.totalorder %s28, 0
    %p342 = por %p340, %p341
    %p343 = scmp.ne.s32.totalorder %s329, %s330
    %p344 = scmp.eq.s32.totalorder %s29, 3
    %p345 = por %p343, %p344
    %p347 = scmp.ne.s32.totalorder %s330, %s346
    %p348 = scmp.eq.s32.totalorder %s29, 0
    %p349 = por %p347, %p348
    %s350 = ssub.s32 %s31, %s38
    %p351 = scmp.eq.s32.totalorder %s350, 0
    %s353 = sadd.s32 %s352, 1
    %s354 = scalar_select %p351, %s352, %s353
    %p357 = pneg %p351
    %p358 = scmp.eq.s32.totalorder %s23, 3
    %p359 = por %p357, %p358
    %p360 = scmp.ne.s32.totalorder %s352, %s355
    %p361 = scmp.eq.s32.totalorder %s23, 0
    %p362 = por %p360, %p361
    %p363 = scmp.ne.s32.totalorder %s352, %s355
    %p364 = scmp.eq.s32.totalorder %s28, 3
    %p365 = por %p363, %p364
    %p366 = scmp.ne.s32.totalorder %s355, %s356
    %p367 = scmp.eq.s32.totalorder %s28, 0
    %p368 = por %p366, %p367
    %p369 = scmp.ne.s32.totalorder %s355, %s356
    %p370 = scmp.eq.s32.totalorder %s29, 3
    %p371 = por %p369, %p370
    %p373 = scmp.ne.s32.totalorder %s356, %s372
    %p374 = scmp.eq.s32.totalorder %s29, 0
    %p375 = por %p373, %p374
    %s376 = ssub.s32 %s31, %s38
    %p377 = scmp.eq.s32.totalorder %s376, 0
    %s379 = sadd.s32 %s378, 1
    %s380 = scalar_select %p377, %s378, %s379
    %p383 = pneg %p377
    %p384 = scmp.eq.s32.totalorder %s23, 3
    %p385 = por %p383, %p384
    %p386 = scmp.ne.s32.totalorder %s378, %s381
    %p387 = scmp.eq.s32.totalorder %s23, 0
    %p388 = por %p386, %p387
    %p389 = scmp.ne.s32.totalorder %s378, %s381
    %p390 = scmp.eq.s32.totalorder %s28, 3
    %p391 = por %p389, %p390
    %p392 = scmp.ne.s32.totalorder %s381, %s382
    %p393 = scmp.eq.s32.totalorder %s28, 0
    %p394 = por %p392, %p393
    %p395 = scmp.ne.s32.totalorder %s381, %s382
    %p396 = scmp.eq.s32.totalorder %s29, 3
    %p397 = por %p395, %p396
    %p399 = scmp.ne.s32.totalorder %s382, %s398
    %p400 = scmp.eq.s32.totalorder %s29, 0
    %p401 = por %p399, %p400
    %s402 = ssub.s32 %s31, %s38
    %p403 = scmp.eq.s32.totalorder %s402, 0
    %s405 = sadd.s32 %s404, 1
    %s406 = scalar_select %p403, %s404, %s405
    %p409 = pneg %p403
    %p410 = scmp.eq.s32.totalorder %s23, 3
    %p411 = por %p409, %p410
    %p412 = scmp.ne.s32.totalorder %s404, %s407
    %p413 = scmp.eq.s32.totalorder %s23, 0
    %p414 = por %p412, %p413
    %p415 = scmp.ne.s32.totalorder %s404, %s407
    %p416 = scmp.eq.s32.totalorder %s28, 3
    %p417 = por %p415, %p416
    %p418 = scmp.ne.s32.totalorder %s407, %s408
    %p419 = scmp.eq.s32.totalorder %s28, 0
    %p420 = por %p418, %p419
    %p421 = scmp.ne.s32.totalorder %s407, %s408
    %p422 = scmp.eq.s32.totalorder %s29, 3
    %p423 = por %p421, %p422
    %p425 = scmp.ne.s32.totalorder %s408, %s424
    %p426 = scmp.eq.s32.totalorder %s29, 0
    %p427 = por %p425, %p426
    %s429 = sadd.s32 %s428, 1
    %p432 = scmp.eq.s32.totalorder %s23, 3
    %p433 = scmp.ne.s32.totalorder %s428, %s430
    %p434 = scmp.eq.s32.totalorder %s23, 0
    %p435 = por %p433, %p434
    %p436 = scmp.ne.s32.totalorder %s428, %s430
    %p437 = scmp.eq.s32.totalorder %s28, 3
    %p438 = por %p436, %p437
    %p439 = scmp.ne.s32.totalorder %s430, %s431
    %p440 = scmp.eq.s32.totalorder %s28, 0
    %p441 = por %p439, %p440
    %p442 = scmp.ne.s32.totalorder %s430, %s431
    %p443 = scmp.eq.s32.totalorder %s29, 3
    %p444 = por %p442, %p443
    %p446 = scmp.ne.s32.totalorder %s431, %s445
    %p447 = scmp.eq.s32.totalorder %s29, 0
    %p448 = por %p446, %p447
    %s450 = sadd.s32 %s449, 1
    %p453 = scmp.eq.s32.totalorder %s23, 3
    %p454 = scmp.ne.s32.totalorder %s449, %s451
    %p455 = scmp.eq.s32.totalorder %s23, 0
    %p456 = por %p454, %p455
    %p457 = scmp.ne.s32.totalorder %s449, %s451
    %p458 = scmp.eq.s32.totalorder %s28, 3
    %p459 = por %p457, %p458
    %p460 = scmp.ne.s32.totalorder %s451, %s452
    %p461 = scmp.eq.s32.totalorder %s28, 0
    %p462 = por %p460, %p461
    %p463 = scmp.ne.s32.totalorder %s451, %s452
    %p464 = scmp.eq.s32.totalorder %s29, 3
    %p465 = por %p463, %p464
    %p467 = scmp.ne.s32.totalorder %s452, %s466
    %p468 = scmp.eq.s32.totalorder %s29, 0
    %p469 = por %p467, %p468
    %s470 = ssub.s32 %s30, %s42
    %p471 = scmp.eq.s32.totalorder %s470, 0
    %s473 = sadd.s32 %s472, 1
    %s474 = scalar_select %p471, %s472, %s473
    %p477 = pneg %p471
    %p478 = scmp.eq.s32.totalorder %s23, 3
    %p479 = por %p477, %p478
    %p480 = scmp.ne.s32.totalorder %s472, %s475
    %p481 = scmp.eq.s32.totalorder %s23, 0
    %p482 = por %p480, %p481
    %p483 = scmp.ne.s32.totalorder %s472, %s475
    %p484 = scmp.eq.s32.totalorder %s28, 3
    %p485 = por %p483, %p484
    %p486 = scmp.ne.s32.totalorder %s475, %s476
    %p487 = scmp.eq.s32.totalorder %s28, 0
    %p488 = por %p486, %p487
    %p489 = scmp.ne.s32.totalorder %s475, %s476
    %p490 = scmp.eq.s32.totalorder %s29, 3
    %p491 = por %p489, %p490
    %p493 = scmp.ne.s32.totalorder %s476, %s492
    %p494 = scmp.eq.s32.totalorder %s29, 0
    %p495 = por %p493, %p494
    %p496 = scmp.le.s32.totalorder 1, %s23
    %p497 = scmp.lt.s32.totalorder %s23, 5
    %p498 = pnand %p496, %p497
    %p499 = pneg %p498
    // Predicated region
    $region9: #{gpt_forward.2} parent=5 // pred_check
      _
    $region10: #{gpt_forward.2} parent=5 // pred_check_branch
      %501 = sbr.rel (%p498) target = $region12
    $region11: #{gpt_forward.2} parent=5 // pred_region
      %s502 = ssub.s32 %s23, 1
      // Predicated region
      $region13: #{gpt_forward.2} parent=11 // pred_check
        %p503 = pneg %p82
      $region14: #{gpt_forward.2} parent=11 // pred_check_branch
        %505 = sbr.rel (%p503) target = $region16
      $region15: #{gpt_forward.2} parent=11 // pred_region
        _
      $region16: #{gpt_forward.2} parent=11 // pred_fallthru
        _
      // Predicated region
      $region17: #{gpt_forward.2} parent=11 // pred_check
        %p506 = pneg %p441
      $region18: #{gpt_forward.2} parent=11 // pred_check_branch
        %508 = sbr.rel (%p506) target = $region20
      $region19: #{gpt_forward.2} parent=11 // pred_region
        _
      $region20: #{gpt_forward.2} parent=11 // pred_fallthru
        _
      // Predicated region
      $region21: #{gpt_forward.2} parent=11 // pred_check
        %p509 = pneg %p462
      $region22: #{gpt_forward.2} parent=11 // pred_check_branch
        %511 = sbr.rel (%p509) target = $region24
      $region23: #{gpt_forward.2} parent=11 // pred_region
        _
      $region24: #{gpt_forward.2} parent=11 // pred_fallthru
        _
    $region12: #{gpt_forward.2} parent=5 // pred_fallthru
      _
    %p512 = scmp.lt.s32.totalorder %s23, 4
    // Predicated region
    $region25: #{gpt_forward.2} parent=5 // pred_check
      %p513 = pneg %p512
    $region26: #{gpt_forward.2} parent=5 // pred_check_branch
      %515 = sbr.rel (%p513) target = $region28
    $region27: #{gpt_forward.2} parent=5 // pred_region
      // Predicated region
      $region29: #{gpt_forward.2} parent=27 // pred_check
        %p516 = pneg %p55
      $region30: #{gpt_forward.2} parent=27 // pred_check_branch
        %518 = sbr.rel (%p516) target = $region32
      $region31: #{gpt_forward.2} parent=27 // pred_region
        %s519 = smul.u32 2, %s30
        %p520 = scmp.lt.s32.totalorder %s519, 3
        %s521 = scalar_select %p520, %s519, 3
        %s522 = smul.addr %s521, 8
        %s523 = scalar_lea.vmem %s0, %s522
        %s524 = smul.u32 2, %s30
      $region32: #{gpt_forward.2} parent=27 // pred_fallthru
        _
      // Predicated region
      $region33: #{gpt_forward.2} parent=27 // pred_check
        %p525 = pneg %p102
      $region34: #{gpt_forward.2} parent=27 // pred_check_branch
        %527 = sbr.rel (%p525) target = $region36
      $region35: #{gpt_forward.2} parent=27 // pred_region
        %p528 = scmp.lt.s32.totalorder %s31, 1
        %s529 = scalar_select %p528, %s31, 1
        %s530 = scalar_lea.vmem %s2, %s529
      $region36: #{gpt_forward.2} parent=27 // pred_fallthru
        _
      // Predicated region
      $region37: #{gpt_forward.2} parent=27 // pred_check
        %p531 = pneg %p128
      $region38: #{gpt_forward.2} parent=27 // pred_check_branch
        %533 = sbr.rel (%p531) target = $region40
      $region39: #{gpt_forward.2} parent=27 // pred_region
        %p534 = scmp.lt.s32.totalorder %s31, 1
        %s535 = scalar_select %p534, %s31, 1
        %s536 = scalar_lea.vmem %s3, %s535
      $region40: #{gpt_forward.2} parent=27 // pred_fallthru
        _
      // Predicated region
      $region41: #{gpt_forward.2} parent=27 // pred_check
        %p537 = pneg %p154
      $region42: #{gpt_forward.2} parent=27 // pred_check_branch
        %539 = sbr.rel (%p537) target = $region44
      $region43: #{gpt_forward.2} parent=27 // pred_region
        %p540 = scmp.lt.s32.totalorder %s31, 1
        %s541 = scalar_select %p540, %s31, 1
        %s542 = smul.addr %s541, 64
        %s543 = smul.addr %s542, 4
        %s544 = scalar_lea.vmem %s4, %s543
      $region44: #{gpt_forward.2} parent=27 // pred_fallthru
        _
      // Predicated region
      $region45: #{gpt_forward.2} parent=27 // pred_check
        %p545 = pneg %p180
      $region46: #{gpt_forward.2} parent=27 // pred_check_branch
        %547 = sbr.rel (%p545) target = $region48
      $region47: #{gpt_forward.2} parent=27 // pred_region
        %p548 = scmp.lt.s32.totalorder %s31, 1
        %s549 = scalar_select %p548, %s31, 1
        %s550 = smul.addr %s549, 64
        %s551 = smul.addr %s550, 4
        %s552 = scalar_lea.vmem %s5, %s551
      $region48: #{gpt_forward.2} parent=27 // pred_fallthru
        _
      // Predicated region
      $region49: #{gpt_forward.2} parent=27 // pred_check
        %p553 = pneg %p206
      $region50: #{gpt_forward.2} parent=27 // pred_check_branch
        %555 = sbr.rel (%p553) target = $region52
      $region51: #{gpt_forward.2} parent=27 // pred_region
        %p556 = scmp.lt.s32.totalorder %s31, 1
        %s557 = scalar_select %p556, %s31, 1
        %s558 = smul.addr %s557, 64
        %s559 = smul.addr %s558, 4
        %s560 = scalar_lea.vmem %s6, %s559
      $region52: #{gpt_forward.2} parent=27 // pred_fallthru
        _
      // Predicated region
      $region53: #{gpt_forward.2} parent=27 // pred_check
        %p561 = pneg %p232
      $region54: #{gpt_forward.2} parent=27 // pred_check_branch
        %563 = sbr.rel (%p561) target = $region56
      $region55: #{gpt_forward.2} parent=27 // pred_region
        %p564 = scmp.lt.s32.totalorder %s31, 1
        %s565 = scalar_select %p564, %s31, 1
        %s566 = smul.addr %s565, 64
        %s567 = smul.addr %s566, 4
        %s568 = scalar_lea.vmem %s7, %s567
      $region56: #{gpt_forward.2} parent=27 // pred_fallthru
        _
      // Predicated region
      $region57: #{gpt_forward.2} parent=27 // pred_check
        %p569 = pneg %p258
      $region58: #{gpt_forward.2} parent=27 // pred_check_branch
        %571 = sbr.rel (%p569) target = $region60
      $region59: #{gpt_forward.2} parent=27 // pred_region
        %p572 = scmp.lt.s32.totalorder %s31, 1
        %s573 = scalar_select %p572, %s31, 1
        %s574 = scalar_lea.vmem %s8, %s573
      $region60: #{gpt_forward.2} parent=27 // pred_fallthru
        _
      // Predicated region
      $region61: #{gpt_forward.2} parent=27 // pred_check
        %p575 = pneg %p284
      $region62: #{gpt_forward.2} parent=27 // pred_check_branch
        %577 = sbr.rel (%p575) target = $region64
      $region63: #{gpt_forward.2} parent=27 // pred_region
        %p578 = scmp.lt.s32.totalorder %s31, 1
        %s579 = scalar_select %p578, %s31, 1
        %s580 = scalar_lea.vmem %s9, %s579
      $region64: #{gpt_forward.2} parent=27 // pred_fallthru
        _
      // Predicated region
      $region65: #{gpt_forward.2} parent=27 // pred_check
        %p581 = pneg %p310
      $region66: #{gpt_forward.2} parent=27 // pred_check_branch
        %583 = sbr.rel (%p581) target = $region68
      $region67: #{gpt_forward.2} parent=27 // pred_region
        %p584 = scmp.lt.s32.totalorder %s31, 1
        %s585 = scalar_select %p584, %s31, 1
        %s586 = scalar_lea.vmem %s10, %s585
      $region68: #{gpt_forward.2} parent=27 // pred_fallthru
        _
      // Predicated region
      $region69: #{gpt_forward.2} parent=27 // pred_check
        %p587 = pneg %p336
      $region70: #{gpt_forward.2} parent=27 // pred_check_branch
        %589 = sbr.rel (%p587) target = $region72
      $region71: #{gpt_forward.2} parent=27 // pred_region
        %p590 = scmp.lt.s32.totalorder %s31, 1
        %s591 = scalar_select %p590, %s31, 1
        %s592 = smul.addr %s591, 16
        %s593 = smul.addr %s592, 4
        %s594 = scalar_lea.vmem %s11, %s593
      $region72: #{gpt_forward.2} parent=27 // pred_fallthru
        _
      // Predicated region
      $region73: #{gpt_forward.2} parent=27 // pred_check
        %p595 = pneg %p362
      $region74: #{gpt_forward.2} parent=27 // pred_check_branch
        %597 = sbr.rel (%p595) target = $region76
      $region75: #{gpt_forward.2} parent=27 // pred_region
        %p598 = scmp.lt.s32.totalorder %s31, 1
        %s599 = scalar_select %p598, %s31, 1
        %s600 = scalar_lea.vmem %s12, %s599
      $region76: #{gpt_forward.2} parent=27 // pred_fallthru
        _
      // Predicated region
      $region77: #{gpt_forward.2} parent=27 // pred_check
        %p601 = pneg %p388
      $region78: #{gpt_forward.2} parent=27 // pred_check_branch
        %603 = sbr.rel (%p601) target = $region80
      $region79: #{gpt_forward.2} parent=27 // pred_region
        %p604 = scmp.lt.s32.totalorder %s31, 1
        %s605 = scalar_select %p604, %s31, 1
        %s606 = smul.addr %s605, 16
        %s607 = smul.addr %s606, 4
        %s608 = scalar_lea.vmem %s13, %s607
      $region80: #{gpt_forward.2} parent=27 // pred_fallthru
        _
      // Predicated region
      $region81: #{gpt_forward.2} parent=27 // pred_check
        %p609 = pneg %p414
      $region82: #{gpt_forward.2} parent=27 // pred_check_branch
        %611 = sbr.rel (%p609) target = $region84
      $region83: #{gpt_forward.2} parent=27 // pred_region
        %p612 = scmp.lt.s32.totalorder %s31, 1
        %s613 = scalar_select %p612, %s31, 1
        %s614 = scalar_lea.vmem %s14, %s613
      $region84: #{gpt_forward.2} parent=27 // pred_fallthru
        _
    $region28: #{gpt_forward.2} parent=5 // pred_fallthru
      _
    %p615 = scmp.le.s32.totalorder 1, %s23
    %p616 = scmp.lt.s32.totalorder %s23, 5
    %p617 = pnand %p615, %p616
    %p618 = pneg %p617
    // Predicated region
    $region85: #{gpt_forward.2} parent=5 // pred_check
      _
    $region86: #{gpt_forward.2} parent=5 // pred_check_branch
      %620 = sbr.rel (%p617) target = $region88
    $region87: #{gpt_forward.2} parent=5 // pred_region
      %s621 = ssub.s32 %s23, 1
      %s622 = smul.u32 2, %s32
      %p623 = scmp.lt.s32.totalorder %s622, 3
      %s624 = scalar_select %p623, %s622, 3
      %s625 = smul.addr %s624, 8
      %s626 = scalar_lea.vmem %s0, %s625
      %p627 = pneg %p61
      %p628 = pneg %p58
      %p629 = pneg %p82
      %p630 = pneg %p79
      %p631 = scmp.lt.s32.totalorder %s33, 1
      %s632 = scalar_select %p631, %s33, 1
      %s633 = scalar_lea.vmem %s2, %s632
      %p634 = pneg %p108
      %p635 = pneg %p105
      %p636 = scmp.lt.s32.totalorder %s33, 1
      %s637 = scalar_select %p636, %s33, 1
      %s638 = scalar_lea.vmem %s3, %s637
      %p639 = pneg %p134
      %p640 = pneg %p131
      %p641 = scmp.lt.s32.totalorder %s33, 1
      %s642 = scalar_select %p641, %s33, 1
      %s643 = smul.addr %s642, 64
      %s644 = smul.addr %s643, 4
      %s645 = scalar_lea.vmem %s4, %s644
      %p646 = pneg %p160
      %p647 = pneg %p157
      %p648 = scmp.lt.s32.totalorder %s33, 1
      %s649 = scalar_select %p648, %s33, 1
      %s650 = smul.addr %s649, 64
      %s651 = smul.addr %s650, 4
      %s652 = scalar_lea.vmem %s5, %s651
      %p653 = pneg %p186
      %p654 = pneg %p183
      %p655 = scmp.lt.s32.totalorder %s33, 1
      %s656 = scalar_select %p655, %s33, 1
      %s657 = smul.addr %s656, 64
      %s658 = smul.addr %s657, 4
      %s659 = scalar_lea.vmem %s6, %s658
      %p660 = pneg %p212
      %p661 = pneg %p209
      %p662 = scmp.lt.s32.totalorder %s33, 1
      %s663 = scalar_select %p662, %s33, 1
      %s664 = smul.addr %s663, 64
      %s665 = smul.addr %s664, 4
      %s666 = scalar_lea.vmem %s7, %s665
      %p667 = pneg %p238
      %p668 = pneg %p235
      %p669 = scmp.lt.s32.totalorder %s33, 1
      %s670 = scalar_select %p669, %s33, 1
      %s671 = scalar_lea.vmem %s8, %s670
      %p672 = pneg %p264
      %p673 = pneg %p261
      %p674 = scmp.lt.s32.totalorder %s33, 1
      %s675 = scalar_select %p674, %s33, 1
      %s676 = scalar_lea.vmem %s9, %s675
      %p677 = pneg %p290
      %p678 = pneg %p287
      %p679 = scmp.lt.s32.totalorder %s33, 1
      %s680 = scalar_select %p679, %s33, 1
      %s681 = scalar_lea.vmem %s10, %s680
      %p682 = pneg %p316
      %p683 = pneg %p313
      %p684 = scmp.lt.s32.totalorder %s33, 1
      %s685 = scalar_select %p684, %s33, 1
      %s686 = smul.addr %s685, 16
      %s687 = smul.addr %s686, 4
      %s688 = scalar_lea.vmem %s11, %s687
      %p689 = pneg %p342
      %p690 = pneg %p339
      %p691 = scmp.lt.s32.totalorder %s33, 1
      %s692 = scalar_select %p691, %s33, 1
      %s693 = scalar_lea.vmem %s12, %s692
      %p694 = pneg %p368
      %p695 = pneg %p365
      %p696 = scmp.lt.s32.totalorder %s33, 1
      %s697 = scalar_select %p696, %s33, 1
      %s698 = smul.addr %s697, 16
      %s699 = smul.addr %s698, 4
      %s700 = scalar_lea.vmem %s13, %s699
      %p701 = pneg %p394
      %p702 = pneg %p391
      %p703 = scmp.lt.s32.totalorder %s33, 1
      %s704 = scalar_select %p703, %s33, 1
      %s705 = scalar_lea.vmem %s14, %s704
      %p706 = pneg %p420
      %p707 = pneg %p417
      %p708 = pneg %p441
      %p709 = pneg %p438
      %p710 = pneg %p462
      %p711 = pneg %p459
      %p712 = pneg %p488
      %p713 = pneg %p485
      %s714 = smul.u32 2, %s32
      %p715 = scmp.lt.s32.totalorder %s714, 3
      %s716 = scalar_select %p715, %s714, 3
      %s717 = smul.addr %s716, 8
      %s718 = scalar_lea.vmem %s17, %s717
      %s719 = smul.u32 2, %s32
      %p720 = scmp.lt.s32.totalorder %s719, 3
      %s721 = scalar_select %p720, %s719, 3
      %s722 = smul.addr %s721, 8
      %s723 = scalar_lea.vmem %s0, %s722
      %s724 = smul.u32 2, %s32
      %p725 = scmp.lt.s32.totalorder %s33, 1
      %s726 = scalar_select %p725, %s33, 1
      %s727 = scalar_lea.vmem %s2, %s726
      %p728 = scmp.lt.s32.totalorder %s33, 1
      %s729 = scalar_select %p728, %s33, 1
      %s730 = scalar_lea.vmem %s3, %s729
      %p731 = scmp.lt.s32.totalorder %s33, 1
      %s732 = scalar_select %p731, %s33, 1
      %s733 = smul.addr %s732, 64
      %s734 = smul.addr %s733, 4
      %s735 = scalar_lea.vmem %s4, %s734
      %p736 = scmp.lt.s32.totalorder %s33, 1
      %s737 = scalar_select %p736, %s33, 1
      %s738 = smul.addr %s737, 64
      %s739 = smul.addr %s738, 4
      %s740 = scalar_lea.vmem %s5, %s739
      %p741 = scmp.lt.s32.totalorder %s33, 1
      %s742 = scalar_select %p741, %s33, 1
      %s743 = smul.addr %s742, 64
      %s744 = smul.addr %s743, 4
      %s745 = scalar_lea.vmem %s6, %s744
      %p746 = scmp.lt.s32.totalorder %s33, 1
      %s747 = scalar_select %p746, %s33, 1
      %s748 = smul.addr %s747, 64
      %s749 = smul.addr %s748, 4
      %s750 = scalar_lea.vmem %s7, %s749
      %p751 = scmp.lt.s32.totalorder %s33, 1
      %s752 = scalar_select %p751, %s33, 1
      %s753 = scalar_lea.vmem %s8, %s752
      %p754 = scmp.lt.s32.totalorder %s33, 1
      %s755 = scalar_select %p754, %s33, 1
      %s756 = scalar_lea.vmem %s9, %s755
      %p757 = scmp.lt.s32.totalorder %s33, 1
      %s758 = scalar_select %p757, %s33, 1
      %s759 = scalar_lea.vmem %s10, %s758
      %p760 = scmp.lt.s32.totalorder %s33, 1
      %s761 = scalar_select %p760, %s33, 1
      %s762 = smul.addr %s761, 16
      %s763 = smul.addr %s762, 4
      %s764 = scalar_lea.vmem %s11, %s763
      %p765 = scmp.lt.s32.totalorder %s33, 1
      %s766 = scalar_select %p765, %s33, 1
      %s767 = scalar_lea.vmem %s12, %s766
      %p768 = scmp.lt.s32.totalorder %s33, 1
      %s769 = scalar_select %p768, %s33, 1
      %s770 = smul.addr %s769, 16
      %s771 = smul.addr %s770, 4
      %s772 = scalar_lea.vmem %s13, %s771
      %p773 = scmp.lt.s32.totalorder %s33, 1
      %s774 = scalar_select %p773, %s33, 1
      %s775 = scalar_lea.vmem %s14, %s774
      %s776 = smul.u32 2, %s32
      %p777 = scmp.lt.s32.totalorder %s776, 3
      %s778 = scalar_select %p777, %s776, 3
      %s779 = smul.addr %s778, 8
      %s780 = scalar_lea.vmem %s17, %s779
      %s781 = smul.u32 2, %s32
      %v783 = vlaneseq
      %v784 = vand.u32 %v783, 127
      %vm785 = vcmp.lt.s32.totalorder %v784, 32
      %p786 = scmp.eq.s32.totalorder %s33, 0
      // Predicated region
      $region89: #{gpt_forward.2} parent=87 // pred_check
        %p787 = pneg %p786
      $region90: #{gpt_forward.2} parent=87 // pred_check_branch
        %789 = sbr.rel (%p787) target = $region92
      $region91: #{gpt_forward.2} parent=87 // pred_region
        %v790 = vld [vmem:[%s723] sm:$0xff]
        %v791 = vld [vmem:[%s723 + $0x8] sm:$0xff]
        %792 = vst [vmem:[#allocation2] sm:$0xff] %v790
        %793 = vst [vmem:[#allocation2 + $0x8] sm:$0xff] %v791
      $region92: #{gpt_forward.2} parent=87 // pred_fallthru
        _
      %v794 = vld [vmem:[#allocation2] sm:$0xff]
      %v795 = vld [vmem:[#allocation2 + $0x8] sm:$0xff]
      %v796 = vld [vmem:[%s727] sm:$0x1]
      %v797 = vld [vmem:[%s730] sm:$0x1]
      %798 = vadd.xlane.f32.xlu0 %v794
      %v799 = vpop.xlane.xlu0 %798
      %800 = vadd.xlane.f32.xlu0 %v795
      %v801 = vpop.xlane.xlu0 %800
      %v802 = vmul.f32 %v799, 0.03125
      %v803 = vmul.f32 %v801, 0.03125
      %v804 = vsub.f32 %v794, %v802
      %v805 = vsub.f32 %v795, %v803
      %v806 = vsel %vm785, 1, 0
      %vm807 = vcmp.eq.s32.totalorder %v806, 1
      %v808 = vsel %vm807, %v804, 0.0
      %v809 = vsel %vm807, %v805, 0.0
      %v810 = vmul.f32 %v808, %v808
      %v811 = vmul.f32 %v809, %v809
      %812 = vadd.xlane.f32.xlu0 %v810
      %v813 = vpop.xlane.xlu0 %812
      %814 = vadd.xlane.f32.xlu0 %v811
      %v815 = vpop.xlane.xlu0 %814
      %v816 = vmul.f32 %v813, 0.03125
      %v817 = vmul.f32 %v815, 0.03125
      %v818 = vadd.f32 %v816, 1e-05
      %v819 = vadd.f32 %v817, 1e-05
      %v820 = vrsqrt.pop %v818
      %v821 = vrsqrt.pop %v819
      %v822 = vmul.f32 %v808, %v820
      %v823 = vmul.f32 %v809, %v821
      %v825 = vlaneseq
      %v826 = vshrl.u32 %v825, 7
      %v827 = vsub.s32 0, %v826
      %v828 = vrot.slane %v796, %v827
      %v830 = vmul.f32 %v822, %v828
      %v831 = vmul.f32 %v823, %v828
      %v833 = vlaneseq
      %v834 = vshrl.u32 %v833, 7
      %v835 = vsub.s32 0, %v834
      %v836 = vrot.slane %v797, %v835
      %v838 = vadd.f32 %v830, %v836
      %v839 = vadd.f32 %v831, %v836
      %v840 = vpack.c.bf16 %v839, %v838
      %v841 = vld [vmem:[%s735] sm:$0xff]
      %v842 = vld [vmem:[%s735 + $0x8] sm:$0xff]
      %v843 = vld [vmem:[%s735 + $0x10] sm:$0xff]
      %v844 = vld [vmem:[%s735 + $0x18] sm:$0xff]
      %v845 = vld [vmem:[%s735 + $0x20] sm:$0xff]
      %v846 = vld [vmem:[%s735 + $0x28] sm:$0xff]
      %v847 = vld [vmem:[%s735 + $0x30] sm:$0xff]
      %v848 = vld [vmem:[%s735 + $0x38] sm:$0xff]
      %v849 = vld [vmem:[%s735 + $0x40] sm:$0xff]
      %v850 = vld [vmem:[%s735 + $0x48] sm:$0xff]
      %v851 = vld [vmem:[%s735 + $0x50] sm:$0xff]
      %v852 = vld [vmem:[%s735 + $0x58] sm:$0xff]
      %v853 = vld [vmem:[%s735 + $0x60] sm:$0xff]
      %v854 = vld [vmem:[%s735 + $0x68] sm:$0xff]
      %v855 = vld [vmem:[%s735 + $0x70] sm:$0xff]
      %v856 = vld [vmem:[%s735 + $0x78] sm:$0xff]
      %v857 = vld [vmem:[%s735 + $0x80] sm:$0xff]
      %v858 = vld [vmem:[%s735 + $0x88] sm:$0xff]
      %v859 = vld [vmem:[%s735 + $0x90] sm:$0xff]
      %v860 = vld [vmem:[%s735 + $0x98] sm:$0xff]
      %v861 = vld [vmem:[%s735 + $0xa0] sm:$0xff]
      %v862 = vld [vmem:[%s735 + $0xa8] sm:$0xff]
      %v863 = vld [vmem:[%s735 + $0xb0] sm:$0xff]
      %v864 = vld [vmem:[%s735 + $0xb8] sm:$0xff]
      %v865 = vld [vmem:[%s735 + $0xc0] sm:$0xff]
      %v866 = vld [vmem:[%s735 + $0xc8] sm:$0xff]
      %v867 = vld [vmem:[%s735 + $0xd0] sm:$0xff]
      %v868 = vld [vmem:[%s735 + $0xd8] sm:$0xff]
      %v869 = vld [vmem:[%s735 + $0xe0] sm:$0xff]
      %v870 = vld [vmem:[%s735 + $0xe8] sm:$0xff]
      %v871 = vld [vmem:[%s735 + $0xf0] sm:$0xff]
      %v872 = vld [vmem:[%s735 + $0xf8] sm:$0xff]
      %v905 = vunpack.c.l.b16 %v841
      %v906 = vunpack.c.h.b16 %v841
      %v907 = vunpack.c.l.b16 %v842
      %v908 = vunpack.c.h.b16 %v842
      %v909 = vunpack.c.l.b16 %v843
      %v910 = vunpack.c.h.b16 %v843
      %v911 = vunpack.c.l.b16 %v844
      %v912 = vunpack.c.h.b16 %v844
      %v913 = vunpack.c.l.b16 %v845
      %v914 = vunpack.c.h.b16 %v845
      %v915 = vunpack.c.l.b16 %v846
      %v916 = vunpack.c.h.b16 %v846
      %v917 = vunpack.c.l.b16 %v847
      %v918 = vunpack.c.h.b16 %v847
      %v919 = vunpack.c.l.b16 %v848
      %v920 = vunpack.c.h.b16 %v848
      %v921 = vunpack.c.l.b16 %v849
      %v922 = vunpack.c.h.b16 %v849
      %v923 = vunpack.c.l.b16 %v850
      %v924 = vunpack.c.h.b16 %v850
      %v925 = vunpack.c.l.b16 %v851
      %v926 = vunpack.c.h.b16 %v851
      %v927 = vunpack.c.l.b16 %v852
      %v928 = vunpack.c.h.b16 %v852
      %v929 = vunpack.c.l.b16 %v853
      %v930 = vunpack.c.h.b16 %v853
      %v931 = vunpack.c.l.b16 %v854
      %v932 = vunpack.c.h.b16 %v854
      %v933 = vunpack.c.l.b16 %v855
      %v934 = vunpack.c.h.b16 %v855
      %v935 = vunpack.c.l.b16 %v856
      %v936 = vunpack.c.h.b16 %v856
      %v937 = vunpack.c.l.b16 %v857
      %v938 = vunpack.c.h.b16 %v857
      %v939 = vunpack.c.l.b16 %v858
      %v940 = vunpack.c.h.b16 %v858
      %v941 = vunpack.c.l.b16 %v859
      %v942 = vunpack.c.h.b16 %v859
      %v943 = vunpack.c.l.b16 %v860
      %v944 = vunpack.c.h.b16 %v860
      %v945 = vunpack.c.l.b16 %v861
      %v946 = vunpack.c.h.b16 %v861
      %v947 = vunpack.c.l.b16 %v862
      %v948 = vunpack.c.h.b16 %v862
      %v949 = vunpack.c.l.b16 %v863
      %v950 = vunpack.c.h.b16 %v863
      %v951 = vunpack.c.l.b16 %v864
      %v952 = vunpack.c.h.b16 %v864
      %v953 = vunpack.c.l.b16 %v865
      %v954 = vunpack.c.h.b16 %v865
      %v955 = vunpack.c.l.b16 %v866
      %v956 = vunpack.c.h.b16 %v866
      %v957 = vunpack.c.l.b16 %v867
      %v958 = vunpack.c.h.b16 %v867
      %v959 = vunpack.c.l.b16 %v868
      %v960 = vunpack.c.h.b16 %v868
      %v961 = vunpack.c.l.b16 %v869
      %v962 = vunpack.c.h.b16 %v869
      %v963 = vunpack.c.l.b16 %v870
      %v964 = vunpack.c.h.b16 %v870
      %v965 = vunpack.c.l.b16 %v871
      %v966 = vunpack.c.h.b16 %v871
      %v967 = vunpack.c.l.b16 %v872
      %v968 = vunpack.c.h.b16 %v872
      %v969 = vpack.c.b16 %v909, %v905
      %v970 = vpack.c.b16 %v910, %v906
      %v971 = vpack.c.b16 %v911, %v907
      %v972 = vpack.c.b16 %v912, %v908
      %v973 = vpack.c.b16 %v917, %v913
      %v974 = vpack.c.b16 %v918, %v914
      %v975 = vpack.c.b16 %v919, %v915
      %v976 = vpack.c.b16 %v920, %v916
      %v977 = vpack.c.b16 %v925, %v921
      %v978 = vpack.c.b16 %v926, %v922
      %v979 = vpack.c.b16 %v927, %v923
      %v980 = vpack.c.b16 %v928, %v924
      %v981 = vpack.c.b16 %v933, %v929
      %v982 = vpack.c.b16 %v934, %v930
      %v983 = vpack.c.b16 %v935, %v931
      %v984 = vpack.c.b16 %v936, %v932
      %v985 = vpack.c.b16 %v941, %v937
      %v986 = vpack.c.b16 %v942, %v938
      %v987 = vpack.c.b16 %v943, %v939
      %v988 = vpack.c.b16 %v944, %v940
      %v989 = vpack.c.b16 %v949, %v945
      %v990 = vpack.c.b16 %v950, %v946
      %v991 = vpack.c.b16 %v951, %v947
      %v992 = vpack.c.b16 %v952, %v948
      %v993 = vpack.c.b16 %v957, %v953
      %v994 = vpack.c.b16 %v958, %v954
      %v995 = vpack.c.b16 %v959, %v955
      %v996 = vpack.c.b16 %v960, %v956
      %v997 = vpack.c.b16 %v965, %v961
      %v998 = vpack.c.b16 %v966, %v962
      %v999 = vpack.c.b16 %v967, %v963
      %v1000 = vpack.c.b16 %v968, %v964
      %1033 = vmatprep.subr.bf16.mxu0 %v998
      %1034 = vmatpush1.bf16.msra.mxu0 %v997
      %1035 = vmatprep.subr.bf16.mxu0 %v994
      %1036 = vmatpush1.bf16.msra.mxu0 %v993
      %1037 = vmatprep.subr.bf16.mxu0 %v990
      %1038 = vmatpush1.bf16.msra.mxu0 %v989
      %1039 = vmatprep.subr.bf16.mxu0 %v986
      %1040 = vmatpush1.bf16.msra.mxu0 %v985
      %1041 = vmatprep.subr.bf16.mxu0 %v982
      %1042 = vmatpush1.bf16.msra.mxu0 %v981
      %1043 = vmatprep.subr.bf16.mxu0 %v978
      %1044 = vmatpush1.bf16.msra.mxu0 %v977
      %1045 = vmatprep.subr.bf16.mxu0 %v974
      %1046 = vmatpush1.bf16.msra.mxu0 %v973
      %1047 = vmatprep.subr.bf16.mxu0 %v970
      %1048 = vmatpush1.bf16.msra.mxu0 %v969
      %1049 = vmatprep.subr.bf16.mxu0 0
      %1050 = vmatpush2.bf16.msra.mxu0 0
      %1051 = vmatprep.subr.bf16.mxu0 0
      %1052 = vmatpush2.bf16.msra.mxu0 0
      %1053 = vmatprep.subr.bf16.mxu0 0
      %1054 = vmatpush2.bf16.msra.mxu0 0
      %1055 = vmatprep.subr.bf16.mxu0 0
      %1056 = vmatpush2.bf16.msra.mxu0 0
      %1057 = vmatprep.subr.bf16.mxu0 0
      %1058 = vmatpush2.bf16.msra.mxu0 0
      %1059 = vmatprep.subr.bf16.mxu0 0
      %1060 = vmatpush2.bf16.msra.mxu0 0
      %1061 = vmatprep.subr.bf16.mxu0 0
      %1062 = vmatpush2.bf16.msra.mxu0 0
      %1063 = vmatprep.subr.bf16.mxu0 0
      %1064 = vmatpush2.bf16.msra.mxu0 0
      %1065 = vmatprep.mubr.bf16.mxu0 0
      %1066 = vmatmul.mubr.bf16.gmra.mxu0 %v840
      %v1067 = vpop.f32.mrf.mxu0
      %v1068 = vadd.f32 0.0, %v1067
      %v1069 = vpop.f32.mrf.mxu0
      %v1070 = vadd.f32 0.0, %v1069
      %v1071 = vpop.f32.mrf.mxu0
      %v1072 = vadd.f32 0.0, %v1071
      %v1073 = vpop.f32.mrf.mxu0
      %v1074 = vadd.f32 0.0, %v1073
      %1075 = vdwg.mxu0
      %1076 = vmatprep.subr.bf16.mxu0 %v1000
      %1077 = vmatpush1.bf16.msra.mxu0 %v999
      %1078 = vmatprep.subr.bf16.mxu0 %v996
      %1079 = vmatpush1.bf16.msra.mxu0 %v995
      %1080 = vmatprep.subr.bf16.mxu0 %v992
      %1081 = vmatpush1.bf16.msra.mxu0 %v991
      %1082 = vmatprep.subr.bf16.mxu0 %v988
      %1083 = vmatpush1.bf16.msra.mxu0 %v987
      %1084 = vmatprep.subr.bf16.mxu0 %v984
      %1085 = vmatpush1.bf16.msra.mxu0 %v983
      %1086 = vmatprep.subr.bf16.mxu0 %v980
      %1087 = vmatpush1.bf16.msra.mxu0 %v979
      %1088 = vmatprep.subr.bf16.mxu0 %v976
      %1089 = vmatpush1.bf16.msra.mxu0 %v975
      %1090 = vmatprep.subr.bf16.mxu0 %v972
      %1091 = vmatpush1.bf16.msra.mxu0 %v971
      %1092 = vmatprep.subr.bf16.mxu0 0
      %1093 = vmatpush2.bf16.msra.mxu0 0
      %1094 = vmatprep.subr.bf16.mxu0 0
      %1095 = vmatpush2.bf16.msra.mxu0 0
      %1096 = vmatprep.subr.bf16.mxu0 0
      %1097 = vmatpush2.bf16.msra.mxu0 0
      %1098 = vmatprep.subr.bf16.mxu0 0
      %1099 = vmatpush2.bf16.msra.mxu0 0
      %1100 = vmatprep.subr.bf16.mxu0 0
      %1101 = vmatpush2.bf16.msra.mxu0 0
      %1102 = vmatprep.subr.bf16.mxu0 0
      %1103 = vmatpush2.bf16.msra.mxu0 0
      %1104 = vmatprep.subr.bf16.mxu0 0
      %1105 = vmatpush2.bf16.msra.mxu0 0
      %1106 = vmatprep.subr.bf16.mxu0 0
      %1107 = vmatpush2.bf16.msra.mxu0 0
      %1108 = vmatprep.mubr.bf16.mxu0 0
      %1109 = vmatmul.mubr.bf16.gmra.mxu0 %v840
      %v1110 = vpop.f32.mrf.mxu0
      %v1111 = vadd.f32 0.0, %v1110
      %v1112 = vpop.f32.mrf.mxu0
      %v1113 = vadd.f32 0.0, %v1112
      %v1114 = vpop.f32.mrf.mxu0
      %v1115 = vadd.f32 0.0, %v1114
      %v1116 = vpop.f32.mrf.mxu0
      %v1117 = vadd.f32 0.0, %v1116
      %1118 = vdwg.mxu0
      %v1119 = vpack.c.bf16 %v1072, %v1068
      %v1120 = vpack.c.bf16 %v1074, %v1070
      %v1121 = vpack.c.bf16 %v1115, %v1111
      %v1122 = vpack.c.bf16 %v1117, %v1113
      %v1123 = vld [vmem:[%s740] sm:$0xff]
      %v1124 = vld [vmem:[%s740 + $0x8] sm:$0xff]
      %v1125 = vld [vmem:[%s740 + $0x10] sm:$0xff]
      %v1126 = vld [vmem:[%s740 + $0x18] sm:$0xff]
      %v1127 = vld [vmem:[%s740 + $0x20] sm:$0xff]
      %v1128 = vld [vmem:[%s740 + $0x28] sm:$0xff]
      %v1129 = vld [vmem:[%s740 + $0x30] sm:$0xff]
      %v1130 = vld [vmem:[%s740 + $0x38] sm:$0xff]
      %v1131 = vld [vmem:[%s740 + $0x40] sm:$0xff]
      %v1132 = vld [vmem:[%s740 + $0x48] sm:$0xff]
      %v1133 = vld [vmem:[%s740 + $0x50] sm:$0xff]
      %v1134 = vld [vmem:[%s740 + $0x58] sm:$0xff]
      %v1135 = vld [vmem:[%s740 + $0x60] sm:$0xff]
      %v1136 = vld [vmem:[%s740 + $0x68] sm:$0xff]
      %v1137 = vld [vmem:[%s740 + $0x70] sm:$0xff]
      %v1138 = vld [vmem:[%s740 + $0x78] sm:$0xff]
      %v1139 = vld [vmem:[%s740 + $0x80] sm:$0xff]
      %v1140 = vld [vmem:[%s740 + $0x88] sm:$0xff]
      %v1141 = vld [vmem:[%s740 + $0x90] sm:$0xff]
      %v1142 = vld [vmem:[%s740 + $0x98] sm:$0xff]
      %v1143 = vld [vmem:[%s740 + $0xa0] sm:$0xff]
      %v1144 = vld [vmem:[%s740 + $0xa8] sm:$0xff]
      %v1145 = vld [vmem:[%s740 + $0xb0] sm:$0xff]
      %v1146 = vld [vmem:[%s740 + $0xb8] sm:$0xff]
      %v1147 = vld [vmem:[%s740 + $0xc0] sm:$0xff]
      %v1148 = vld [vmem:[%s740 + $0xc8] sm:$0xff]
      %v1149 = vld [vmem:[%s740 + $0xd0] sm:$0xff]
      %v1150 = vld [vmem:[%s740 + $0xd8] sm:$0xff]
      %v1151 = vld [vmem:[%s740 + $0xe0] sm:$0xff]
      %v1152 = vld [vmem:[%s740 + $0xe8] sm:$0xff]
      %v1153 = vld [vmem:[%s740 + $0xf0] sm:$0xff]
      %v1154 = vld [vmem:[%s740 + $0xf8] sm:$0xff]
      %v1187 = vunpack.c.l.b16 %v1123
      %v1188 = vunpack.c.h.b16 %v1123
      %v1189 = vunpack.c.l.b16 %v1124
      %v1190 = vunpack.c.h.b16 %v1124
      %v1191 = vunpack.c.l.b16 %v1125
      %v1192 = vunpack.c.h.b16 %v1125
      %v1193 = vunpack.c.l.b16 %v1126
      %v1194 = vunpack.c.h.b16 %v1126
      %v1195 = vunpack.c.l.b16 %v1127
      %v1196 = vunpack.c.h.b16 %v1127
      %v1197 = vunpack.c.l.b16 %v1128
      %v1198 = vunpack.c.h.b16 %v1128
      %v1199 = vunpack.c.l.b16 %v1129
      %v1200 = vunpack.c.h.b16 %v1129
      %v1201 = vunpack.c.l.b16 %v1130
      %v1202 = vunpack.c.h.b16 %v1130
      %v1203 = vunpack.c.l.b16 %v1131
      %v1204 = vunpack.c.h.b16 %v1131
      %v1205 = vunpack.c.l.b16 %v1132
      %v1206 = vunpack.c.h.b16 %v1132
      %v1207 = vunpack.c.l.b16 %v1133
      %v1208 = vunpack.c.h.b16 %v1133
      %v1209 = vunpack.c.l.b16 %v1134
      %v1210 = vunpack.c.h.b16 %v1134
      %v1211 = vunpack.c.l.b16 %v1135
      %v1212 = vunpack.c.h.b16 %v1135
      %v1213 = vunpack.c.l.b16 %v1136
      %v1214 = vunpack.c.h.b16 %v1136
      %v1215 = vunpack.c.l.b16 %v1137
      %v1216 = vunpack.c.h.b16 %v1137
      %v1217 = vunpack.c.l.b16 %v1138
      %v1218 = vunpack.c.h.b16 %v1138
      %v1219 = vunpack.c.l.b16 %v1139
      %v1220 = vunpack.c.h.b16 %v1139
      %v1221 = vunpack.c.l.b16 %v1140
      %v1222 = vunpack.c.h.b16 %v1140
      %v1223 = vunpack.c.l.b16 %v1141
      %v1224 = vunpack.c.h.b16 %v1141
      %v1225 = vunpack.c.l.b16 %v1142
      %v1226 = vunpack.c.h.b16 %v1142
      %v1227 = vunpack.c.l.b16 %v1143
      %v1228 = vunpack.c.h.b16 %v1143
      %v1229 = vunpack.c.l.b16 %v1144
      %v1230 = vunpack.c.h.b16 %v1144
      %v1231 = vunpack.c.l.b16 %v1145
      %v1232 = vunpack.c.h.b16 %v1145
      %v1233 = vunpack.c.l.b16 %v1146
      %v1234 = vunpack.c.h.b16 %v1146
      %v1235 = vunpack.c.l.b16 %v1147
      %v1236 = vunpack.c.h.b16 %v1147
      %v1237 = vunpack.c.l.b16 %v1148
      %v1238 = vunpack.c.h.b16 %v1148
      %v1239 = vunpack.c.l.b16 %v1149
      %v1240 = vunpack.c.h.b16 %v1149
      %v1241 = vunpack.c.l.b16 %v1150
      %v1242 = vunpack.c.h.b16 %v1150
      %v1243 = vunpack.c.l.b16 %v1151
      %v1244 = vunpack.c.h.b16 %v1151
      %v1245 = vunpack.c.l.b16 %v1152
      %v1246 = vunpack.c.h.b16 %v1152
      %v1247 = vunpack.c.l.b16 %v1153
      %v1248 = vunpack.c.h.b16 %v1153
      %v1249 = vunpack.c.l.b16 %v1154
      %v1250 = vunpack.c.h.b16 %v1154
      %v1251 = vpack.c.b16 %v1191, %v1187
      %v1252 = vpack.c.b16 %v1192, %v1188
      %v1253 = vpack.c.b16 %v1193, %v1189
      %v1254 = vpack.c.b16 %v1194, %v1190
      %v1255 = vpack.c.b16 %v1199, %v1195
      %v1256 = vpack.c.b16 %v1200, %v1196
      %v1257 = vpack.c.b16 %v1201, %v1197
      %v1258 = vpack.c.b16 %v1202, %v1198
      %v1259 = vpack.c.b16 %v1207, %v1203
      %v1260 = vpack.c.b16 %v1208, %v1204
      %v1261 = vpack.c.b16 %v1209, %v1205
      %v1262 = vpack.c.b16 %v1210, %v1206
      %v1263 = vpack.c.b16 %v1215, %v1211
      %v1264 = vpack.c.b16 %v1216, %v1212
      %v1265 = vpack.c.b16 %v1217, %v1213
      %v1266 = vpack.c.b16 %v1218, %v1214
      %v1267 = vpack.c.b16 %v1223, %v1219
      %v1268 = vpack.c.b16 %v1224, %v1220
      %v1269 = vpack.c.b16 %v1225, %v1221
      %v1270 = vpack.c.b16 %v1226, %v1222
      %v1271 = vpack.c.b16 %v1231, %v1227
      %v1272 = vpack.c.b16 %v1232, %v1228
      %v1273 = vpack.c.b16 %v1233, %v1229
      %v1274 = vpack.c.b16 %v1234, %v1230
      %v1275 = vpack.c.b16 %v1239, %v1235
      %v1276 = vpack.c.b16 %v1240, %v1236
      %v1277 = vpack.c.b16 %v1241, %v1237
      %v1278 = vpack.c.b16 %v1242, %v1238
      %v1279 = vpack.c.b16 %v1247, %v1243
      %v1280 = vpack.c.b16 %v1248, %v1244
      %v1281 = vpack.c.b16 %v1249, %v1245
      %v1282 = vpack.c.b16 %v1250, %v1246
      %1315 = vmatprep.subr.bf16.mxu0 %v1280
      %1316 = vmatpush1.bf16.msra.mxu0 %v1279
      %1317 = vmatprep.subr.bf16.mxu0 %v1276
      %1318 = vmatpush1.bf16.msra.mxu0 %v1275
      %1319 = vmatprep.subr.bf16.mxu0 %v1272
      %1320 = vmatpush1.bf16.msra.mxu0 %v1271
      %1321 = vmatprep.subr.bf16.mxu0 %v1268
      %1322 = vmatpush1.bf16.msra.mxu0 %v1267
      %1323 = vmatprep.subr.bf16.mxu0 %v1264
      %1324 = vmatpush1.bf16.msra.mxu0 %v1263
      %1325 = vmatprep.subr.bf16.mxu0 %v1260
      %1326 = vmatpush1.bf16.msra.mxu0 %v1259
      %1327 = vmatprep.subr.bf16.mxu0 %v1256
      %1328 = vmatpush1.bf16.msra.mxu0 %v1255
      %1329 = vmatprep.subr.bf16.mxu0 %v1252
      %1330 = vmatpush1.bf16.msra.mxu0 %v1251
      %1331 = vmatprep.subr.bf16.mxu0 0
      %1332 = vmatpush2.bf16.msra.mxu0 0
      %1333 = vmatprep.subr.bf16.mxu0 0
      %1334 = vmatpush2.bf16.msra.mxu0 0
      %1335 = vmatprep.subr.bf16.mxu0 0
      %1336 = vmatpush2.bf16.msra.mxu0 0
      %1337 = vmatprep.subr.bf16.mxu0 0
      %1338 = vmatpush2.bf16.msra.mxu0 0
      %1339 = vmatprep.subr.bf16.mxu0 0
      %1340 = vmatpush2.bf16.msra.mxu0 0
      %1341 = vmatprep.subr.bf16.mxu0 0
      %1342 = vmatpush2.bf16.msra.mxu0 0
      %1343 = vmatprep.subr.bf16.mxu0 0
      %1344 = vmatpush2.bf16.msra.mxu0 0
      %1345 = vmatprep.subr.bf16.mxu0 0
      %1346 = vmatpush2.bf16.msra.mxu0 0
      %1347 = vmatprep.mubr.bf16.mxu0 0
      %1348 = vmatmul.mubr.bf16.gmra.mxu0 %v840
      %v1349 = vpop.f32.mrf.mxu0
      %v1350 = vadd.f32 0.0, %v1349
      %v1351 = vpop.f32.mrf.mxu0
      %v1352 = vadd.f32 0.0, %v1351
      %v1353 = vpop.f32.mrf.mxu0
      %v1354 = vadd.f32 0.0, %v1353
      %v1355 = vpop.f32.mrf.mxu0
      %v1356 = vadd.f32 0.0, %v1355
      %1357 = vdwg.mxu0
      %1358 = vmatprep.subr.bf16.mxu0 %v1282
      %1359 = vmatpush1.bf16.msra.mxu0 %v1281
      %1360 = vmatprep.subr.bf16.mxu0 %v1278
      %1361 = vmatpush1.bf16.msra.mxu0 %v1277
      %1362 = vmatprep.subr.bf16.mxu0 %v1274
      %1363 = vmatpush1.bf16.msra.mxu0 %v1273
      %1364 = vmatprep.subr.bf16.mxu0 %v1270
      %1365 = vmatpush1.bf16.msra.mxu0 %v1269
      %1366 = vmatprep.subr.bf16.mxu0 %v1266
      %1367 = vmatpush1.bf16.msra.mxu0 %v1265
      %1368 = vmatprep.subr.bf16.mxu0 %v1262
      %1369 = vmatpush1.bf16.msra.mxu0 %v1261
      %1370 = vmatprep.subr.bf16.mxu0 %v1258
      %1371 = vmatpush1.bf16.msra.mxu0 %v1257
      %1372 = vmatprep.subr.bf16.mxu0 %v1254
      %1373 = vmatpush1.bf16.msra.mxu0 %v1253
      %1374 = vmatprep.subr.bf16.mxu0 0
      %1375 = vmatpush2.bf16.msra.mxu0 0
      %1376 = vmatprep.subr.bf16.mxu0 0
      %1377 = vmatpush2.bf16.msra.mxu0 0
      %1378 = vmatprep.subr.bf16.mxu0 0
      %1379 = vmatpush2.bf16.msra.mxu0 0
      %1380 = vmatprep.subr.bf16.mxu0 0
      %1381 = vmatpush2.bf16.msra.mxu0 0
      %1382 = vmatprep.subr.bf16.mxu0 0
      %1383 = vmatpush2.bf16.msra.mxu0 0
      %1384 = vmatprep.subr.bf16.mxu0 0
      %1385 = vmatpush2.bf16.msra.mxu0 0
      %1386 = vmatprep.subr.bf16.mxu0 0
      %1387 = vmatpush2.bf16.msra.mxu0 0
      %1388 = vmatprep.subr.bf16.mxu0 0
      %1389 = vmatpush2.bf16.msra.mxu0 0
      %1390 = vmatprep.mubr.bf16.mxu0 0
      %1391 = vmatmul.mubr.bf16.gmra.mxu0 %v840
      %v1392 = vpop.f32.mrf.mxu0
      %v1393 = vadd.f32 0.0, %v1392
      %v1394 = vpop.f32.mrf.mxu0
      %v1395 = vadd.f32 0.0, %v1394
      %v1396 = vpop.f32.mrf.mxu0
      %v1397 = vadd.f32 0.0, %v1396
      %v1398 = vpop.f32.mrf.mxu0
      %v1399 = vadd.f32 0.0, %v1398
      %1400 = vdwg.mxu0
      %v1401 = vpack.c.bf16 %v1354, %v1350
      %v1402 = vpack.c.bf16 %v1356, %v1352
      %v1403 = vpack.c.bf16 %v1397, %v1393
      %v1404 = vpack.c.bf16 %v1399, %v1395
      %v1405 = vld [vmem:[%s745] sm:$0xff]
      %v1406 = vld [vmem:[%s745 + $0x8] sm:$0xff]
      %v1407 = vld [vmem:[%s745 + $0x10] sm:$0xff]
      %v1408 = vld [vmem:[%s745 + $0x18] sm:$0xff]
      %v1409 = vld [vmem:[%s745 + $0x20] sm:$0xff]
      %v1410 = vld [vmem:[%s745 + $0x28] sm:$0xff]
      %v1411 = vld [vmem:[%s745 + $0x30] sm:$0xff]
      %v1412 = vld [vmem:[%s745 + $0x38] sm:$0xff]
      %v1413 = vld [vmem:[%s745 + $0x40] sm:$0xff]
      %v1414 = vld [vmem:[%s745 + $0x48] sm:$0xff]
      %v1415 = vld [vmem:[%s745 + $0x50] sm:$0xff]
      %v1416 = vld [vmem:[%s745 + $0x58] sm:$0xff]
      %v1417 = vld [vmem:[%s745 + $0x60] sm:$0xff]
      %v1418 = vld [vmem:[%s745 + $0x68] sm:$0xff]
      %v1419 = vld [vmem:[%s745 + $0x70] sm:$0xff]
      %v1420 = vld [vmem:[%s745 + $0x78] sm:$0xff]
      %v1421 = vld [vmem:[%s745 + $0x80] sm:$0xff]
      %v1422 = vld [vmem:[%s745 + $0x88] sm:$0xff]
      %v1423 = vld [vmem:[%s745 + $0x90] sm:$0xff]
      %v1424 = vld [vmem:[%s745 + $0x98] sm:$0xff]
      %v1425 = vld [vmem:[%s745 + $0xa0] sm:$0xff]
      %v1426 = vld [vmem:[%s745 + $0xa8] sm:$0xff]
      %v1427 = vld [vmem:[%s745 + $0xb0] sm:$0xff]
      %v1428 = vld [vmem:[%s745 + $0xb8] sm:$0xff]
      %v1429 = vld [vmem:[%s745 + $0xc0] sm:$0xff]
      %v1430 = vld [vmem:[%s745 + $0xc8] sm:$0xff]
      %v1431 = vld [vmem:[%s745 + $0xd0] sm:$0xff]
      %v1432 = vld [vmem:[%s745 + $0xd8] sm:$0xff]
      %v1433 = vld [vmem:[%s745 + $0xe0] sm:$0xff]
      %v1434 = vld [vmem:[%s745 + $0xe8] sm:$0xff]
      %v1435 = vld [vmem:[%s745 + $0xf0] sm:$0xff]
      %v1436 = vld [vmem:[%s745 + $0xf8] sm:$0xff]
      %v1469 = vunpack.c.l.b16 %v1405
      %v1470 = vunpack.c.h.b16 %v1405
      %v1471 = vunpack.c.l.b16 %v1406
      %v1472 = vunpack.c.h.b16 %v1406
      %v1473 = vunpack.c.l.b16 %v1407
      %v1474 = vunpack.c.h.b16 %v1407
      %v1475 = vunpack.c.l.b16 %v1408
      %v1476 = vunpack.c.h.b16 %v1408
      %v1477 = vunpack.c.l.b16 %v1409
      %v1478 = vunpack.c.h.b16 %v1409
      %v1479 = vunpack.c.l.b16 %v1410
      %v1480 = vunpack.c.h.b16 %v1410
      %v1481 = vunpack.c.l.b16 %v1411
      %v1482 = vunpack.c.h.b16 %v1411
      %v1483 = vunpack.c.l.b16 %v1412
      %v1484 = vunpack.c.h.b16 %v1412
      %v1485 = vunpack.c.l.b16 %v1413
      %v1486 = vunpack.c.h.b16 %v1413
      %v1487 = vunpack.c.l.b16 %v1414
      %v1488 = vunpack.c.h.b16 %v1414
      %v1489 = vunpack.c.l.b16 %v1415
      %v1490 = vunpack.c.h.b16 %v1415
      %v1491 = vunpack.c.l.b16 %v1416
      %v1492 = vunpack.c.h.b16 %v1416
      %v1493 = vunpack.c.l.b16 %v1417
      %v1494 = vunpack.c.h.b16 %v1417
      %v1495 = vunpack.c.l.b16 %v1418
      %v1496 = vunpack.c.h.b16 %v1418
      %v1497 = vunpack.c.l.b16 %v1419
      %v1498 = vunpack.c.h.b16 %v1419
      %v1499 = vunpack.c.l.b16 %v1420
      %v1500 = vunpack.c.h.b16 %v1420
      %v1501 = vunpack.c.l.b16 %v1421
      %v1502 = vunpack.c.h.b16 %v1421
      %v1503 = vunpack.c.l.b16 %v1422
      %v1504 = vunpack.c.h.b16 %v1422
      %v1505 = vunpack.c.l.b16 %v1423
      %v1506 = vunpack.c.h.b16 %v1423
      %v1507 = vunpack.c.l.b16 %v1424
      %v1508 = vunpack.c.h.b16 %v1424
      %v1509 = vunpack.c.l.b16 %v1425
      %v1510 = vunpack.c.h.b16 %v1425
      %v1511 = vunpack.c.l.b16 %v1426
      %v1512 = vunpack.c.h.b16 %v1426
      %v1513 = vunpack.c.l.b16 %v1427
      %v1514 = vunpack.c.h.b16 %v1427
      %v1515 = vunpack.c.l.b16 %v1428
      %v1516 = vunpack.c.h.b16 %v1428
      %v1517 = vunpack.c.l.b16 %v1429
      %v1518 = vunpack.c.h.b16 %v1429
      %v1519 = vunpack.c.l.b16 %v1430
      %v1520 = vunpack.c.h.b16 %v1430
      %v1521 = vunpack.c.l.b16 %v1431
      %v1522 = vunpack.c.h.b16 %v1431
      %v1523 = vunpack.c.l.b16 %v1432
      %v1524 = vunpack.c.h.b16 %v1432
      %v1525 = vunpack.c.l.b16 %v1433
      %v1526 = vunpack.c.h.b16 %v1433
      %v1527 = vunpack.c.l.b16 %v1434
      %v1528 = vunpack.c.h.b16 %v1434
      %v1529 = vunpack.c.l.b16 %v1435
      %v1530 = vunpack.c.h.b16 %v1435
      %v1531 = vunpack.c.l.b16 %v1436
      %v1532 = vunpack.c.h.b16 %v1436
      %v1533 = vpack.c.b16 %v1473, %v1469
      %v1534 = vpack.c.b16 %v1474, %v1470
      %v1535 = vpack.c.b16 %v1475, %v1471
      %v1536 = vpack.c.b16 %v1476, %v1472
      %v1537 = vpack.c.b16 %v1481, %v1477
      %v1538 = vpack.c.b16 %v1482, %v1478
      %v1539 = vpack.c.b16 %v1483, %v1479
      %v1540 = vpack.c.b16 %v1484, %v1480
      %v1541 = vpack.c.b16 %v1489, %v1485
      %v1542 = vpack.c.b16 %v1490, %v1486
      %v1543 = vpack.c.b16 %v1491, %v1487
      %v1544 = vpack.c.b16 %v1492, %v1488
      %v1545 = vpack.c.b16 %v1497, %v1493
      %v1546 = vpack.c.b16 %v1498, %v1494
      %v1547 = vpack.c.b16 %v1499, %v1495
      %v1548 = vpack.c.b16 %v1500, %v1496
      %v1549 = vpack.c.b16 %v1505, %v1501
      %v1550 = vpack.c.b16 %v1506, %v1502
      %v1551 = vpack.c.b16 %v1507, %v1503
      %v1552 = vpack.c.b16 %v1508, %v1504
      %v1553 = vpack.c.b16 %v1513, %v1509
      %v1554 = vpack.c.b16 %v1514, %v1510
      %v1555 = vpack.c.b16 %v1515, %v1511
      %v1556 = vpack.c.b16 %v1516, %v1512
      %v1557 = vpack.c.b16 %v1521, %v1517
      %v1558 = vpack.c.b16 %v1522, %v1518
      %v1559 = vpack.c.b16 %v1523, %v1519
      %v1560 = vpack.c.b16 %v1524, %v1520
      %v1561 = vpack.c.b16 %v1529, %v1525
      %v1562 = vpack.c.b16 %v1530, %v1526
      %v1563 = vpack.c.b16 %v1531, %v1527
      %v1564 = vpack.c.b16 %v1532, %v1528
      %1597 = vmatprep.subr.bf16.mxu0 %v1562
      %1598 = vmatpush1.bf16.msra.mxu0 %v1561
      %1599 = vmatprep.subr.bf16.mxu0 %v1558
      %1600 = vmatpush1.bf16.msra.mxu0 %v1557
      %1601 = vmatprep.subr.bf16.mxu0 %v1554
      %1602 = vmatpush1.bf16.msra.mxu0 %v1553
      %1603 = vmatprep.subr.bf16.mxu0 %v1550
      %1604 = vmatpush1.bf16.msra.mxu0 %v1549
      %1605 = vmatprep.subr.bf16.mxu0 %v1546
      %1606 = vmatpush1.bf16.msra.mxu0 %v1545
      %1607 = vmatprep.subr.bf16.mxu0 %v1542
      %1608 = vmatpush1.bf16.msra.mxu0 %v1541
      %1609 = vmatprep.subr.bf16.mxu0 %v1538
      %1610 = vmatpush1.bf16.msra.mxu0 %v1537
      %1611 = vmatprep.subr.bf16.mxu0 %v1534
      %1612 = vmatpush1.bf16.msra.mxu0 %v1533
      %1613 = vmatprep.subr.bf16.mxu0 0
      %1614 = vmatpush2.bf16.msra.mxu0 0
      %1615 = vmatprep.subr.bf16.mxu0 0
      %1616 = vmatpush2.bf16.msra.mxu0 0
      %1617 = vmatprep.subr.bf16.mxu0 0
      %1618 = vmatpush2.bf16.msra.mxu0 0
      %1619 = vmatprep.subr.bf16.mxu0 0
      %1620 = vmatpush2.bf16.msra.mxu0 0
      %1621 = vmatprep.subr.bf16.mxu0 0
      %1622 = vmatpush2.bf16.msra.mxu0 0
      %1623 = vmatprep.subr.bf16.mxu0 0
      %1624 = vmatpush2.bf16.msra.mxu0 0
      %1625 = vmatprep.subr.bf16.mxu0 0
      %1626 = vmatpush2.bf16.msra.mxu0 0
      %1627 = vmatprep.subr.bf16.mxu0 0
      %1628 = vmatpush2.bf16.msra.mxu0 0
      %1629 = vmatprep.mubr.bf16.mxu0 0
      %1630 = vmatmul.mubr.bf16.gmra.mxu0 %v840
      %v1631 = vpop.f32.mrf.mxu0
      %v1632 = vadd.f32 0.0, %v1631
      %v1633 = vpop.f32.mrf.mxu0
      %v1634 = vadd.f32 0.0, %v1633
      %v1635 = vpop.f32.mrf.mxu0
      %v1636 = vadd.f32 0.0, %v1635
      %v1637 = vpop.f32.mrf.mxu0
      %v1638 = vadd.f32 0.0, %v1637
      %1639 = vdwg.mxu0
      %1640 = vmatprep.subr.bf16.mxu0 %v1564
      %1641 = vmatpush1.bf16.msra.mxu0 %v1563
      %1642 = vmatprep.subr.bf16.mxu0 %v1560
      %1643 = vmatpush1.bf16.msra.mxu0 %v1559
      %1644 = vmatprep.subr.bf16.mxu0 %v1556
      %1645 = vmatpush1.bf16.msra.mxu0 %v1555
      %1646 = vmatprep.subr.bf16.mxu0 %v1552
      %1647 = vmatpush1.bf16.msra.mxu0 %v1551
      %1648 = vmatprep.subr.bf16.mxu0 %v1548
      %1649 = vmatpush1.bf16.msra.mxu0 %v1547
      %1650 = vmatprep.subr.bf16.mxu0 %v1544
      %1651 = vmatpush1.bf16.msra.mxu0 %v1543
      %1652 = vmatprep.subr.bf16.mxu0 %v1540
      %1653 = vmatpush1.bf16.msra.mxu0 %v1539
      %1654 = vmatprep.subr.bf16.mxu0 %v1536
      %1655 = vmatpush1.bf16.msra.mxu0 %v1535
      %1656 = vmatprep.subr.bf16.mxu0 0
      %1657 = vmatpush2.bf16.msra.mxu0 0
      %1658 = vmatprep.subr.bf16.mxu0 0
      %1659 = vmatpush2.bf16.msra.mxu0 0
      %1660 = vmatprep.subr.bf16.mxu0 0
      %1661 = vmatpush2.bf16.msra.mxu0 0
      %1662 = vmatprep.subr.bf16.mxu0 0
      %1663 = vmatpush2.bf16.msra.mxu0 0
      %1664 = vmatprep.subr.bf16.mxu0 0
      %1665 = vmatpush2.bf16.msra.mxu0 0
      %1666 = vmatprep.subr.bf16.mxu0 0
      %1667 = vmatpush2.bf16.msra.mxu0 0
      %1668 = vmatprep.subr.bf16.mxu0 0
      %1669 = vmatpush2.bf16.msra.mxu0 0
      %1670 = vmatprep.subr.bf16.mxu0 0
      %1671 = vmatpush2.bf16.msra.mxu0 0
      %1672 = vmatprep.mubr.bf16.mxu0 0
      %1673 = vmatmul.mubr.bf16.gmra.mxu0 %v840
      %v1674 = vpop.f32.mrf.mxu0
      %v1675 = vadd.f32 0.0, %v1674
      %v1676 = vpop.f32.mrf.mxu0
      %v1677 = vadd.f32 0.0, %v1676
      %v1678 = vpop.f32.mrf.mxu0
      %v1679 = vadd.f32 0.0, %v1678
      %v1680 = vpop.f32.mrf.mxu0
      %v1681 = vadd.f32 0.0, %v1680
      %1682 = vdwg.mxu0
      %v1683 = vpack.c.bf16 %v1636, %v1632
      %v1684 = vpack.c.bf16 %v1638, %v1634
      %v1685 = vpack.c.bf16 %v1679, %v1675
      %v1686 = vpack.c.bf16 %v1681, %v1677
      %v1687 = vld [vmem:[%s1] sm:$0xff]
      %v1688 = vld [vmem:[%s1 + $0x8] sm:$0xff]
      %1689 = vmatprep.subr.bf16.mxu0 0
      %1690 = vmatpush1.bf16.xpose.msra.mxu0 0
      %1691 = vmatprep.subr.bf16.mxu0 0
      %1692 = vmatpush1.bf16.xpose.msra.mxu0 0
      %1693 = vmatprep.subr.bf16.mxu0 0
      %1694 = vmatpush1.bf16.xpose.msra.mxu0 0
      %1695 = vmatprep.subr.bf16.mxu0 0
      %1696 = vmatpush1.bf16.xpose.msra.mxu0 0
      %1697 = vmatprep.subr.bf16.mxu0 0
      %1698 = vmatpush1.bf16.xpose.msra.mxu0 0
      %1699 = vmatprep.subr.bf16.mxu0 0
      %1700 = vmatpush1.bf16.xpose.msra.mxu0 0
      %1701 = vmatprep.subr.bf16.mxu0 0
      %1702 = vmatpush1.bf16.xpose.msra.mxu0 0
      %1703 = vmatprep.subr.bf16.mxu0 0
      %1704 = vmatpush1.bf16.xpose.msra.mxu0 %v1119
      %1705 = vmatprep.subr.bf16.mxu0 0
      %1706 = vmatpush2.bf16.xpose.msra.mxu0 0
      %1707 = vmatprep.subr.bf16.mxu0 0
      %1708 = vmatpush2.bf16.xpose.msra.mxu0 0
      %1709 = vmatprep.subr.bf16.mxu0 0
      %1710 = vmatpush2.bf16.xpose.msra.mxu0 0
      %1711 = vmatprep.subr.bf16.mxu0 0
      %1712 = vmatpush2.bf16.xpose.msra.mxu0 0
      %1713 = vmatprep.subr.bf16.mxu0 0
      %1714 = vmatpush2.bf16.xpose.msra.mxu0 0
      %1715 = vmatprep.subr.bf16.mxu0 0
      %1716 = vmatpush2.bf16.xpose.msra.mxu0 0
      %1717 = vmatprep.subr.bf16.mxu0 0
      %1718 = vmatpush2.bf16.xpose.msra.mxu0 0
      %1719 = vmatprep.subr.bf16.mxu0 0
      %1720 = vmatpush2.bf16.xpose.msra.mxu0 0
      %1721 = vmatprep.mubr.bf16.mxu0 0
      %1722 = vmatmul.mubr.bf16.gmra.mxu0 %v1401
      %v1723 = vpop.f32.mrf.mxu0
      %v1724 = vadd.f32 0.0, %v1723
      %v1725 = vpop.f32.mrf.mxu0
      %v1726 = vpop.f32.mrf.mxu0
      %v1727 = vadd.f32 0.0, %v1726
      %v1728 = vpop.f32.mrf.mxu0
      %1729 = vdwg.mxu0
      %v1730 = vmul.f32 %v1724, 0.0009765625
      %v1731 = vmul.f32 %v1727, 0.0009765625
      %v1732 = vadd.f32 %v1730, %v1687
      %v1733 = vadd.f32 %v1731, %v1688
      %vm1734 = vcmask 130048
      %v1735 = vsel %vm1734, %v1732, -inf
      %1736 = vmax.xlane.f32.xlu0 %v1735
      %v1737 = vpop.xlane.xlu0 %1736
      %v1738 = vsel %vm1734, %v1733, -inf
      %1739 = vmax.xlane.f32.xlu0 %v1738
      %v1740 = vpop.xlane.xlu0 %1739
      %v1741 = vsub.f32 %v1732, %v1737
      %v1742 = vsub.f32 %v1733, %v1740
      %v1743 = vmul.f32 %v1741, 1.442695
      %v1744 = vpow.pop %v1743
      %v1745 = vmul.f32 %v1742, 1.442695
      %v1746 = vpow.pop %v1745
      %v1747 = vsel %vm1734, %v1744, 0.0
      %1748 = vadd.xlane.f32.xlu0 %v1747
      %v1749 = vpop.xlane.xlu0 %1748
      %v1750 = vsel %vm1734, %v1746, 0.0
      %1751 = vadd.xlane.f32.xlu0 %v1750
      %v1752 = vpop.xlane.xlu0 %1751
      %v1753 = vrcp.pop %v1749
      %v1754 = vrcp.pop %v1752
      %v1755 = vmul.f32 %v1744, %v1753
      %v1756 = vmul.f32 %v1746, %v1754
      %v1757 = vpack.c.bf16 %v1756, %v1755
      %v1759 = vsel %vm1734, %v1757, 0
      %1761 = vmatprep.subr.bf16.mxu0 0
      %1762 = vmatpush1.bf16.msra.mxu0 0
      %1763 = vmatprep.subr.bf16.mxu0 0
      %1764 = vmatpush1.bf16.msra.mxu0 0
      %1765 = vmatprep.subr.bf16.mxu0 0
      %1766 = vmatpush1.bf16.msra.mxu0 0
      %1767 = vmatprep.subr.bf16.mxu0 0
      %1768 = vmatpush1.bf16.msra.mxu0 0
      %1769 = vmatprep.subr.bf16.mxu0 0
      %1770 = vmatpush1.bf16.msra.mxu0 0
      %1771 = vmatprep.subr.bf16.mxu0 0
      %1772 = vmatpush1.bf16.msra.mxu0 0
      %1773 = vmatprep.subr.bf16.mxu0 0
      %1774 = vmatpush1.bf16.msra.mxu0 0
      %1775 = vmatprep.subr.bf16.mxu0 0
      %1776 = vmatpush1.bf16.msra.mxu0 %v1683
      %1777 = vmatprep.subr.bf16.mxu0 0
      %1778 = vmatpush2.bf16.msra.mxu0 0
      %1779 = vmatprep.subr.bf16.mxu0 0
      %1780 = vmatpush2.bf16.msra.mxu0 0
      %1781 = vmatprep.subr.bf16.mxu0 0
      %1782 = vmatpush2.bf16.msra.mxu0 0
      %1783 = vmatprep.subr.bf16.mxu0 0
      %1784 = vmatpush2.bf16.msra.mxu0 0
      %1785 = vmatprep.subr.bf16.mxu0 0
      %1786 = vmatpush2.bf16.msra.mxu0 0
      %1787 = vmatprep.subr.bf16.mxu0 0
      %1788 = vmatpush2.bf16.msra.mxu0 0
      %1789 = vmatprep.subr.bf16.mxu0 0
      %1790 = vmatpush2.bf16.msra.mxu0 0
      %1791 = vmatprep.subr.bf16.mxu0 0
      %1792 = vmatpush2.bf16.msra.mxu0 0
      %1793 = vmatprep.mubr.bf16.mxu0 0
      %1794 = vmatmul.mubr.bf16.gmra.mxu0 %v1759
      %v1795 = vpop.f32.mrf.mxu0
      %v1796 = vadd.f32 0.0, %v1795
      %v1797 = vpop.f32.mrf.mxu0
      %v1798 = vpop.f32.mrf.mxu0
      %v1799 = vadd.f32 0.0, %v1798
      %v1800 = vpop.f32.mrf.mxu0
      %1801 = vdwg.mxu0
      %v1802 = vpack.c.bf16 %v1799, %v1796
      %1803 = vmatprep.subr.bf16.mxu0 0
      %1804 = vmatpush1.bf16.xpose.msra.mxu0 0
      %1805 = vmatprep.subr.bf16.mxu0 0
      %1806 = vmatpush1.bf16.xpose.msra.mxu0 0
      %1807 = vmatprep.subr.bf16.mxu0 0
      %1808 = vmatpush1.bf16.xpose.msra.mxu0 0
      %1809 = vmatprep.subr.bf16.mxu0 0
      %1810 = vmatpush1.bf16.xpose.msra.mxu0 0
      %1811 = vmatprep.subr.bf16.mxu0 0
      %1812 = vmatpush1.bf16.xpose.msra.mxu0 0
      %1813 = vmatprep.subr.bf16.mxu0 0
      %1814 = vmatpush1.bf16.xpose.msra.mxu0 0
      %1815 = vmatprep.subr.bf16.mxu0 0
      %1816 = vmatpush1.bf16.xpose.msra.mxu0 0
      %1817 = vmatprep.subr.bf16.mxu0 0
      %1818 = vmatpush1.bf16.xpose.msra.mxu0 %v1120
      %1819 = vmatprep.subr.bf16.mxu0 0
      %1820 = vmatpush2.bf16.xpose.msra.mxu0 0
      %1821 = vmatprep.subr.bf16.mxu0 0
      %1822 = vmatpush2.bf16.xpose.msra.mxu0 0
      %1823 = vmatprep.subr.bf16.mxu0 0
      %1824 = vmatpush2.bf16.xpose.msra.mxu0 0
      %1825 = vmatprep.subr.bf16.mxu0 0
      %1826 = vmatpush2.bf16.xpose.msra.mxu0 0
      %1827 = vmatprep.subr.bf16.mxu0 0
      %1828 = vmatpush2.bf16.xpose.msra.mxu0 0
      %1829 = vmatprep.subr.bf16.mxu0 0
      %1830 = vmatpush2.bf16.xpose.msra.mxu0 0
      %1831 = vmatprep.subr.bf16.mxu0 0
      %1832 = vmatpush2.bf16.xpose.msra.mxu0 0
      %1833 = vmatprep.subr.bf16.mxu0 0
      %1834 = vmatpush2.bf16.xpose.msra.mxu0 0
      %1835 = vmatprep.mubr.bf16.mxu0 0
      %1836 = vmatmul.mubr.bf16.gmra.mxu0 %v1402
      %v1837 = vpop.f32.mrf.mxu0
      %v1838 = vadd.f32 0.0, %v1837
      %v1839 = vpop.f32.mrf.mxu0
      %v1840 = vpop.f32.mrf.mxu0
      %v1841 = vadd.f32 0.0, %v1840
      %v1842 = vpop.f32.mrf.mxu0
      %1843 = vdwg.mxu0
      %v1844 = vmul.f32 %v1838, 0.0009765625
      %v1845 = vmul.f32 %v1841, 0.0009765625
      %v1846 = vadd.f32 %v1844, %v1687
      %v1847 = vadd.f32 %v1845, %v1688
      %v1848 = vsel %vm1734, %v1846, -inf
      %1849 = vmax.xlane.f32.xlu0 %v1848
      %v1850 = vpop.xlane.xlu0 %1849
      %v1851 = vsel %vm1734, %v1847, -inf
      %1852 = vmax.xlane.f32.xlu0 %v1851
      %v1853 = vpop.xlane.xlu0 %1852
      %v1854 = vsub.f32 %v1846, %v1850
      %v1855 = vsub.f32 %v1847, %v1853
      %v1856 = vmul.f32 %v1854, 1.442695
      %v1857 = vpow.pop %v1856
      %v1858 = vmul.f32 %v1855, 1.442695
      %v1859 = vpow.pop %v1858
      %v1860 = vsel %vm1734, %v1857, 0.0
      %1861 = vadd.xlane.f32.xlu0 %v1860
      %v1862 = vpop.xlane.xlu0 %1861
      %v1863 = vsel %vm1734, %v1859, 0.0
      %1864 = vadd.xlane.f32.xlu0 %v1863
      %v1865 = vpop.xlane.xlu0 %1864
      %v1866 = vrcp.pop %v1862
      %v1867 = vrcp.pop %v1865
      %v1868 = vmul.f32 %v1857, %v1866
      %v1869 = vmul.f32 %v1859, %v1867
      %v1870 = vpack.c.bf16 %v1869, %v1868
      %v1872 = vsel %vm1734, %v1870, 0
      %1874 = vmatprep.subr.bf16.mxu0 0
      %1875 = vmatpush1.bf16.msra.mxu0 0
      %1876 = vmatprep.subr.bf16.mxu0 0
      %1877 = vmatpush1.bf16.msra.mxu0 0
      %1878 = vmatprep.subr.bf16.mxu0 0
      %1879 = vmatpush1.bf16.msra.mxu0 0
      %1880 = vmatprep.subr.bf16.mxu0 0
      %1881 = vmatpush1.bf16.msra.mxu0 0
      %1882 = vmatprep.subr.bf16.mxu0 0
      %1883 = vmatpush1.bf16.msra.mxu0 0
      %1884 = vmatprep.subr.bf16.mxu0 0
      %1885 = vmatpush1.bf16.msra.mxu0 0
      %1886 = vmatprep.subr.bf16.mxu0 0
      %1887 = vmatpush1.bf16.msra.mxu0 0
      %1888 = vmatprep.subr.bf16.mxu0 0
      %1889 = vmatpush1.bf16.msra.mxu0 %v1684
      %1890 = vmatprep.subr.bf16.mxu0 0
      %1891 = vmatpush2.bf16.msra.mxu0 0
      %1892 = vmatprep.subr.bf16.mxu0 0
      %1893 = vmatpush2.bf16.msra.mxu0 0
      %1894 = vmatprep.subr.bf16.mxu0 0
      %1895 = vmatpush2.bf16.msra.mxu0 0
      %1896 = vmatprep.subr.bf16.mxu0 0
      %1897 = vmatpush2.bf16.msra.mxu0 0
      %1898 = vmatprep.subr.bf16.mxu0 0
      %1899 = vmatpush2.bf16.msra.mxu0 0
      %1900 = vmatprep.subr.bf16.mxu0 0
      %1901 = vmatpush2.bf16.msra.mxu0 0
      %1902 = vmatprep.subr.bf16.mxu0 0
      %1903 = vmatpush2.bf16.msra.mxu0 0
      %1904 = vmatprep.subr.bf16.mxu0 0
      %1905 = vmatpush2.bf16.msra.mxu0 0
      %1906 = vmatprep.mubr.bf16.mxu0 0
      %1907 = vmatmul.mubr.bf16.gmra.mxu0 %v1872
      %v1908 = vpop.f32.mrf.mxu0
      %v1909 = vadd.f32 0.0, %v1908
      %v1910 = vpop.f32.mrf.mxu0
      %v1911 = vpop.f32.mrf.mxu0
      %v1912 = vadd.f32 0.0, %v1911
      %v1913 = vpop.f32.mrf.mxu0
      %1914 = vdwg.mxu0
      %v1915 = vpack.c.bf16 %v1912, %v1909
      %1916 = vmatprep.subr.bf16.mxu0 0
      %1917 = vmatpush1.bf16.xpose.msra.mxu0 0
      %1918 = vmatprep.subr.bf16.mxu0 0
      %1919 = vmatpush1.bf16.xpose.msra.mxu0 0
      %1920 = vmatprep.subr.bf16.mxu0 0
      %1921 = vmatpush1.bf16.xpose.msra.mxu0 0
      %1922 = vmatprep.subr.bf16.mxu0 0
      %1923 = vmatpush1.bf16.xpose.msra.mxu0 0
      %1924 = vmatprep.subr.bf16.mxu0 0
      %1925 = vmatpush1.bf16.xpose.msra.mxu0 0
      %1926 = vmatprep.subr.bf16.mxu0 0
      %1927 = vmatpush1.bf16.xpose.msra.mxu0 0
      %1928 = vmatprep.subr.bf16.mxu0 0
      %1929 = vmatpush1.bf16.xpose.msra.mxu0 0
      %1930 = vmatprep.subr.bf16.mxu0 0
      %1931 = vmatpush1.bf16.xpose.msra.mxu0 %v1121
      %1932 = vmatprep.subr.bf16.mxu0 0
      %1933 = vmatpush2.bf16.xpose.msra.mxu0 0
      %1934 = vmatprep.subr.bf16.mxu0 0
      %1935 = vmatpush2.bf16.xpose.msra.mxu0 0
      %1936 = vmatprep.subr.bf16.mxu0 0
      %1937 = vmatpush2.bf16.xpose.msra.mxu0 0
      %1938 = vmatprep.subr.bf16.mxu0 0
      %1939 = vmatpush2.bf16.xpose.msra.mxu0 0
      %1940 = vmatprep.subr.bf16.mxu0 0
      %1941 = vmatpush2.bf16.xpose.msra.mxu0 0
      %1942 = vmatprep.subr.bf16.mxu0 0
      %1943 = vmatpush2.bf16.xpose.msra.mxu0 0
      %1944 = vmatprep.subr.bf16.mxu0 0
      %1945 = vmatpush2.bf16.xpose.msra.mxu0 0
      %1946 = vmatprep.subr.bf16.mxu0 0
      %1947 = vmatpush2.bf16.xpose.msra.mxu0 0
      %1948 = vmatprep.mubr.bf16.mxu0 0
      %1949 = vmatmul.mubr.bf16.gmra.mxu0 %v1403
      %v1950 = vpop.f32.mrf.mxu0
      %v1951 = vadd.f32 0.0, %v1950
      %v1952 = vpop.f32.mrf.mxu0
      %v1953 = vpop.f32.mrf.mxu0
      %v1954 = vadd.f32 0.0, %v1953
      %v1955 = vpop.f32.mrf.mxu0
      %1956 = vdwg.mxu0
      %v1957 = vmul.f32 %v1951, 0.0009765625
      %v1958 = vmul.f32 %v1954, 0.0009765625
      %v1959 = vadd.f32 %v1957, %v1687
      %v1960 = vadd.f32 %v1958, %v1688
      %v1961 = vsel %vm1734, %v1959, -inf
      %1962 = vmax.xlane.f32.xlu0 %v1961
      %v1963 = vpop.xlane.xlu0 %1962
      %v1964 = vsel %vm1734, %v1960, -inf
      %1965 = vmax.xlane.f32.xlu0 %v1964
      %v1966 = vpop.xlane.xlu0 %1965
      %v1967 = vsub.f32 %v1959, %v1963
      %v1968 = vsub.f32 %v1960, %v1966
      %v1969 = vmul.f32 %v1967, 1.442695
      %v1970 = vpow.pop %v1969
      %v1971 = vmul.f32 %v1968, 1.442695
      %v1972 = vpow.pop %v1971
      %v1973 = vsel %vm1734, %v1970, 0.0
      %1974 = vadd.xlane.f32.xlu0 %v1973
      %v1975 = vpop.xlane.xlu0 %1974
      %v1976 = vsel %vm1734, %v1972, 0.0
      %1977 = vadd.xlane.f32.xlu0 %v1976
      %v1978 = vpop.xlane.xlu0 %1977
      %v1979 = vrcp.pop %v1975
      %v1980 = vrcp.pop %v1978
      %v1981 = vmul.f32 %v1970, %v1979
      %v1982 = vmul.f32 %v1972, %v1980
      %v1983 = vpack.c.bf16 %v1982, %v1981
      %v1985 = vsel %vm1734, %v1983, 0
      %1987 = vmatprep.subr.bf16.mxu0 0
      %1988 = vmatpush1.bf16.msra.mxu0 0
      %1989 = vmatprep.subr.bf16.mxu0 0
      %1990 = vmatpush1.bf16.msra.mxu0 0
      %1991 = vmatprep.subr.bf16.mxu0 0
      %1992 = vmatpush1.bf16.msra.mxu0 0
      %1993 = vmatprep.subr.bf16.mxu0 0
      %1994 = vmatpush1.bf16.msra.mxu0 0
      %1995 = vmatprep.subr.bf16.mxu0 0
      %1996 = vmatpush1.bf16.msra.mxu0 0
      %1997 = vmatprep.subr.bf16.mxu0 0
      %1998 = vmatpush1.bf16.msra.mxu0 0
      %1999 = vmatprep.subr.bf16.mxu0 0
      %2000 = vmatpush1.bf16.msra.mxu0 0
      %2001 = vmatprep.subr.bf16.mxu0 0
      %2002 = vmatpush1.bf16.msra.mxu0 %v1685
      %2003 = vmatprep.subr.bf16.mxu0 0
      %2004 = vmatpush2.bf16.msra.mxu0 0
      %2005 = vmatprep.subr.bf16.mxu0 0
      %2006 = vmatpush2.bf16.msra.mxu0 0
      %2007 = vmatprep.subr.bf16.mxu0 0
      %2008 = vmatpush2.bf16.msra.mxu0 0
      %2009 = vmatprep.subr.bf16.mxu0 0
      %2010 = vmatpush2.bf16.msra.mxu0 0
      %2011 = vmatprep.subr.bf16.mxu0 0
      %2012 = vmatpush2.bf16.msra.mxu0 0
      %2013 = vmatprep.subr.bf16.mxu0 0
      %2014 = vmatpush2.bf16.msra.mxu0 0
      %2015 = vmatprep.subr.bf16.mxu0 0
      %2016 = vmatpush2.bf16.msra.mxu0 0
      %2017 = vmatprep.subr.bf16.mxu0 0
      %2018 = vmatpush2.bf16.msra.mxu0 0
      %2019 = vmatprep.mubr.bf16.mxu0 0
      %2020 = vmatmul.mubr.bf16.gmra.mxu0 %v1985
      %v2021 = vpop.f32.mrf.mxu0
      %v2022 = vadd.f32 0.0, %v2021
      %v2023 = vpop.f32.mrf.mxu0
      %v2024 = vpop.f32.mrf.mxu0
      %v2025 = vadd.f32 0.0, %v2024
      %v2026 = vpop.f32.mrf.mxu0
      %2027 = vdwg.mxu0
      %v2028 = vpack.c.bf16 %v2025, %v2022
      %2029 = vmatprep.subr.bf16.mxu0 0
      %2030 = vmatpush1.bf16.xpose.msra.mxu0 0
      %2031 = vmatprep.subr.bf16.mxu0 0
      %2032 = vmatpush1.bf16.xpose.msra.mxu0 0
      %2033 = vmatprep.subr.bf16.mxu0 0
      %2034 = vmatpush1.bf16.xpose.msra.mxu0 0
      %2035 = vmatprep.subr.bf16.mxu0 0
      %2036 = vmatpush1.bf16.xpose.msra.mxu0 0
      %2037 = vmatprep.subr.bf16.mxu0 0
      %2038 = vmatpush1.bf16.xpose.msra.mxu0 0
      %2039 = vmatprep.subr.bf16.mxu0 0
      %2040 = vmatpush1.bf16.xpose.msra.mxu0 0
      %2041 = vmatprep.subr.bf16.mxu0 0
      %2042 = vmatpush1.bf16.xpose.msra.mxu0 0
      %2043 = vmatprep.subr.bf16.mxu0 0
      %2044 = vmatpush1.bf16.xpose.msra.mxu0 %v1122
      %2045 = vmatprep.subr.bf16.mxu0 0
      %2046 = vmatpush2.bf16.xpose.msra.mxu0 0
      %2047 = vmatprep.subr.bf16.mxu0 0
      %2048 = vmatpush2.bf16.xpose.msra.mxu0 0
      %2049 = vmatprep.subr.bf16.mxu0 0
      %2050 = vmatpush2.bf16.xpose.msra.mxu0 0
      %2051 = vmatprep.subr.bf16.mxu0 0
      %2052 = vmatpush2.bf16.xpose.msra.mxu0 0
      %2053 = vmatprep.subr.bf16.mxu0 0
      %2054 = vmatpush2.bf16.xpose.msra.mxu0 0
      %2055 = vmatprep.subr.bf16.mxu0 0
      %2056 = vmatpush2.bf16.xpose.msra.mxu0 0
      %2057 = vmatprep.subr.bf16.mxu0 0
      %2058 = vmatpush2.bf16.xpose.msra.mxu0 0
      %2059 = vmatprep.subr.bf16.mxu0 0
      %2060 = vmatpush2.bf16.xpose.msra.mxu0 0
      %2061 = vmatprep.mubr.bf16.mxu0 0
      %2062 = vmatmul.mubr.bf16.gmra.mxu0 %v1404
      %v2063 = vpop.f32.mrf.mxu0
      %v2064 = vadd.f32 0.0, %v2063
      %v2065 = vpop.f32.mrf.mxu0
      %v2066 = vpop.f32.mrf.mxu0
      %v2067 = vadd.f32 0.0, %v2066
      %v2068 = vpop.f32.mrf.mxu0
      %2069 = vdwg.mxu0
      %v2070 = vmul.f32 %v2064, 0.0009765625
      %v2071 = vmul.f32 %v2067, 0.0009765625
      %v2072 = vadd.f32 %v2070, %v1687
      %v2073 = vadd.f32 %v2071, %v1688
      %v2074 = vsel %vm1734, %v2072, -inf
      %2075 = vmax.xlane.f32.xlu0 %v2074
      %v2076 = vpop.xlane.xlu0 %2075
      %v2077 = vsel %vm1734, %v2073, -inf
      %2078 = vmax.xlane.f32.xlu0 %v2077
      %v2079 = vpop.xlane.xlu0 %2078
      %v2080 = vsub.f32 %v2072, %v2076
      %v2081 = vsub.f32 %v2073, %v2079
      %v2082 = vmul.f32 %v2080, 1.442695
      %v2083 = vpow.pop %v2082
      %v2084 = vmul.f32 %v2081, 1.442695
      %v2085 = vpow.pop %v2084
      %v2086 = vsel %vm1734, %v2083, 0.0
      %2087 = vadd.xlane.f32.xlu0 %v2086
      %v2088 = vpop.xlane.xlu0 %2087
      %v2089 = vsel %vm1734, %v2085, 0.0
      %2090 = vadd.xlane.f32.xlu0 %v2089
      %v2091 = vpop.xlane.xlu0 %2090
      %v2092 = vrcp.pop %v2088
      %v2093 = vrcp.pop %v2091
      %v2094 = vmul.f32 %v2083, %v2092
      %v2095 = vmul.f32 %v2085, %v2093
      %v2096 = vpack.c.bf16 %v2095, %v2094
      %v2098 = vsel %vm1734, %v2096, 0
      %2100 = vmatprep.subr.bf16.mxu0 0
      %2101 = vmatpush1.bf16.msra.mxu0 0
      %2102 = vmatprep.subr.bf16.mxu0 0
      %2103 = vmatpush1.bf16.msra.mxu0 0
      %2104 = vmatprep.subr.bf16.mxu0 0
      %2105 = vmatpush1.bf16.msra.mxu0 0
      %2106 = vmatprep.subr.bf16.mxu0 0
      %2107 = vmatpush1.bf16.msra.mxu0 0
      %2108 = vmatprep.subr.bf16.mxu0 0
      %2109 = vmatpush1.bf16.msra.mxu0 0
      %2110 = vmatprep.subr.bf16.mxu0 0
      %2111 = vmatpush1.bf16.msra.mxu0 0
      %2112 = vmatprep.subr.bf16.mxu0 0
      %2113 = vmatpush1.bf16.msra.mxu0 0
      %2114 = vmatprep.subr.bf16.mxu0 0
      %2115 = vmatpush1.bf16.msra.mxu0 %v1686
      %2116 = vmatprep.subr.bf16.mxu0 0
      %2117 = vmatpush2.bf16.msra.mxu0 0
      %2118 = vmatprep.subr.bf16.mxu0 0
      %2119 = vmatpush2.bf16.msra.mxu0 0
      %2120 = vmatprep.subr.bf16.mxu0 0
      %2121 = vmatpush2.bf16.msra.mxu0 0
      %2122 = vmatprep.subr.bf16.mxu0 0
      %2123 = vmatpush2.bf16.msra.mxu0 0
      %2124 = vmatprep.subr.bf16.mxu0 0
      %2125 = vmatpush2.bf16.msra.mxu0 0
      %2126 = vmatprep.subr.bf16.mxu0 0
      %2127 = vmatpush2.bf16.msra.mxu0 0
      %2128 = vmatprep.subr.bf16.mxu0 0
      %2129 = vmatpush2.bf16.msra.mxu0 0
      %2130 = vmatprep.subr.bf16.mxu0 0
      %2131 = vmatpush2.bf16.msra.mxu0 0
      %2132 = vmatprep.mubr.bf16.mxu0 0
      %2133 = vmatmul.mubr.bf16.gmra.mxu0 %v2098
      %v2134 = vpop.f32.mrf.mxu0
      %v2135 = vadd.f32 0.0, %v2134
      %v2136 = vpop.f32.mrf.mxu0
      %v2137 = vpop.f32.mrf.mxu0
      %v2138 = vadd.f32 0.0, %v2137
      %v2139 = vpop.f32.mrf.mxu0
      %2140 = vdwg.mxu0
      %v2141 = vpack.c.bf16 %v2138, %v2135
      %v2142 = vld [vmem:[%s750] sm:$0xf]
      %v2143 = vld [vmem:[%s750 + $0x4] sm:$0xf]
      %v2144 = vld [vmem:[%s750 + $0x8] sm:$0xf]
      %v2145 = vld [vmem:[%s750 + $0xc] sm:$0xf]
      %v2146 = vld [vmem:[%s750 + $0x10] sm:$0xf]
      %v2147 = vld [vmem:[%s750 + $0x14] sm:$0xf]
      %v2148 = vld [vmem:[%s750 + $0x18] sm:$0xf]
      %v2149 = vld [vmem:[%s750 + $0x1c] sm:$0xf]
      %v2150 = vld [vmem:[%s750 + $0x20] sm:$0xf]
      %v2151 = vld [vmem:[%s750 + $0x24] sm:$0xf]
      %v2152 = vld [vmem:[%s750 + $0x28] sm:$0xf]
      %v2153 = vld [vmem:[%s750 + $0x2c] sm:$0xf]
      %v2154 = vld [vmem:[%s750 + $0x30] sm:$0xf]
      %v2155 = vld [vmem:[%s750 + $0x34] sm:$0xf]
      %v2156 = vld [vmem:[%s750 + $0x38] sm:$0xf]
      %v2157 = vld [vmem:[%s750 + $0x3c] sm:$0xf]
      %v2158 = vld [vmem:[%s750 + $0x40] sm:$0xf]
      %v2159 = vld [vmem:[%s750 + $0x44] sm:$0xf]
      %v2160 = vld [vmem:[%s750 + $0x48] sm:$0xf]
      %v2161 = vld [vmem:[%s750 + $0x4c] sm:$0xf]
      %v2162 = vld [vmem:[%s750 + $0x50] sm:$0xf]
      %v2163 = vld [vmem:[%s750 + $0x54] sm:$0xf]
      %v2164 = vld [vmem:[%s750 + $0x58] sm:$0xf]
      %v2165 = vld [vmem:[%s750 + $0x5c] sm:$0xf]
      %v2166 = vld [vmem:[%s750 + $0x60] sm:$0xf]
      %v2167 = vld [vmem:[%s750 + $0x64] sm:$0xf]
      %v2168 = vld [vmem:[%s750 + $0x68] sm:$0xf]
      %v2169 = vld [vmem:[%s750 + $0x6c] sm:$0xf]
      %v2170 = vld [vmem:[%s750 + $0x70] sm:$0xf]
      %v2171 = vld [vmem:[%s750 + $0x74] sm:$0xf]
      %v2172 = vld [vmem:[%s750 + $0x78] sm:$0xf]
      %v2173 = vld [vmem:[%s750 + $0x7c] sm:$0xf]
      %v2174 = vld [vmem:[%s750 + $0x80] sm:$0xf]
      %v2175 = vld [vmem:[%s750 + $0x84] sm:$0xf]
      %v2176 = vld [vmem:[%s750 + $0x88] sm:$0xf]
      %v2177 = vld [vmem:[%s750 + $0x8c] sm:$0xf]
      %v2178 = vld [vmem:[%s750 + $0x90] sm:$0xf]
      %v2179 = vld [vmem:[%s750 + $0x94] sm:$0xf]
      %v2180 = vld [vmem:[%s750 + $0x98] sm:$0xf]
      %v2181 = vld [vmem:[%s750 + $0x9c] sm:$0xf]
      %v2182 = vld [vmem:[%s750 + $0xa0] sm:$0xf]
      %v2183 = vld [vmem:[%s750 + $0xa4] sm:$0xf]
      %v2184 = vld [vmem:[%s750 + $0xa8] sm:$0xf]
      %v2185 = vld [vmem:[%s750 + $0xac] sm:$0xf]
      %v2186 = vld [vmem:[%s750 + $0xb0] sm:$0xf]
      %v2187 = vld [vmem:[%s750 + $0xb4] sm:$0xf]
      %v2188 = vld [vmem:[%s750 + $0xb8] sm:$0xf]
      %v2189 = vld [vmem:[%s750 + $0xbc] sm:$0xf]
      %v2190 = vld [vmem:[%s750 + $0xc0] sm:$0xf]
      %v2191 = vld [vmem:[%s750 + $0xc4] sm:$0xf]
      %v2192 = vld [vmem:[%s750 + $0xc8] sm:$0xf]
      %v2193 = vld [vmem:[%s750 + $0xcc] sm:$0xf]
      %v2194 = vld [vmem:[%s750 + $0xd0] sm:$0xf]
      %v2195 = vld [vmem:[%s750 + $0xd4] sm:$0xf]
      %v2196 = vld [vmem:[%s750 + $0xd8] sm:$0xf]
      %v2197 = vld [vmem:[%s750 + $0xdc] sm:$0xf]
      %v2198 = vld [vmem:[%s750 + $0xe0] sm:$0xf]
      %v2199 = vld [vmem:[%s750 + $0xe4] sm:$0xf]
      %v2200 = vld [vmem:[%s750 + $0xe8] sm:$0xf]
      %v2201 = vld [vmem:[%s750 + $0xec] sm:$0xf]
      %v2202 = vld [vmem:[%s750 + $0xf0] sm:$0xf]
      %v2203 = vld [vmem:[%s750 + $0xf4] sm:$0xf]
      %v2204 = vld [vmem:[%s750 + $0xf8] sm:$0xf]
      %v2205 = vld [vmem:[%s750 + $0xfc] sm:$0xf]
      %v2206 = vld [vmem:[%s753] sm:$0x1]
      %v2208 = vlaneseq
      %v2209 = vshrl.u32 %v2208, 7
      %v2210 = vsub.s32 0, %v2209
      %v2211 = vrot.slane %v2206, %v2210
      %v2277 = vunpack.c.l.b16 %v2142
      %v2278 = vunpack.c.l.b16 %v2143
      %v2279 = vunpack.c.l.b16 %v2144
      %v2280 = vunpack.c.l.b16 %v2145
      %v2281 = vunpack.c.l.b16 %v2146
      %v2282 = vunpack.c.l.b16 %v2147
      %v2283 = vunpack.c.l.b16 %v2148
      %v2284 = vunpack.c.l.b16 %v2149
      %v2285 = vunpack.c.l.b16 %v2150
      %v2286 = vunpack.c.l.b16 %v2151
      %v2287 = vunpack.c.l.b16 %v2152
      %v2288 = vunpack.c.l.b16 %v2153
      %v2289 = vunpack.c.l.b16 %v2154
      %v2290 = vunpack.c.l.b16 %v2155
      %v2291 = vunpack.c.l.b16 %v2156
      %v2292 = vunpack.c.l.b16 %v2157
      %v2293 = vunpack.c.l.b16 %v2158
      %v2294 = vunpack.c.l.b16 %v2159
      %v2295 = vunpack.c.l.b16 %v2160
      %v2296 = vunpack.c.l.b16 %v2161
      %v2297 = vunpack.c.l.b16 %v2162
      %v2298 = vunpack.c.l.b16 %v2163
      %v2299 = vunpack.c.l.b16 %v2164
      %v2300 = vunpack.c.l.b16 %v2165
      %v2301 = vunpack.c.l.b16 %v2166
      %v2302 = vunpack.c.l.b16 %v2167
      %v2303 = vunpack.c.l.b16 %v2168
      %v2304 = vunpack.c.l.b16 %v2169
      %v2305 = vunpack.c.l.b16 %v2170
      %v2306 = vunpack.c.l.b16 %v2171
      %v2307 = vunpack.c.l.b16 %v2172
      %v2308 = vunpack.c.l.b16 %v2173
      %v2309 = vunpack.c.l.b16 %v2174
      %v2310 = vunpack.c.l.b16 %v2175
      %v2311 = vunpack.c.l.b16 %v2176
      %v2312 = vunpack.c.l.b16 %v2177
      %v2313 = vunpack.c.l.b16 %v2178
      %v2314 = vunpack.c.l.b16 %v2179
      %v2315 = vunpack.c.l.b16 %v2180
      %v2316 = vunpack.c.l.b16 %v2181
      %v2317 = vunpack.c.l.b16 %v2182
      %v2318 = vunpack.c.l.b16 %v2183
      %v2319 = vunpack.c.l.b16 %v2184
      %v2320 = vunpack.c.l.b16 %v2185
      %v2321 = vunpack.c.l.b16 %v2186
      %v2322 = vunpack.c.l.b16 %v2187
      %v2323 = vunpack.c.l.b16 %v2188
      %v2324 = vunpack.c.l.b16 %v2189
      %v2325 = vunpack.c.l.b16 %v2190
      %v2326 = vunpack.c.l.b16 %v2191
      %v2327 = vunpack.c.l.b16 %v2192
      %v2328 = vunpack.c.l.b16 %v2193
      %v2329 = vunpack.c.l.b16 %v2194
      %v2330 = vunpack.c.l.b16 %v2195
      %v2331 = vunpack.c.l.b16 %v2196
      %v2332 = vunpack.c.l.b16 %v2197
      %v2333 = vunpack.c.l.b16 %v2198
      %v2334 = vunpack.c.l.b16 %v2199
      %v2335 = vunpack.c.l.b16 %v2200
      %v2336 = vunpack.c.l.b16 %v2201
      %v2337 = vunpack.c.l.b16 %v2202
      %v2338 = vunpack.c.l.b16 %v2203
      %v2339 = vunpack.c.l.b16 %v2204
      %v2340 = vunpack.c.l.b16 %v2205
      %v2341 = vpack.c.b16 %v2278, %v2277
      %v2342 = vpack.c.b16 %v2280, %v2279
      %v2343 = vpack.c.b16 %v2282, %v2281
      %v2344 = vpack.c.b16 %v2284, %v2283
      %v2345 = vpack.c.b16 %v2286, %v2285
      %v2346 = vpack.c.b16 %v2288, %v2287
      %v2347 = vpack.c.b16 %v2290, %v2289
      %v2348 = vpack.c.b16 %v2292, %v2291
      %v2349 = vpack.c.b16 %v2294, %v2293
      %v2350 = vpack.c.b16 %v2296, %v2295
      %v2351 = vpack.c.b16 %v2298, %v2297
      %v2352 = vpack.c.b16 %v2300, %v2299
      %v2353 = vpack.c.b16 %v2302, %v2301
      %v2354 = vpack.c.b16 %v2304, %v2303
      %v2355 = vpack.c.b16 %v2306, %v2305
      %v2356 = vpack.c.b16 %v2308, %v2307
      %v2357 = vpack.c.b16 %v2310, %v2309
      %v2358 = vpack.c.b16 %v2312, %v2311
      %v2359 = vpack.c.b16 %v2314, %v2313
      %v2360 = vpack.c.b16 %v2316, %v2315
      %v2361 = vpack.c.b16 %v2318, %v2317
      %v2362 = vpack.c.b16 %v2320, %v2319
      %v2363 = vpack.c.b16 %v2322, %v2321
      %v2364 = vpack.c.b16 %v2324, %v2323
      %v2365 = vpack.c.b16 %v2326, %v2325
      %v2366 = vpack.c.b16 %v2328, %v2327
      %v2367 = vpack.c.b16 %v2330, %v2329
      %v2368 = vpack.c.b16 %v2332, %v2331
      %v2369 = vpack.c.b16 %v2334, %v2333
      %v2370 = vpack.c.b16 %v2336, %v2335
      %v2371 = vpack.c.b16 %v2338, %v2337
      %v2372 = vpack.c.b16 %v2340, %v2339
      %2405 = vmatprep.subr.bf16.mxu0 0
      %2406 = vmatpush1.bf16.msra.mxu0 %v2348
      %2407 = vmatprep.subr.bf16.mxu0 0
      %2408 = vmatpush1.bf16.msra.mxu0 %v2347
      %2409 = vmatprep.subr.bf16.mxu0 0
      %2410 = vmatpush1.bf16.msra.mxu0 %v2346
      %2411 = vmatprep.subr.bf16.mxu0 0
      %2412 = vmatpush1.bf16.msra.mxu0 %v2345
      %2413 = vmatprep.subr.bf16.mxu0 0
      %2414 = vmatpush1.bf16.msra.mxu0 %v2344
      %2415 = vmatprep.subr.bf16.mxu0 0
      %2416 = vmatpush1.bf16.msra.mxu0 %v2343
      %2417 = vmatprep.subr.bf16.mxu0 0
      %2418 = vmatpush1.bf16.msra.mxu0 %v2342
      %2419 = vmatprep.subr.bf16.mxu0 0
      %2420 = vmatpush1.bf16.msra.mxu0 %v2341
      %2421 = vmatprep.subr.bf16.mxu0 0
      %2422 = vmatpush2.bf16.msra.mxu0 %v2356
      %2423 = vmatprep.subr.bf16.mxu0 0
      %2424 = vmatpush2.bf16.msra.mxu0 %v2355
      %2425 = vmatprep.subr.bf16.mxu0 0
      %2426 = vmatpush2.bf16.msra.mxu0 %v2354
      %2427 = vmatprep.subr.bf16.mxu0 0
      %2428 = vmatpush2.bf16.msra.mxu0 %v2353
      %2429 = vmatprep.subr.bf16.mxu0 0
      %2430 = vmatpush2.bf16.msra.mxu0 %v2352
      %2431 = vmatprep.subr.bf16.mxu0 0
      %2432 = vmatpush2.bf16.msra.mxu0 %v2351
      %2433 = vmatprep.subr.bf16.mxu0 0
      %2434 = vmatpush2.bf16.msra.mxu0 %v2350
      %2435 = vmatprep.subr.bf16.mxu0 0
      %2436 = vmatpush2.bf16.msra.mxu0 %v2349
      %2437 = vmatprep.mubr.bf16.mxu0 %v1915
      %2438 = vmatmul.mubr.bf16.gmra.mxu0 %v1802
      %v2439 = vpop.f32.mrf.mxu0
      %v2440 = vadd.f32 %v2211, %v2439
      %v2441 = vpop.f32.mrf.mxu0
      %v2442 = vpop.f32.mrf.mxu0
      %v2443 = vadd.f32 %v2211, %v2442
      %v2444 = vpop.f32.mrf.mxu0
      %2445 = vdwg.mxu0
      %2446 = vmatprep.subr.bf16.mxu0 0
      %2447 = vmatpush1.bf16.msra.mxu0 %v2364
      %2448 = vmatprep.subr.bf16.mxu0 0
      %2449 = vmatpush1.bf16.msra.mxu0 %v2363
      %2450 = vmatprep.subr.bf16.mxu0 0
      %2451 = vmatpush1.bf16.msra.mxu0 %v2362
      %2452 = vmatprep.subr.bf16.mxu0 0
      %2453 = vmatpush1.bf16.msra.mxu0 %v2361
      %2454 = vmatprep.subr.bf16.mxu0 0
      %2455 = vmatpush1.bf16.msra.mxu0 %v2360
      %2456 = vmatprep.subr.bf16.mxu0 0
      %2457 = vmatpush1.bf16.msra.mxu0 %v2359
      %2458 = vmatprep.subr.bf16.mxu0 0
      %2459 = vmatpush1.bf16.msra.mxu0 %v2358
      %2460 = vmatprep.subr.bf16.mxu0 0
      %2461 = vmatpush1.bf16.msra.mxu0 %v2357
      %2462 = vmatprep.subr.bf16.mxu0 0
      %2463 = vmatpush2.bf16.msra.mxu0 %v2372
      %2464 = vmatprep.subr.bf16.mxu0 0
      %2465 = vmatpush2.bf16.msra.mxu0 %v2371
      %2466 = vmatprep.subr.bf16.mxu0 0
      %2467 = vmatpush2.bf16.msra.mxu0 %v2370
      %2468 = vmatprep.subr.bf16.mxu0 0
      %2469 = vmatpush2.bf16.msra.mxu0 %v2369
      %2470 = vmatprep.subr.bf16.mxu0 0
      %2471 = vmatpush2.bf16.msra.mxu0 %v2368
      %2472 = vmatprep.subr.bf16.mxu0 0
      %2473 = vmatpush2.bf16.msra.mxu0 %v2367
      %2474 = vmatprep.subr.bf16.mxu0 0
      %2475 = vmatpush2.bf16.msra.mxu0 %v2366
      %2476 = vmatprep.subr.bf16.mxu0 0
      %2477 = vmatpush2.bf16.msra.mxu0 %v2365
      %2478 = vmatprep.mubr.bf16.mxu0 %v2141
      %2479 = vmatmul.mubr.bf16.gmra.mxu0 %v2028
      %v2480 = vpop.f32.mrf.mxu0
      %v2481 = vadd.f32 %v2440, %v2480
      %v2482 = vpop.f32.mrf.mxu0
      %v2483 = vpop.f32.mrf.mxu0
      %v2484 = vadd.f32 %v2443, %v2483
      %v2485 = vpop.f32.mrf.mxu0
      %2486 = vdwg.mxu0
      %v2487 = vadd.f32 %v794, %v2481
      %v2488 = vadd.f32 %v795, %v2484
      %v2489 = vld [vmem:[%s756] sm:$0x1]
      %v2490 = vld [vmem:[%s759] sm:$0x1]
      %2491 = vadd.xlane.f32.xlu0 %v2487
      %v2492 = vpop.xlane.xlu0 %2491
      %2493 = vadd.xlane.f32.xlu0 %v2488
      %v2494 = vpop.xlane.xlu0 %2493
      %v2495 = vmul.f32 %v2492, 0.03125
      %v2496 = vmul.f32 %v2494, 0.03125
      %v2497 = vsub.f32 %v2487, %v2495
      %v2498 = vsub.f32 %v2488, %v2496
      %v2499 = vsel %vm807, %v2497, 0.0
      %v2500 = vsel %vm807, %v2498, 0.0
      %v2501 = vmul.f32 %v2499, %v2499
      %v2502 = vmul.f32 %v2500, %v2500
      %2503 = vadd.xlane.f32.xlu0 %v2501
      %v2504 = vpop.xlane.xlu0 %2503
      %2505 = vadd.xlane.f32.xlu0 %v2502
      %v2506 = vpop.xlane.xlu0 %2505
      %v2507 = vmul.f32 %v2504, 0.03125
      %v2508 = vmul.f32 %v2506, 0.03125
      %v2509 = vadd.f32 %v2507, 1e-05
      %v2510 = vadd.f32 %v2508, 1e-05
      %v2511 = vrsqrt.pop %v2509
      %v2512 = vrsqrt.pop %v2510
      %v2513 = vmul.f32 %v2499, %v2511
      %v2514 = vmul.f32 %v2500, %v2512
      %v2516 = vlaneseq
      %v2517 = vshrl.u32 %v2516, 7
      %v2518 = vsub.s32 0, %v2517
      %v2519 = vrot.slane %v2489, %v2518
      %v2521 = vmul.f32 %v2513, %v2519
      %v2522 = vmul.f32 %v2514, %v2519
      %v2524 = vlaneseq
      %v2525 = vshrl.u32 %v2524, 7
      %v2526 = vsub.s32 0, %v2525
      %v2527 = vrot.slane %v2490, %v2526
      %v2529 = vadd.f32 %v2521, %v2527
      %v2530 = vadd.f32 %v2522, %v2527
      %v2531 = vpack.c.bf16 %v2530, %v2529
      %v2532 = vld [vmem:[%s764] sm:$0xf]
      %v2533 = vld [vmem:[%s764 + $0x4] sm:$0xf]
      %v2534 = vld [vmem:[%s764 + $0x8] sm:$0xf]
      %v2535 = vld [vmem:[%s764 + $0xc] sm:$0xf]
      %v2536 = vld [vmem:[%s764 + $0x10] sm:$0xf]
      %v2537 = vld [vmem:[%s764 + $0x14] sm:$0xf]
      %v2538 = vld [vmem:[%s764 + $0x18] sm:$0xf]
      %v2539 = vld [vmem:[%s764 + $0x1c] sm:$0xf]
      %v2540 = vld [vmem:[%s764 + $0x20] sm:$0xf]
      %v2541 = vld [vmem:[%s764 + $0x24] sm:$0xf]
      %v2542 = vld [vmem:[%s764 + $0x28] sm:$0xf]
      %v2543 = vld [vmem:[%s764 + $0x2c] sm:$0xf]
      %v2544 = vld [vmem:[%s764 + $0x30] sm:$0xf]
      %v2545 = vld [vmem:[%s764 + $0x34] sm:$0xf]
      %v2546 = vld [vmem:[%s764 + $0x38] sm:$0xf]
      %v2547 = vld [vmem:[%s764 + $0x3c] sm:$0xf]
      %v2548 = vld [vmem:[%s767] sm:$0x1]
      %v2550 = vlaneseq
      %v2551 = vshrl.u32 %v2550, 7
      %v2552 = vsub.s32 0, %v2551
      %v2553 = vrot.slane %v2548, %v2552
      %v2571 = vunpack.c.l.b16 %v2532
      %v2572 = vunpack.c.l.b16 %v2533
      %v2573 = vunpack.c.l.b16 %v2534
      %v2574 = vunpack.c.l.b16 %v2535
      %v2575 = vunpack.c.l.b16 %v2536
      %v2576 = vunpack.c.l.b16 %v2537
      %v2577 = vunpack.c.l.b16 %v2538
      %v2578 = vunpack.c.l.b16 %v2539
      %v2579 = vunpack.c.l.b16 %v2540
      %v2580 = vunpack.c.l.b16 %v2541
      %v2581 = vunpack.c.l.b16 %v2542
      %v2582 = vunpack.c.l.b16 %v2543
      %v2583 = vunpack.c.l.b16 %v2544
      %v2584 = vunpack.c.l.b16 %v2545
      %v2585 = vunpack.c.l.b16 %v2546
      %v2586 = vunpack.c.l.b16 %v2547
      %v2587 = vpack.c.b16 %v2572, %v2571
      %v2588 = vpack.c.b16 %v2574, %v2573
      %v2589 = vpack.c.b16 %v2576, %v2575
      %v2590 = vpack.c.b16 %v2578, %v2577
      %v2591 = vpack.c.b16 %v2580, %v2579
      %v2592 = vpack.c.b16 %v2582, %v2581
      %v2593 = vpack.c.b16 %v2584, %v2583
      %v2594 = vpack.c.b16 %v2586, %v2585
      %2603 = vmatprep.subr.bf16.mxu0 0
      %2604 = vmatpush1.bf16.msra.mxu0 %v2594
      %2605 = vmatprep.subr.bf16.mxu0 0
      %2606 = vmatpush1.bf16.msra.mxu0 %v2593
      %2607 = vmatprep.subr.bf16.mxu0 0
      %2608 = vmatpush1.bf16.msra.mxu0 %v2592
      %2609 = vmatprep.subr.bf16.mxu0 0
      %2610 = vmatpush1.bf16.msra.mxu0 %v2591
      %2611 = vmatprep.subr.bf16.mxu0 0
      %2612 = vmatpush1.bf16.msra.mxu0 %v2590
      %2613 = vmatprep.subr.bf16.mxu0 0
      %2614 = vmatpush1.bf16.msra.mxu0 %v2589
      %2615 = vmatprep.subr.bf16.mxu0 0
      %2616 = vmatpush1.bf16.msra.mxu0 %v2588
      %2617 = vmatprep.subr.bf16.mxu0 0
      %2618 = vmatpush1.bf16.msra.mxu0 %v2587
      %2619 = vmatprep.subr.bf16.mxu0 0
      %2620 = vmatpush2.bf16.msra.mxu0 0
      %2621 = vmatprep.subr.bf16.mxu0 0
      %2622 = vmatpush2.bf16.msra.mxu0 0
      %2623 = vmatprep.subr.bf16.mxu0 0
      %2624 = vmatpush2.bf16.msra.mxu0 0
      %2625 = vmatprep.subr.bf16.mxu0 0
      %2626 = vmatpush2.bf16.msra.mxu0 0
      %2627 = vmatprep.subr.bf16.mxu0 0
      %2628 = vmatpush2.bf16.msra.mxu0 0
      %2629 = vmatprep.subr.bf16.mxu0 0
      %2630 = vmatpush2.bf16.msra.mxu0 0
      %2631 = vmatprep.subr.bf16.mxu0 0
      %2632 = vmatpush2.bf16.msra.mxu0 0
      %2633 = vmatprep.subr.bf16.mxu0 0
      %2634 = vmatpush2.bf16.msra.mxu0 0
      %2635 = vmatprep.mubr.bf16.mxu0 0
      %2636 = vmatmul.mubr.bf16.gmra.mxu0 %v2531
      %v2637 = vpop.f32.mrf.mxu0
      %v2638 = vadd.f32 %v2553, %v2637
      %v2639 = vpop.f32.mrf.mxu0
      %v2640 = vpop.f32.mrf.mxu0
      %v2641 = vadd.f32 %v2553, %v2640
      %v2642 = vpop.f32.mrf.mxu0
      %2643 = vdwg.mxu0
      %v2644 = vmax.f32 %v2638, 0.0
      %v2645 = vmax.f32 %v2641, 0.0
      %v2646 = vpack.c.bf16 %v2645, %v2644
      %v2647 = vld [vmem:[%s772] sm:$0xf]
      %v2648 = vld [vmem:[%s772 + $0x4] sm:$0xf]
      %v2649 = vld [vmem:[%s772 + $0x8] sm:$0xf]
      %v2650 = vld [vmem:[%s772 + $0xc] sm:$0xf]
      %v2651 = vld [vmem:[%s772 + $0x10] sm:$0xf]
      %v2652 = vld [vmem:[%s772 + $0x14] sm:$0xf]
      %v2653 = vld [vmem:[%s772 + $0x18] sm:$0xf]
      %v2654 = vld [vmem:[%s772 + $0x1c] sm:$0xf]
      %v2655 = vld [vmem:[%s772 + $0x20] sm:$0xf]
      %v2656 = vld [vmem:[%s772 + $0x24] sm:$0xf]
      %v2657 = vld [vmem:[%s772 + $0x28] sm:$0xf]
      %v2658 = vld [vmem:[%s772 + $0x2c] sm:$0xf]
      %v2659 = vld [vmem:[%s772 + $0x30] sm:$0xf]
      %v2660 = vld [vmem:[%s772 + $0x34] sm:$0xf]
      %v2661 = vld [vmem:[%s772 + $0x38] sm:$0xf]
      %v2662 = vld [vmem:[%s772 + $0x3c] sm:$0xf]
      %v2663 = vld [vmem:[%s775] sm:$0x1]
      %v2665 = vlaneseq
      %v2666 = vshrl.u32 %v2665, 7
      %v2667 = vsub.s32 0, %v2666
      %v2668 = vrot.slane %v2663, %v2667
      %v2686 = vunpack.c.l.b16 %v2647
      %v2687 = vunpack.c.l.b16 %v2648
      %v2688 = vunpack.c.l.b16 %v2649
      %v2689 = vunpack.c.l.b16 %v2650
      %v2690 = vunpack.c.l.b16 %v2651
      %v2691 = vunpack.c.l.b16 %v2652
      %v2692 = vunpack.c.l.b16 %v2653
      %v2693 = vunpack.c.l.b16 %v2654
      %v2694 = vunpack.c.l.b16 %v2655
      %v2695 = vunpack.c.l.b16 %v2656
      %v2696 = vunpack.c.l.b16 %v2657
      %v2697 = vunpack.c.l.b16 %v2658
      %v2698 = vunpack.c.l.b16 %v2659
      %v2699 = vunpack.c.l.b16 %v2660
      %v2700 = vunpack.c.l.b16 %v2661
      %v2701 = vunpack.c.l.b16 %v2662
      %v2702 = vpack.c.b16 %v2687, %v2686
      %v2703 = vpack.c.b16 %v2689, %v2688
      %v2704 = vpack.c.b16 %v2691, %v2690
      %v2705 = vpack.c.b16 %v2693, %v2692
      %v2706 = vpack.c.b16 %v2695, %v2694
      %v2707 = vpack.c.b16 %v2697, %v2696
      %v2708 = vpack.c.b16 %v2699, %v2698
      %v2709 = vpack.c.b16 %v2701, %v2700
      %2718 = vmatprep.subr.bf16.mxu0 0
      %2719 = vmatpush1.bf16.msra.mxu0 %v2709
      %2720 = vmatprep.subr.bf16.mxu0 0
      %2721 = vmatpush1.bf16.msra.mxu0 %v2708
      %2722 = vmatprep.subr.bf16.mxu0 0
      %2723 = vmatpush1.bf16.msra.mxu0 %v2707
      %2724 = vmatprep.subr.bf16.mxu0 0
      %2725 = vmatpush1.bf16.msra.mxu0 %v2706
      %2726 = vmatprep.subr.bf16.mxu0 0
      %2727 = vmatpush1.bf16.msra.mxu0 %v2705
      %2728 = vmatprep.subr.bf16.mxu0 0
      %2729 = vmatpush1.bf16.msra.mxu0 %v2704
      %2730 = vmatprep.subr.bf16.mxu0 0
      %2731 = vmatpush1.bf16.msra.mxu0 %v2703
      %2732 = vmatprep.subr.bf16.mxu0 0
      %2733 = vmatpush1.bf16.msra.mxu0 %v2702
      %2734 = vmatprep.subr.bf16.mxu0 0
      %2735 = vmatpush2.bf16.msra.mxu0 0
      %2736 = vmatprep.subr.bf16.mxu0 0
      %2737 = vmatpush2.bf16.msra.mxu0 0
      %2738 = vmatprep.subr.bf16.mxu0 0
      %2739 = vmatpush2.bf16.msra.mxu0 0
      %2740 = vmatprep.subr.bf16.mxu0 0
      %2741 = vmatpush2.bf16.msra.mxu0 0
      %2742 = vmatprep.subr.bf16.mxu0 0
      %2743 = vmatpush2.bf16.msra.mxu0 0
      %2744 = vmatprep.subr.bf16.mxu0 0
      %2745 = vmatpush2.bf16.msra.mxu0 0
      %2746 = vmatprep.subr.bf16.mxu0 0
      %2747 = vmatpush2.bf16.msra.mxu0 0
      %2748 = vmatprep.subr.bf16.mxu0 0
      %2749 = vmatpush2.bf16.msra.mxu0 0
      %2750 = vmatprep.mubr.bf16.mxu0 0
      %2751 = vmatmul.mubr.bf16.gmra.mxu0 %v2646
      %v2752 = vpop.f32.mrf.mxu0
      %v2753 = vadd.f32 %v2668, %v2752
      %v2754 = vpop.f32.mrf.mxu0
      %v2755 = vpop.f32.mrf.mxu0
      %v2756 = vadd.f32 %v2668, %v2755
      %v2757 = vpop.f32.mrf.mxu0
      %2758 = vdwg.mxu0
      %v2759 = vadd.f32 %v2487, %v2753
      %v2760 = vadd.f32 %v2488, %v2756
      %2761 = vst [vmem:[#allocation2] sm:$0xff] %v2759
      %2762 = vst [vmem:[#allocation2 + $0x8] sm:$0xff] %v2760
      %p2763 = scmp.eq.s32.totalorder %s33, 1
      // Predicated region
      $region93: #{gpt_forward.2} parent=87 // pred_check
        %p2764 = pneg %p2763
      $region94: #{gpt_forward.2} parent=87 // pred_check_branch
        %2766 = sbr.rel (%p2764) target = $region96
      $region95: #{gpt_forward.2} parent=87 // pred_region
        %v2767 = vld [vmem:[%s15] sm:$0x1]
        %v2768 = vld [vmem:[%s16] sm:$0x1]
        %2769 = vadd.xlane.f32.xlu0 %v2759
        %v2770 = vpop.xlane.xlu0 %2769
        %2771 = vadd.xlane.f32.xlu0 %v2760
        %v2772 = vpop.xlane.xlu0 %2771
        %v2773 = vmul.f32 %v2770, 0.03125
        %v2774 = vmul.f32 %v2772, 0.03125
        %v2775 = vsub.f32 %v2759, %v2773
        %v2776 = vsub.f32 %v2760, %v2774
        %v2777 = vsel %vm807, %v2775, 0.0
        %v2778 = vsel %vm807, %v2776, 0.0
        %v2779 = vmul.f32 %v2777, %v2777
        %v2780 = vmul.f32 %v2778, %v2778
        %2781 = vadd.xlane.f32.xlu0 %v2779
        %v2782 = vpop.xlane.xlu0 %2781
        %2783 = vadd.xlane.f32.xlu0 %v2780
        %v2784 = vpop.xlane.xlu0 %2783
        %v2785 = vmul.f32 %v2782, 0.03125
        %v2786 = vmul.f32 %v2784, 0.03125
        %v2787 = vadd.f32 %v2785, 1e-05
        %v2788 = vadd.f32 %v2786, 1e-05
        %v2789 = vrsqrt.pop %v2787
        %v2790 = vrsqrt.pop %v2788
        %v2791 = vmul.f32 %v2777, %v2789
        %v2792 = vmul.f32 %v2778, %v2790
        %v2794 = vlaneseq
        %v2795 = vshrl.u32 %v2794, 7
        %v2796 = vsub.s32 0, %v2795
        %v2797 = vrot.slane %v2767, %v2796
        %v2799 = vmul.f32 %v2791, %v2797
        %v2800 = vmul.f32 %v2792, %v2797
        %v2802 = vlaneseq
        %v2803 = vshrl.u32 %v2802, 7
        %v2804 = vsub.s32 0, %v2803
        %v2805 = vrot.slane %v2768, %v2804
        %v2807 = vadd.f32 %v2799, %v2805
        %v2808 = vadd.f32 %v2800, %v2805
        %2809 = vst [vmem:[%s780] sm:$0xff] %v2807
        %2810 = vst [vmem:[%s780 + $0x8] sm:$0xff] %v2808
      $region96: #{gpt_forward.2} parent=87 // pred_fallthru
        _
      %s2811 = smul.u32 2, %s32
      %p2812 = scmp.lt.s32.totalorder %s2811, 3
      %s2813 = scalar_select %p2812, %s2811, 3
      %s2814 = smul.addr %s2813, 8
      %s2815 = scalar_lea.vmem %s17, %s2814
      // Predicated region
      $region97: #{gpt_forward.2} parent=87 // pred_check
        %p2816 = pneg %p485
      $region98: #{gpt_forward.2} parent=87 // pred_check_branch
        %2818 = sbr.rel (%p2816) target = $region100
      $region99: #{gpt_forward.2} parent=87 // pred_region
        %s2819 = smul.u32 2, %s32
      $region100: #{gpt_forward.2} parent=87 // pred_fallthru
        _
    $region88: #{gpt_forward.2} parent=5 // pred_fallthru
      _
    %p2820 = scmp.le.s32.totalorder 2, %s23
    // Predicated region
    $region101: #{gpt_forward.2} parent=5 // pred_check
      %p2821 = pneg %p2820
    $region102: #{gpt_forward.2} parent=5 // pred_check_branch
      %2823 = sbr.rel (%p2821) target = $region104
    $region103: #{gpt_forward.2} parent=5 // pred_region
      %s2824 = ssub.s32 %s23, 2
      // Predicated region
      $region105: #{gpt_forward.2} parent=103 // pred_check
        %p2825 = pneg %p491
      $region106: #{gpt_forward.2} parent=103 // pred_check_branch
        %2827 = sbr.rel (%p2825) target = $region108
      $region107: #{gpt_forward.2} parent=103 // pred_region
        %s2828 = smul.u32 2, %s34
        %p2829 = scmp.lt.s32.totalorder %s2828, 3
        %s2830 = scalar_select %p2829, %s2828, 3
        %s2831 = smul.addr %s2830, 8
        %s2832 = scalar_lea.vmem %s17, %s2831
      $region108: #{gpt_forward.2} parent=103 // pred_fallthru
        _
    $region104: #{gpt_forward.2} parent=5 // pred_fallthru
      _
  $region6: #{gpt_forward.2} parent=0 // loop_footer
    %s27 = sadd.s32 1, %s23
  $region7: #{gpt_forward.2} parent=0 // loop_footer_branch
    %22 = sbr.rel target = $region3
  $region8: #{gpt_forward.2} parent=0 // loop_exit
    _

</llo_original>
